<compile_context>
chip_gen: v6e
topology: v6e:2x2x1
jax: 0.10.0
libtpu: 0.0.40
codegen_flags: <defaults>
</compile_context>

<pallas_src>
import jax
import jax.numpy as jnp
from jax.experimental import pallas as pl
from jax.experimental.pallas import tpu as pltpu

_LANE = 128
_TARGET_MATMUL_ROWS = 512  # target M per MXU matmul inside the kernel


def _round_up(c, m=_LANE):
    return ((c + m - 1) // m) * m


# ----------------------------- fused Pallas kernel ------------------------- #

def make_bottleneck_kernel(*, H1, W1, Ho, Wo, dil, st3, Cin_p, Cb_p, Cout_p,
                           has_downsample, need_xd, rc_in, rc_out):
    """Build the fused per-image kernel. All shape/stride params are static."""
    W1p = W1 + 2 * dil
    H1p = H1 + 2 * dil
    f32, bf16 = jnp.float32, jnp.bfloat16

    def kernel(*refs):
        it = iter(refs)
        x1_ref = next(it)                          # (1, H1, W1, Cin_p) f32  conv1 input
        xd_ref = next(it) if need_xd else x1_ref   # (1, Ho, Wo, Cin_p) f32  identity rows
        w1_ref = next(it)                          # (Cin_p, Cb_p)  bf16 (bn1 folded)
        w2_ref = next(it)                          # (9, Cb_p, Cb_p) bf16 block-diag (bn2 folded)
        w3_ref = next(it)                          # (Cb_p, Cout_p) bf16 (bn3 folded)
        wd_ref = next(it) if has_downsample else None
        b1_ref = next(it)
        b2_ref = next(it)
        b3_ref = next(it)
        bd_ref = next(it) if has_downsample else None
        o_ref = next(it)                           # (1, Ho, Wo, Cout_p) f32
        h1p_ref = next(it)                         # (H1p, W1p, Cb_p) bf16 scratch

        w1 = w1_ref[...]
        b1 = b1_ref[...]

        # ---- conv1 (1x1; stride handled on the host) + bn1 + relu ----------------
        # Row-batched matmuls (M = rc_in * W1) straight into the padded scratch
        # interior.  All slice bounds are Python ints -> static ref indexing.
        for r0 in range(0, H1, rc_in):
            r1 = min(r0 + rc_in, H1)
            rows = r1 - r0
            xin = x1_ref[0, r0:r1, :, :].reshape(rows * W1, Cin_p).astype(bf16)
            h = jnp.dot(xin, w1, preferred_element_type=f32)
            h = jnp.maximum(h + b1, 0.0)
            h1p_ref[dil + r0:dil + r1, dil:dil + W1, :] = (
                h.astype(bf16).reshape(rows, W1, Cb_p))

        # ---- zero only the pad border (interior fully overwritten above) ---------
        if dil > 0:
            zrow = jnp.zeros((dil, W1p, Cb_p), bf16)
            h1p_ref[0:dil, :, :] = zrow
            h1p_ref[H1 + dil:H1p, :, :] = zrow
            zcol = jnp.zeros((H1, dil, Cb_p), bf16)
            h1p_ref[dil:dil + H1, 0:dil, :] = zcol
            h1p_ref[dil:dil + H1, W1 + dil:W1p, :] = zcol

        b2 = b2_ref[...]
        b3 = b3_ref[...]
        w3 = w3_ref[...]
        w2taps = [w2_ref[k] for k in range(9)]     # hoisted, stay VMEM-resident
        if has_downsample:
            wd = wd_ref[...]
            bd = bd_ref[...]

        # ---- conv2 (3x3 grouped = 9 block-diagonal taps) + bn2 + relu, then
        #      conv3 + bn3, identity/downsample, residual add and final relu.
        #      Chunked over output rows so f32 temporaries stay bounded.
        for r0 in range(0, Ho, rc_out):
            r1 = min(r0 + rc_out, Ho)
            rows = r1 - r0
            m = rows * Wo

            acc = jnp.zeros((m, Cb_p), f32)
            for kh in range(3):
                for kw in range(3):
                    hs = r0 * st3 + kh * dil
                    ws = kw * dil
                    if st3 == 1:
                        tap = h1p_ref[hs:hs + rows, ws:ws + Wo, :]
                    else:  # stride_in_1x1=False + stride 2 (not hit by the tests)
                        tap = h1p_ref[pl.ds(hs, rows, st3), pl.ds(ws, Wo, st3), :]
                    acc = acc + jnp.dot(tap.reshape(m, Cb_p), w2taps[kh * 3 + kw],
                                        preferred_element_type=f32)
            h2 = jnp.maximum(acc + b2, 0.0).astype(bf16)

            main = jnp.dot(h2, w3, preferred_element_type=f32) + b3

            if has_downsample:
                xd = xd_ref[0, r0:r1, :, :].reshape(m, Cin_p).astype(bf16)
                ident = jnp.dot(xd, wd, preferred_element_type=f32) + bd
            else:
                # identity residual kept in f32 (x was not downcast)
                ident = xd_ref[0, r0:r1, :, :].reshape(m, Cin_p)

            out = jnp.maximum(main + ident, 0.0)
            o_ref[0, r0:r1, :, :] = out.reshape(rows, Wo, Cout_p).astype(o_ref.dtype)

    return kernel


# ------------------------- parameter preparation ---------------------------- #

def prepare_params(p, num_groups, has_downsample, Cin_p, Cb_p, Cout_p):
    """Fold frozen-BN scales into the conv weights (bf16 MXU operands), zero-pad
    channel dims to lane-dense multiples of 128, and densify the grouped 3x3
    weight into per-tap block-diagonal (Cb_p x Cb_p) matrices."""
    f32, bf16 = jnp.float32, jnp.bfloat16
    Cin, Cb = p["w1"].shape
    Cout = p["w3"].shape[1]
    G = num_groups
    Cg = Cb // G

    def pad2(w, r, c):
        return jnp.pad(w, ((0, r - w.shape[0]), (0, c - w.shape[1])))

    def pad_bias(b, c):
        return jnp.pad(b, (0, c - b.shape[0])).reshape(1, c)

    out = {
        "w1": pad2(p["w1"] * p["s1"][None, :], Cin_p, Cb_p).astype(bf16),
        "b1": pad_bias(p["b1"], Cb_p).astype(f32),
        "b2": pad_bias(p["b2"], Cb_p).astype(f32),
        "w3": pad2(p["w3"] * p["s3"][None, :], Cb_p, Cout_p).astype(bf16),
        "b3": pad_bias(p["b3"], Cout_p).astype(f32),
    }

    # grouped OIHW (Cb, Cg, 3, 3) -> per-tap block-diagonal dense (9, Cb_p, Cb_p)
    w2t = p["w2_oihw"].reshape(G, Cg, Cg, 3, 3).transpose(3, 4, 0, 2, 1)  # kh,kw,g,ci,co
    w2bd = jnp.zeros((3, 3, Cb_p, Cb_p), f32)
    for g in range(G):
        w2bd = w2bd.at[:, :, g * Cg:(g + 1) * Cg, g * Cg:(g + 1) * Cg].set(w2t[:, :, g])
    w2bd = w2bd * jnp.pad(p["s2"], (0, Cb_p - Cb))[None, None, None, :]
    out["w2"] = w2bd.reshape(9, Cb_p, Cb_p).astype(bf16)

    if has_downsample:
        out["wd"] = pad2(p["wd"] * p["sd"][None, :], Cin_p, Cout_p).astype(bf16)
        out["bd"] = pad_bias(p["bd"], Cout_p).astype(f32)
    return out


# ------------------------------ public wrapper ------------------------------ #

def bottleneck_forward(x_nchw, p, cfg):
    """Pallas Bottleneck forward. x_nchw: (N, Cin, H, W) f32 -> NCHW f32."""
    N, Cin, H, W = x_nchw.shape
    Cb, Cout, G = cfg["bottleneck_channels"], cfg["out_channels"], cfg["num_groups"]
    stride, dil = cfg["stride"], cfg["dilation"]
    has_downsample = Cin != Cout

    down_stride = stride if dil == 1 else 1
    if dil > 1:
        stride = 1
    st1, st3 = (stride, 1) if cfg["stride_in_1x1"] else (1, stride)

    H1, W1 = (H - 1) // st1 + 1, (W - 1) // st1 + 1      # conv1 output spatial
    Ho, Wo = (H1 - 1) // st3 + 1, (W1 - 1) // st3 + 1    # block output spatial
    assert (H - 1) // down_stride + 1 == Ho and (W - 1) // down_stride + 1 == Wo
    if not has_downsample:
        assert Ho == H and Wo == W, "identity residual requires stride == 1"

    Cin_p, Cb_p, Cout_p = _round_up(Cin), _round_up(Cb), _round_up(Cout)
    if not has_downsample:
        assert Cin_p == Cout_p  # identity add uses the (padded) x directly

    kp = prepare_params(p, G, has_downsample, Cin_p, Cb_p, Cout_p)

    # Channels-last + zero-pad channels to 128-multiples (lane-dense MXU/VPU ops
    # and unmasked stores).  x stays f32 so the residual add is done in f32.
    x_nhwc = jnp.transpose(x_nchw, (0, 2, 3, 1))
    if Cin_p != Cin:
        x_nhwc = jnp.pad(x_nhwc, ((0, 0), (0, 0), (0, 0), (0, Cin_p - Cin)))

    # Strided subsampling done host-side: only the rows/cols the kernel reads are
    # DMA'd into VMEM (stride-2 blocks pull ~4x less x traffic).
    x1_in = x_nhwc[:, ::st1, ::st1, :] if st1 > 1 else x_nhwc
    need_xd = st3 > 1  # conv1 input rows differ from identity/downsample rows
    xd_in = x_nhwc[:, ::down_stride, ::down_stride, :] if need_xd else None

    rc_in = max(1, min(H1, -(-_TARGET_MATMUL_ROWS // W1)))
    rc_out = max(1, min(Ho, -(-_TARGET_MATMUL_ROWS // Wo)))

    kernel = make_bottleneck_kernel(
        H1=H1, W1=W1, Ho=Ho, Wo=Wo, dil=dil, st3=st3,
        Cin_p=Cin_p, Cb_p=Cb_p, Cout_p=Cout_p,
        has_downsample=has_downsample, need_xd=need_xd,
        rc_in=rc_in, rc_out=rc_out)

    inputs = [x1_in]
    in_specs = [pl.BlockSpec((1, H1, W1, Cin_p), lambda n: (n, 0, 0, 0))]
    if need_xd:
        inputs.append(xd_in)
        in_specs.append(pl.BlockSpec((1, Ho, Wo, Cin_p), lambda n: (n, 0, 0, 0)))
    inputs += [kp["w1"], kp["w2"], kp["w3"]]
    in_specs += [pl.BlockSpec((Cin_p, Cb_p), lambda n: (0, 0)),
                 pl.BlockSpec((9, Cb_p, Cb_p), lambda n: (0, 0, 0)),
                 pl.BlockSpec((Cb_p, Cout_p), lambda n: (0, 0))]
    if has_downsample:
        inputs.append(kp["wd"])
        in_specs.append(pl.BlockSpec((Cin_p, Cout_p), lambda n: (0, 0)))
    inputs += [kp["b1"], kp["b2"], kp["b3"]]
    in_specs += [pl.BlockSpec((1, Cb_p), lambda n: (0, 0)),
                 pl.BlockSpec((1, Cb_p), lambda n: (0, 0)),
                 pl.BlockSpec((1, Cout_p), lambda n: (0, 0))]
    if has_downsample:
        inputs.append(kp["bd"])
        in_specs.append(pl.BlockSpec((1, Cout_p), lambda n: (0, 0)))

    # Generation-aware VMEM budget (v7x: 64 MiB physical; v5e/v6e: 128 MiB).
    try:
        cap = pltpu.get_tpu_info().vmem_capacity_bytes
        vmem_limit = min(int(cap) * 3 // 4, 100 * 1024 * 1024)
    except Exception:
        vmem_limit = 64 * 1024 * 1024

    out = pl.pallas_call(
        kernel,
        out_shape=jax.ShapeDtypeStruct((N, Ho, Wo, Cout_p), jnp.float32),
        grid=(N,),  # one image per grid step; weights map to block 0 (VMEM-resident)
        in_specs=in_specs,
        out_specs=pl.BlockSpec((1, Ho, Wo, Cout_p), lambda n: (n, 0, 0, 0)),
        scratch_shapes=[pltpu.VMEM((H1 + 2 * dil, W1 + 2 * dil, Cb_p), jnp.bfloat16)],
        compiler_params=pltpu.CompilerParams(
            dimension_semantics=("parallel",),     # shard the batch across TCs
            vmem_limit_bytes=vmem_limit),
    )(*inputs)

    out = out[..., :Cout]                        # drop the lane padding
    return jnp.transpose(out, (0, 3, 1, 2))      # back to NCHW, f32


# --------------------------- parameters (synthetic) ------------------------- #

def init_params(key, Cin, Cb, Cout, G):
    ks = jax.random.split(key, 12)

    def u(k, shape, scale=0.2):
        return jax.random.uniform(k, shape, jnp.float32, -1.0, 1.0) * scale

    w1 = u(ks[0], (Cin, Cb))                     # conv1 1x1 as (K, N) matmul weight
    w2_oihw = u(ks[1], (Cb, Cb // G, 3, 3))      # conv2 3x3 grouped, PyTorch OIHW
    w3 = u(ks[2], (Cb, Cout))                    # conv3 1x1
    wd = u(ks[3], (Cin, Cout))                   # downsample 1x1 (unused if Cin==Cout)
    s1, b1 = 1.0 + u(ks[4], (Cb,)), u(ks[5], (Cb,))
    s2, b2 = 1.0 + u(ks[6], (Cb,)), u(ks[7], (Cb,))
    s3, b3 = 1.0 + u(ks[8], (Cout,)), u(ks[9], (Cout,))
    sd, bd = 1.0 + u(ks[10], (Cout,)), u(ks[11], (Cout,))
    return dict(w1=w1, w2_oihw=w2_oihw, w3=w3, wd=wd,
                s1=s1, b1=b1, s2=s2, b2=b2, s3=s3, b3=b3, sd=sd, bd=bd)


# ------------------------------ reference ----------------------------------- #

def reference_forward(x_nchw, p, cfg):
    stride, dilation, G = cfg["stride"], cfg["dilation"], cfg["num_groups"]
    has_downsample = cfg["in_channels"] != cfg["out_channels"]
    down_stride = stride if dilation == 1 else 1
    if dilation > 1:
        stride = 1
    st1, st3 = (stride, 1) if cfg["stride_in_1x1"] else (1, stride)

    def conv(x, w_oihw, st, dil=1, grp=1, pad=0):
        return jax.lax.conv_general_dilated(
            x, w_oihw, (st, st), [(pad, pad), (pad, pad)],
            rhs_dilation=(dil, dil), feature_group_count=grp,
            dimension_numbers=("NCHW", "OIHW", "NCHW"))

    def affine(x, s, b):
        return x * s[None, :, None, None] + b[None, :, None, None]

    w1 = p["w1"].T[:, :, None, None]
    w3 = p["w3"].T[:, :, None, None]
    out = jax.nn.relu(affine(conv(x_nchw, w1, st1), p["s1"], p["b1"]))
    out = jax.nn.relu(affine(conv(out, p["w2_oihw"], st3, dilation, G, dilation),
                             p["s2"], p["b2"]))
    out = affine(conv(out, w3, 1), p["s3"], p["b3"])
    if has_downsample:
        wd = p["wd"].T[:, :, None, None]
        ident = affine(conv(x_nchw, wd, down_stride), p["sd"], p["bd"])
    else:
        ident = x_nchw
    return jax.nn.relu(out + ident)


# --------------------------------- main -------------------------------------- #

if __name__ == "__main__":
    key = jax.random.PRNGKey(0)
    configs = [
        # first block of a stage: downsample branch + stride 2 (in the 1x1), groups=2
        dict(in_channels=16, bottleneck_channels=8, out_channels=32,
             num_groups=2, stride_in_1x1=True, stride=2, dilation=1),
        # later block of a stage: identity residual (no downsample), stride 1
        dict(in_channels=32, bottleneck_channels=16, out_channels=32,
             num_groups=4, stride_in_1x1=True, stride=1, dilation=1),
        # dilated block (dilation=2 => stride forced to 1), identity residual
        dict(in_channels=32, bottleneck_channels=16, out_channels=32,
             num_groups=4, stride_in_1x1=True, stride=1, dilation=2),
    ]
    for cfg in configs:
        key, kx, kparam = jax.random.split(key, 3)
        x = jax.random.normal(kx, (2, cfg["in_channels"], 16, 16), jnp.float32)
        params = init_params(kparam, cfg["in_channels"], cfg["bottleneck_channels"],
                             cfg["out_channels"], cfg["num_groups"])

        out = jax.block_until_ready(bottleneck_forward(x, params, cfg))
        ref = jax.block_until_ready(reference_forward(x, params, cfg))

        assert out.shape == ref.shape, (out.shape, ref.shape)
        max_err = float(jnp.max(jnp.abs(out - ref)))
        # bf16 matmul operands (f32 accumulation, f32 residual) vs f32 reference
        assert jnp.allclose(out, ref, rtol=3e-2, atol=3e-2), max_err

    print("KERNEL_OK")
</pallas_src>

<mosaic_0001>
module attributes {stable_mosaic.version = 11 : i64} {
  func.func @kernel(%arg0: i32, %arg1: memref<1x8x8x128xf32, #tpu.memory_space<vmem>>, %arg2: memref<128x128xbf16, #tpu.memory_space<vmem>>, %arg3: memref<9x128x128xbf16, #tpu.memory_space<vmem>>, %arg4: memref<128x128xbf16, #tpu.memory_space<vmem>>, %arg5: memref<128x128xbf16, #tpu.memory_space<vmem>>, %arg6: memref<1x128xf32, #tpu.memory_space<vmem>>, %arg7: memref<1x128xf32, #tpu.memory_space<vmem>>, %arg8: memref<1x128xf32, #tpu.memory_space<vmem>>, %arg9: memref<1x128xf32, #tpu.memory_space<vmem>>, %arg10: memref<1x8x8x128xf32, #tpu.memory_space<vmem>>, %arg11: memref<10x10x128xbf16, #tpu.memory_space<vmem>>) attributes {dimension_semantics = [#tpu.dimension_semantics<parallel>], iteration_bounds = array<i64: 2>, scalar_prefetch = 0 : i64, scratch_operands = 1 : i64, tpu.core_type = #tpu.core_type<tc>, window_params = [{transform_indices = @transform_0, window_bounds = array<i64: 1, 8, 8, 128>}, {pipeline_mode = #tpu.pipeline_mode<synchronous>, transform_indices = @transform_1, window_bounds = array<i64: 128, 128>}, {pipeline_mode = #tpu.pipeline_mode<synchronous>, transform_indices = @transform_2, window_bounds = array<i64: 9, 128, 128>}, {pipeline_mode = #tpu.pipeline_mode<synchronous>, transform_indices = @transform_3, window_bounds = array<i64: 128, 128>}, {pipeline_mode = #tpu.pipeline_mode<synchronous>, transform_indices = @transform_4, window_bounds = array<i64: 128, 128>}, {pipeline_mode = #tpu.pipeline_mode<synchronous>, transform_indices = @transform_5, window_bounds = array<i64: 1, 128>}, {pipeline_mode = #tpu.pipeline_mode<synchronous>, transform_indices = @transform_6, window_bounds = array<i64: 1, 128>}, {pipeline_mode = #tpu.pipeline_mode<synchronous>, transform_indices = @transform_7, window_bounds = array<i64: 1, 128>}, {pipeline_mode = #tpu.pipeline_mode<synchronous>, transform_indices = @transform_8, window_bounds = array<i64: 1, 128>}, {transform_indices = @transform_9, window_bounds = array<i64: 1, 8, 8, 128>}]} {
    %c0 = arith.constant 0 : index
    %c0_0 = arith.constant 0 : index
    %0 = vector.load %arg2[%c0, %c0_0] : memref<128x128xbf16, #tpu.memory_space<vmem>>, vector<128x128xbf16>
    %c0_1 = arith.constant 0 : index
    %c0_2 = arith.constant 0 : index
    %1 = vector.load %arg6[%c0_1, %c0_2] : memref<1x128xf32, #tpu.memory_space<vmem>>, vector<1x128xf32>
    %c0_3 = arith.constant 0 : index
    %c0_4 = arith.constant 0 : index
    %c0_5 = arith.constant 0 : index
    %c0_6 = arith.constant 0 : index
    %2 = vector.load %arg1[%c0_3, %c0_4, %c0_5, %c0_6] : memref<1x8x8x128xf32, #tpu.memory_space<vmem>>, vector<1x8x8x128xf32>
    %3 = vector.shape_cast %2 : vector<1x8x8x128xf32> to vector<8x8x128xf32>
    %4 = vector.shape_cast %3 : vector<8x8x128xf32> to vector<64x128xf32>
    %5 = arith.truncf %4 : vector<64x128xf32> to vector<64x128xbf16>
    %cst = arith.constant dense<0.000000e+00> : vector<64x128xf32>
    %6 = tpu.matmul %5, %0, %cst {dimension_numbers = #tpu.dot_dimension_numbers<[1], [0], [0], [1], [0, 0, 1, 1], [], []>} : vector<64x128xbf16>, vector<128x128xbf16>, vector<64x128xf32> -> vector<64x128xf32>
    %7 = vector.broadcast %1 : vector<1x128xf32> to vector<64x128xf32>
    %8 = arith.addf %6, %7 : vector<64x128xf32>
    %cst_7 = arith.constant 0.000000e+00 : f32
    %9 = vector.broadcast %cst_7 : f32 to vector<64x128xf32>
    %10 = arith.maximumf %8, %9 : vector<64x128xf32>
    %11 = arith.truncf %10 : vector<64x128xf32> to vector<64x128xbf16>
    %12 = vector.shape_cast %11 : vector<64x128xbf16> to vector<8x8x128xbf16>
    %c1 = arith.constant 1 : index
    %c1_8 = arith.constant 1 : index
    %c0_9 = arith.constant 0 : index
    %13 = vector.load %arg11[%c1, %c1_8, %c0_9] : memref<10x10x128xbf16, #tpu.memory_space<vmem>>, vector<8x8x128xbf16>
    tpu.vector_store %arg11[%c1, %c1_8, %c0_9], %12 {strides = array<i32>} : memref<10x10x128xbf16, #tpu.memory_space<vmem>>, vector<8x8x128xbf16>,
    %cst_10 = arith.constant 0.000000e+00 : bf16
    %14 = vector.broadcast %cst_10 : bf16 to vector<1x10x128xbf16>
    %c0_11 = arith.constant 0 : index
    %c0_12 = arith.constant 0 : index
    %c0_13 = arith.constant 0 : index
    %15 = vector.load %arg11[%c0_11, %c0_12, %c0_13] : memref<10x10x128xbf16, #tpu.memory_space<vmem>>, vector<1x10x128xbf16>
    tpu.vector_store %arg11[%c0_11, %c0_12, %c0_13], %14 {strides = array<i32>} : memref<10x10x128xbf16, #tpu.memory_space<vmem>>, vector<1x10x128xbf16>,
    %c9 = arith.constant 9 : index
    %c0_14 = arith.constant 0 : index
    %c0_15 = arith.constant 0 : index
    %16 = vector.load %arg11[%c9, %c0_14, %c0_15] : memref<10x10x128xbf16, #tpu.memory_space<vmem>>, vector<1x10x128xbf16>
    tpu.vector_store %arg11[%c9, %c0_14, %c0_15], %14 {strides = array<i32>} : memref<10x10x128xbf16, #tpu.memory_space<vmem>>, vector<1x10x128xbf16>,
    %cst_16 = arith.constant 0.000000e+00 : bf16
    %17 = vector.broadcast %cst_16 : bf16 to vector<8x1x128xbf16>
    %c1_17 = arith.constant 1 : index
    %c0_18 = arith.constant 0 : index
    %c0_19 = arith.constant 0 : index
    %18 = vector.load %arg11[%c1_17, %c0_18, %c0_19] : memref<10x10x128xbf16, #tpu.memory_space<vmem>>, vector<8x1x128xbf16>
    tpu.vector_store %arg11[%c1_17, %c0_18, %c0_19], %17 {strides = array<i32>} : memref<10x10x128xbf16, #tpu.memory_space<vmem>>, vector<8x1x128xbf16>,
    %c1_20 = arith.constant 1 : index
    %c9_21 = arith.constant 9 : index
    %c0_22 = arith.constant 0 : index
    %19 = vector.load %arg11[%c1_20, %c9_21, %c0_22] : memref<10x10x128xbf16, #tpu.memory_space<vmem>>, vector<8x1x128xbf16>
    tpu.vector_store %arg11[%c1_20, %c9_21, %c0_22], %17 {strides = array<i32>} : memref<10x10x128xbf16, #tpu.memory_space<vmem>>, vector<8x1x128xbf16>,
    %c0_23 = arith.constant 0 : index
    %c0_24 = arith.constant 0 : index
    %20 = vector.load %arg7[%c0_23, %c0_24] : memref<1x128xf32, #tpu.memory_space<vmem>>, vector<1x128xf32>
    %c0_25 = arith.constant 0 : index
    %c0_26 = arith.constant 0 : index
    %21 = vector.load %arg8[%c0_25, %c0_26] : memref<1x128xf32, #tpu.memory_space<vmem>>, vector<1x128xf32>
    %c0_27 = arith.constant 0 : index
    %c0_28 = arith.constant 0 : index
    %22 = vector.load %arg4[%c0_27, %c0_28] : memref<128x128xbf16, #tpu.memory_space<vmem>>, vector<128x128xbf16>
    %c0_29 = arith.constant 0 : index
    %c0_30 = arith.constant 0 : index
    %c0_31 = arith.constant 0 : index
    %23 = vector.load %arg3[%c0_29, %c0_30, %c0_31] : memref<9x128x128xbf16, #tpu.memory_space<vmem>>, vector<1x128x128xbf16>
    %24 = vector.shape_cast %23 : vector<1x128x128xbf16> to vector<128x128xbf16>
    %c1_32 = arith.constant 1 : index
    %c0_33 = arith.constant 0 : index
    %c0_34 = arith.constant 0 : index
    %25 = vector.load %arg3[%c1_32, %c0_33, %c0_34] : memref<9x128x128xbf16, #tpu.memory_space<vmem>>, vector<1x128x128xbf16>
    %26 = vector.shape_cast %25 : vector<1x128x128xbf16> to vector<128x128xbf16>
    %c2 = arith.constant 2 : index
    %c0_35 = arith.constant 0 : index
    %c0_36 = arith.constant 0 : index
    %27 = vector.load %arg3[%c2, %c0_35, %c0_36] : memref<9x128x128xbf16, #tpu.memory_space<vmem>>, vector<1x128x128xbf16>
    %28 = vector.shape_cast %27 : vector<1x128x128xbf16> to vector<128x128xbf16>
    %c3 = arith.constant 3 : index
    %c0_37 = arith.constant 0 : index
    %c0_38 = arith.constant 0 : index
    %29 = vector.load %arg3[%c3, %c0_37, %c0_38] : memref<9x128x128xbf16, #tpu.memory_space<vmem>>, vector<1x128x128xbf16>
    %30 = vector.shape_cast %29 : vector<1x128x128xbf16> to vector<128x128xbf16>
    %c4 = arith.constant 4 : index
    %c0_39 = arith.constant 0 : index
    %c0_40 = arith.constant 0 : index
    %31 = vector.load %arg3[%c4, %c0_39, %c0_40] : memref<9x128x128xbf16, #tpu.memory_space<vmem>>, vector<1x128x128xbf16>
    %32 = vector.shape_cast %31 : vector<1x128x128xbf16> to vector<128x128xbf16>
    %c5 = arith.constant 5 : index
    %c0_41 = arith.constant 0 : index
    %c0_42 = arith.constant 0 : index
    %33 = vector.load %arg3[%c5, %c0_41, %c0_42] : memref<9x128x128xbf16, #tpu.memory_space<vmem>>, vector<1x128x128xbf16>
    %34 = vector.shape_cast %33 : vector<1x128x128xbf16> to vector<128x128xbf16>
    %c6 = arith.constant 6 : index
    %c0_43 = arith.constant 0 : index
    %c0_44 = arith.constant 0 : index
    %35 = vector.load %arg3[%c6, %c0_43, %c0_44] : memref<9x128x128xbf16, #tpu.memory_space<vmem>>, vector<1x128x128xbf16>
    %36 = vector.shape_cast %35 : vector<1x128x128xbf16> to vector<128x128xbf16>
    %c7 = arith.constant 7 : index
    %c0_45 = arith.constant 0 : index
    %c0_46 = arith.constant 0 : index
    %37 = vector.load %arg3[%c7, %c0_45, %c0_46] : memref<9x128x128xbf16, #tpu.memory_space<vmem>>, vector<1x128x128xbf16>
    %38 = vector.shape_cast %37 : vector<1x128x128xbf16> to vector<128x128xbf16>
    %c8 = arith.constant 8 : index
    %c0_47 = arith.constant 0 : index
    %c0_48 = arith.constant 0 : index
    %39 = vector.load %arg3[%c8, %c0_47, %c0_48] : memref<9x128x128xbf16, #tpu.memory_space<vmem>>, vector<1x128x128xbf16>
    %40 = vector.shape_cast %39 : vector<1x128x128xbf16> to vector<128x128xbf16>
    %c0_49 = arith.constant 0 : index
    %c0_50 = arith.constant 0 : index
    %41 = vector.load %arg5[%c0_49, %c0_50] : memref<128x128xbf16, #tpu.memory_space<vmem>>, vector<128x128xbf16>
    %c0_51 = arith.constant 0 : index
    %c0_52 = arith.constant 0 : index
    %42 = vector.load %arg9[%c0_51, %c0_52] : memref<1x128xf32, #tpu.memory_space<vmem>>, vector<1x128xf32>
    %cst_53 = arith.constant 0.000000e+00 : f32
    %43 = vector.broadcast %cst_53 : f32 to vector<64x128xf32>
    %c0_54 = arith.constant 0 : index
    %c0_55 = arith.constant 0 : index
    %c0_56 = arith.constant 0 : index
    %44 = vector.load %arg11[%c0_54, %c0_55, %c0_56] : memref<10x10x128xbf16, #tpu.memory_space<vmem>>, vector<8x8x128xbf16>
    %45 = vector.shape_cast %44 : vector<8x8x128xbf16> to vector<64x128xbf16>
    %cst_57 = arith.constant dense<0.000000e+00> : vector<64x128xf32>
    %46 = tpu.matmul %45, %24, %cst_57 {dimension_numbers = #tpu.dot_dimension_numbers<[1], [0], [0], [1], [0, 0, 1, 1], [], []>} : vector<64x128xbf16>, vector<128x128xbf16>, vector<64x128xf32> -> vector<64x128xf32>
    %47 = arith.addf %43, %46 : vector<64x128xf32>
    %c0_58 = arith.constant 0 : index
    %c1_59 = arith.constant 1 : index
    %c0_60 = arith.constant 0 : index
    %48 = vector.load %arg11[%c0_58, %c1_59, %c0_60] : memref<10x10x128xbf16, #tpu.memory_space<vmem>>, vector<8x8x128xbf16>
    %49 = vector.shape_cast %48 : vector<8x8x128xbf16> to vector<64x128xbf16>
    %cst_61 = arith.constant dense<0.000000e+00> : vector<64x128xf32>
    %50 = tpu.matmul %49, %26, %cst_61 {dimension_numbers = #tpu.dot_dimension_numbers<[1], [0], [0], [1], [0, 0, 1, 1], [], []>} : vector<64x128xbf16>, vector<128x128xbf16>, vector<64x128xf32> -> vector<64x128xf32>
    %51 = arith.addf %47, %50 : vector<64x128xf32>
    %c0_62 = arith.constant 0 : index
    %c2_63 = arith.constant 2 : index
    %c0_64 = arith.constant 0 : index
    %52 = vector.load %arg11[%c0_62, %c2_63, %c0_64] : memref<10x10x128xbf16, #tpu.memory_space<vmem>>, vector<8x8x128xbf16>
    %53 = vector.shape_cast %52 : vector<8x8x128xbf16> to vector<64x128xbf16>
    %cst_65 = arith.constant dense<0.000000e+00> : vector<64x128xf32>
    %54 = tpu.matmul %53, %28, %cst_65 {dimension_numbers = #tpu.dot_dimension_numbers<[1], [0], [0], [1], [0, 0, 1, 1], [], []>} : vector<64x128xbf16>, vector<128x128xbf16>, vector<64x128xf32> -> vector<64x128xf32>
    %55 = arith.addf %51, %54 : vector<64x128xf32>
    %c1_66 = arith.constant 1 : index
    %c0_67 = arith.constant 0 : index
    %c0_68 = arith.constant 0 : index
    %56 = vector.load %arg11[%c1_66, %c0_67, %c0_68] : memref<10x10x128xbf16, #tpu.memory_space<vmem>>, vector<8x8x128xbf16>
    %57 = vector.shape_cast %56 : vector<8x8x128xbf16> to vector<64x128xbf16>
    %cst_69 = arith.constant dense<0.000000e+00> : vector<64x128xf32>
    %58 = tpu.matmul %57, %30, %cst_69 {dimension_numbers = #tpu.dot_dimension_numbers<[1], [0], [0], [1], [0, 0, 1, 1], [], []>} : vector<64x128xbf16>, vector<128x128xbf16>, vector<64x128xf32> -> vector<64x128xf32>
    %59 = arith.addf %55, %58 : vector<64x128xf32>
    %c1_70 = arith.constant 1 : index
    %c1_71 = arith.constant 1 : index
    %c0_72 = arith.constant 0 : index
    %60 = vector.load %arg11[%c1_70, %c1_71, %c0_72] : memref<10x10x128xbf16, #tpu.memory_space<vmem>>, vector<8x8x128xbf16>
    %61 = vector.shape_cast %60 : vector<8x8x128xbf16> to vector<64x128xbf16>
    %cst_73 = arith.constant dense<0.000000e+00> : vector<64x128xf32>
    %62 = tpu.matmul %61, %32, %cst_73 {dimension_numbers = #tpu.dot_dimension_numbers<[1], [0], [0], [1], [0, 0, 1, 1], [], []>} : vector<64x128xbf16>, vector<128x128xbf16>, vector<64x128xf32> -> vector<64x128xf32>
    %63 = arith.addf %59, %62 : vector<64x128xf32>
    %c1_74 = arith.constant 1 : index
    %c2_75 = arith.constant 2 : index
    %c0_76 = arith.constant 0 : index
    %64 = vector.load %arg11[%c1_74, %c2_75, %c0_76] : memref<10x10x128xbf16, #tpu.memory_space<vmem>>, vector<8x8x128xbf16>
    %65 = vector.shape_cast %64 : vector<8x8x128xbf16> to vector<64x128xbf16>
    %cst_77 = arith.constant dense<0.000000e+00> : vector<64x128xf32>
    %66 = tpu.matmul %65, %34, %cst_77 {dimension_numbers = #tpu.dot_dimension_numbers<[1], [0], [0], [1], [0, 0, 1, 1], [], []>} : vector<64x128xbf16>, vector<128x128xbf16>, vector<64x128xf32> -> vector<64x128xf32>
    %67 = arith.addf %63, %66 : vector<64x128xf32>
    %c2_78 = arith.constant 2 : index
    %c0_79 = arith.constant 0 : index
    %c0_80 = arith.constant 0 : index
    %68 = vector.load %arg11[%c2_78, %c0_79, %c0_80] : memref<10x10x128xbf16, #tpu.memory_space<vmem>>, vector<8x8x128xbf16>
    %69 = vector.shape_cast %68 : vector<8x8x128xbf16> to vector<64x128xbf16>
    %cst_81 = arith.constant dense<0.000000e+00> : vector<64x128xf32>
    %70 = tpu.matmul %69, %36, %cst_81 {dimension_numbers = #tpu.dot_dimension_numbers<[1], [0], [0], [1], [0, 0, 1, 1], [], []>} : vector<64x128xbf16>, vector<128x128xbf16>, vector<64x128xf32> -> vector<64x128xf32>
    %71 = arith.addf %67, %70 : vector<64x128xf32>
    %c2_82 = arith.constant 2 : index
    %c1_83 = arith.constant 1 : index
    %c0_84 = arith.constant 0 : index
    %72 = vector.load %arg11[%c2_82, %c1_83, %c0_84] : memref<10x10x128xbf16, #tpu.memory_space<vmem>>, vector<8x8x128xbf16>
    %73 = vector.shape_cast %72 : vector<8x8x128xbf16> to vector<64x128xbf16>
    %cst_85 = arith.constant dense<0.000000e+00> : vector<64x128xf32>
    %74 = tpu.matmul %73, %38, %cst_85 {dimension_numbers = #tpu.dot_dimension_numbers<[1], [0], [0], [1], [0, 0, 1, 1], [], []>} : vector<64x128xbf16>, vector<128x128xbf16>, vector<64x128xf32> -> vector<64x128xf32>
    %75 = arith.addf %71, %74 : vector<64x128xf32>
    %c2_86 = arith.constant 2 : index
    %c2_87 = arith.constant 2 : index
    %c0_88 = arith.constant 0 : index
    %76 = vector.load %arg11[%c2_86, %c2_87, %c0_88] : memref<10x10x128xbf16, #tpu.memory_space<vmem>>, vector<8x8x128xbf16>
    %77 = vector.shape_cast %76 : vector<8x8x128xbf16> to vector<64x128xbf16>
    %cst_89 = arith.constant dense<0.000000e+00> : vector<64x128xf32>
    %78 = tpu.matmul %77, %40, %cst_89 {dimension_numbers = #tpu.dot_dimension_numbers<[1], [0], [0], [1], [0, 0, 1, 1], [], []>} : vector<64x128xbf16>, vector<128x128xbf16>, vector<64x128xf32> -> vector<64x128xf32>
    %79 = arith.addf %75, %78 : vector<64x128xf32>
    %80 = vector.broadcast %20 : vector<1x128xf32> to vector<64x128xf32>
    %81 = arith.addf %79, %80 : vector<64x128xf32>
    %cst_90 = arith.constant 0.000000e+00 : f32
    %82 = vector.broadcast %cst_90 : f32 to vector<64x128xf32>
    %83 = arith.maximumf %81, %82 : vector<64x128xf32>
    %84 = arith.truncf %83 : vector<64x128xf32> to vector<64x128xbf16>
    %cst_91 = arith.constant dense<0.000000e+00> : vector<64x128xf32>
    %85 = tpu.matmul %84, %22, %cst_91 {dimension_numbers = #tpu.dot_dimension_numbers<[1], [0], [0], [1], [0, 0, 1, 1], [], []>} : vector<64x128xbf16>, vector<128x128xbf16>, vector<64x128xf32> -> vector<64x128xf32>
    %86 = vector.broadcast %21 : vector<1x128xf32> to vector<64x128xf32>
    %87 = arith.addf %85, %86 : vector<64x128xf32>
    %c0_92 = arith.constant 0 : index
    %c0_93 = arith.constant 0 : index
    %c0_94 = arith.constant 0 : index
    %c0_95 = arith.constant 0 : index
    %88 = vector.load %arg1[%c0_92, %c0_93, %c0_94, %c0_95] : memref<1x8x8x128xf32, #tpu.memory_space<vmem>>, vector<1x8x8x128xf32>
    %89 = vector.shape_cast %88 : vector<1x8x8x128xf32> to vector<8x8x128xf32>
    %90 = vector.shape_cast %89 : vector<8x8x128xf32> to vector<64x128xf32>
    %91 = arith.truncf %90 : vector<64x128xf32> to vector<64x128xbf16>
    %cst_96 = arith.constant dense<0.000000e+00> : vector<64x128xf32>
    %92 = tpu.matmul %91, %41, %cst_96 {dimension_numbers = #tpu.dot_dimension_numbers<[1], [0], [0], [1], [0, 0, 1, 1], [], []>} : vector<64x128xbf16>, vector<128x128xbf16>, vector<64x128xf32> -> vector<64x128xf32>
    %93 = vector.broadcast %42 : vector<1x128xf32> to vector<64x128xf32>
    %94 = arith.addf %92, %93 : vector<64x128xf32>
    %95 = arith.addf %87, %94 : vector<64x128xf32>
    %cst_97 = arith.constant 0.000000e+00 : f32
    %96 = vector.broadcast %cst_97 : f32 to vector<64x128xf32>
    %97 = arith.maximumf %95, %96 : vector<64x128xf32>
    %98 = vector.shape_cast %97 : vector<64x128xf32> to vector<8x8x128xf32>
    %c0_98 = arith.constant 0 : index
    %c0_99 = arith.constant 0 : index
    %c0_100 = arith.constant 0 : index
    %c0_101 = arith.constant 0 : index
    %99 = vector.load %arg10[%c0_98, %c0_99, %c0_100, %c0_101] : memref<1x8x8x128xf32, #tpu.memory_space<vmem>>, vector<1x8x8x128xf32>
    %100 = vector.shape_cast %99 : vector<1x8x8x128xf32> to vector<8x8x128xf32>
    %101 = vector.shape_cast %98 : vector<8x8x128xf32> to vector<1x8x8x128xf32>
    tpu.vector_store %arg10[%c0_98, %c0_99, %c0_100, %c0_101], %101 {strides = array<i32>} : memref<1x8x8x128xf32, #tpu.memory_space<vmem>>, vector<1x8x8x128xf32>,
    return
  }
  func.func @transform_0(%arg0: i32) -> (i32, i32, i32, i32) {
    %c0_i32 = arith.constant 0 : i32
    %c0_i32_0 = arith.constant 0 : i32
    %c0_i32_1 = arith.constant 0 : i32
    %c0_i32_2 = arith.constant 0 : i32
    return %arg0, %c0_i32, %c0_i32_0, %c0_i32_1 : i32, i32, i32, i32
  }
  func.func @transform_1(%arg0: i32) -> (i32, i32) {
    %c0_i32 = arith.constant 0 : i32
    %c0_i32_0 = arith.constant 0 : i32
    %c0_i32_1 = arith.constant 0 : i32
    return %c0_i32, %c0_i32_0 : i32, i32
  }
  func.func @transform_2(%arg0: i32) -> (i32, i32, i32) {
    %c0_i32 = arith.constant 0 : i32
    %c0_i32_0 = arith.constant 0 : i32
    %c0_i32_1 = arith.constant 0 : i32
    %c0_i32_2 = arith.constant 0 : i32
    return %c0_i32, %c0_i32_0, %c0_i32_1 : i32, i32, i32
  }
  func.func @transform_3(%arg0: i32) -> (i32, i32) {
    %c0_i32 = arith.constant 0 : i32
    %c0_i32_0 = arith.constant 0 : i32
    %c0_i32_1 = arith.constant 0 : i32
    return %c0_i32, %c0_i32_0 : i32, i32
  }
  func.func @transform_4(%arg0: i32) -> (i32, i32) {
    %c0_i32 = arith.constant 0 : i32
    %c0_i32_0 = arith.constant 0 : i32
    %c0_i32_1 = arith.constant 0 : i32
    return %c0_i32, %c0_i32_0 : i32, i32
  }
  func.func @transform_5(%arg0: i32) -> (i32, i32) {
    %c0_i32 = arith.constant 0 : i32
    %c0_i32_0 = arith.constant 0 : i32
    %c0_i32_1 = arith.constant 0 : i32
    return %c0_i32, %c0_i32_0 : i32, i32
  }
  func.func @transform_6(%arg0: i32) -> (i32, i32) {
    %c0_i32 = arith.constant 0 : i32
    %c0_i32_0 = arith.constant 0 : i32
    %c0_i32_1 = arith.constant 0 : i32
    return %c0_i32, %c0_i32_0 : i32, i32
  }
  func.func @transform_7(%arg0: i32) -> (i32, i32) {
    %c0_i32 = arith.constant 0 : i32
    %c0_i32_0 = arith.constant 0 : i32
    %c0_i32_1 = arith.constant 0 : i32
    return %c0_i32, %c0_i32_0 : i32, i32
  }
  func.func @transform_8(%arg0: i32) -> (i32, i32) {
    %c0_i32 = arith.constant 0 : i32
    %c0_i32_0 = arith.constant 0 : i32
    %c0_i32_1 = arith.constant 0 : i32
    return %c0_i32, %c0_i32_0 : i32, i32
  }
  func.func @transform_9(%arg0: i32) -> (i32, i32, i32, i32) {
    %c0_i32 = arith.constant 0 : i32
    %c0_i32_0 = arith.constant 0 : i32
    %c0_i32_1 = arith.constant 0 : i32
    %c0_i32_2 = arith.constant 0 : i32
    return %arg0, %c0_i32, %c0_i32_0, %c0_i32_1 : i32, i32, i32, i32
  }
}

</mosaic_0001>

<llo_original>
// kernel: tpu_custom_call.1
$region0: #{tpu_custom_call.1}
  #allocation0 [shape = 'u32[]', space=smem, size = 0x4, offset = 0x4, fixed_abs, tag = 'smem constant byte address 0x4 - core index']
  #allocation1 [shape = 'u32[144,128]{1,0:T(1,128)}', space=vmem, size = 0x12000, scoped, tag = 'internal scratch']
  #allocation2 [shape = 'bf16[10,10,128]{2,1,0:T(8,128)(2,1)}', space=vmem, size = 0xa000, scoped, tag = 'scratch operand']
  %s0 = inlined_call_operand.hbm [shape: f32[2,8,8,128], index: 0, kind: input, shape index: {}]
  %s1 = inlined_call_operand.hbm [shape: bf16[128,128], index: 1, kind: input, shape index: {}]
  %s2 = inlined_call_operand.hbm [shape: bf16[9,128,128], index: 2, kind: input, shape index: {}]
  %s3 = inlined_call_operand.hbm [shape: bf16[128,128], index: 3, kind: input, shape index: {}]
  %s4 = inlined_call_operand.hbm [shape: bf16[128,128], index: 4, kind: input, shape index: {}]
  %s5 = inlined_call_operand.vmem [shape: f32[1,128], index: 5, kind: input, shape index: {}]
  %s6 = inlined_call_operand.vmem [shape: f32[1,128], index: 6, kind: input, shape index: {}]
  %s7 = inlined_call_operand.vmem [shape: f32[1,128], index: 7, kind: input, shape index: {}]
  %s8 = inlined_call_operand.vmem [shape: f32[1,128], index: 8, kind: input, shape index: {}]
  %s9 = inlined_call_operand.hbm [shape: f32[2,8,8,128], index: 9, kind: output, shape index: {}]
  %s10 = sld [smem:[#allocation0]]
  $region89: #{tpu_custom_call.1} parent=0
    _
  %s12 = ssub.s32 1, %s10
  %s13 = scalar_select 0, %s12, %s10
  $region1: #{tpu_custom_call.1} parent=0
    #allocation3 [shape = 'u8[65536]{0}', space=vmem, size = 0x10000, scoped, tag = 'input window, operand 0']
    #allocation4 [shape = 's32[2]{0}', space=sflag, size = 0x8, scoped, tag = 'scoped memory for tpu_custom_call.1']
    #allocation5 [shape = 's32[2]{0}', space=sflag, size = 0x8, scoped, tag = 'scoped memory for tpu_custom_call.1']
    #allocation6 [shape = 'u8[32768]{0}', space=vmem, size = 0x8000, scoped, tag = 'input window, operand 1, single buffered']
    #allocation7 [shape = 's32[1]{0}', space=sflag, size = 0x4, scoped, tag = 'scoped memory for tpu_custom_call.1']
    #allocation8 [shape = 'u8[294912]{0}', space=vmem, size = 0x48000, scoped, tag = 'input window, operand 2, single buffered']
    #allocation9 [shape = 'u8[32768]{0}', space=vmem, size = 0x8000, scoped, tag = 'input window, operand 3, single buffered']
    #allocation10 [shape = 's32[1]{0}', space=sflag, size = 0x4, scoped, tag = 'scoped memory for tpu_custom_call.1']
    #allocation11 [shape = 'u8[32768]{0}', space=vmem, size = 0x8000, scoped, tag = 'input window, operand 4, single buffered']
    #allocation12 [shape = 'u8[65536]{0}', space=vmem, size = 0x10000, scoped, tag = 'output window, operand 0']
    %14 = vsyncpa [#allocation4], 0
    %s15 = scalar_lea.sflag [#allocation4], 1
    %16 = vsyncpa %s15, 0
    %17 = vsyncpa [#allocation7], 0
    %18 = vsyncpa [#allocation10], 0
    %19 = vsyncpa [#allocation5], 0
    %s20 = scalar_lea.sflag [#allocation5], 1
    %21 = vsyncpa %s20, 0
    loop: start=0, step=1, limit=4
    $region2: #{tpu_custom_call.1} parent=1 // loop_pre_header
      _
    $region3: #{tpu_custom_call.1} parent=1 // loop_header
      %s23 = sphi 0, %s27
      %p24 = scmp.ge.s32.totalorder %s23, 4
      %s33 = sphi 0, %s35
      %s36 = sphi 0, %s33
      %s37 = sphi 0, %s36
      %s53 = sphi 0, %s37
      %s57 = sphi 0, %s57
      %s59 = sphi 0, %s57
      %s60 = sphi 0, %s59
      %s74 = sphi 0, %s60
      %s78 = sphi 0, %s78
      %s80 = sphi 0, %s78
      %s81 = sphi 0, %s80
      %s95 = sphi 0, %s81
      %s99 = sphi 0, %s99
      %s101 = sphi 0, %s99
      %s102 = sphi 0, %s101
      %s116 = sphi 0, %s102
      %s120 = sphi 0, %s120
      %s122 = sphi 0, %s120
      %s123 = sphi 0, %s122
      %s137 = sphi 0, %s123
      %s141 = sphi 0, %s141
      %s143 = sphi 0, %s141
      %s144 = sphi 0, %s143
      %s158 = sphi 0, %s144
      %s162 = sphi 0, %s162
      %s164 = sphi 0, %s162
      %s165 = sphi 0, %s164
      %s179 = sphi 0, %s165
      %s183 = sphi 0, %s183
      %s185 = sphi 0, %s183
      %s186 = sphi 0, %s185
      %s200 = sphi 0, %s186
      %s204 = sphi 0, %s204
      %s206 = sphi 0, %s204
      %s207 = sphi 0, %s206
      %s221 = sphi 0, %s207
      %s227 = sphi 0, %s229
      %s230 = sphi 0, %s227
      %s231 = sphi 0, %s230
      %s247 = sphi 0, %s231
    $region4: #{tpu_custom_call.1} parent=1 // loop_header_branch
      %26 = sbr.rel (%p24) target = $region8
    $region5: #{tpu_custom_call.1} parent=1 // loop_body
      %s28 = ssub.s32 %s23, 1
      %s29 = ssub.s32 %s23, 2
      %s30 = sadd.s32 %s23, 1
      %s31 = ssub.s32 %s23, %s30
      %p32 = scmp.eq.s32.totalorder %s31, 0
      %s34 = sadd.s32 %s33, 1
      %s35 = scalar_select %p32, %s33, %s34
      %p38 = pneg %p32
      %p39 = scmp.eq.s32.totalorder %s23, 1
      %p40 = por %p38, %p39
      %p41 = scmp.ne.s32.totalorder %s33, %s36
      %p42 = scmp.eq.s32.totalorder %s23, 0
      %p43 = por %p41, %p42
      %p44 = scmp.ne.s32.totalorder %s33, %s36
      %p45 = scmp.eq.s32.totalorder %s28, 1
      %p46 = por %p44, %p45
      %p47 = scmp.ne.s32.totalorder %s36, %s37
      %p48 = scmp.eq.s32.totalorder %s28, 0
      %p49 = por %p47, %p48
      %p50 = scmp.ne.s32.totalorder %s36, %s37
      %p51 = scmp.eq.s32.totalorder %s29, 1
      %p52 = por %p50, %p51
      %p54 = scmp.ne.s32.totalorder %s37, %s53
      %p55 = scmp.eq.s32.totalorder %s29, 0
      %p56 = por %p54, %p55
      %s58 = sadd.s32 %s57, 1
      %p61 = scmp.eq.s32.totalorder %s23, 1
      %p62 = scmp.ne.s32.totalorder %s57, %s59
      %p63 = scmp.eq.s32.totalorder %s23, 0
      %p64 = por %p62, %p63
      %p65 = scmp.ne.s32.totalorder %s57, %s59
      %p66 = scmp.eq.s32.totalorder %s28, 1
      %p67 = por %p65, %p66
      %p68 = scmp.ne.s32.totalorder %s59, %s60
      %p69 = scmp.eq.s32.totalorder %s28, 0
      %p70 = por %p68, %p69
      %p71 = scmp.ne.s32.totalorder %s59, %s60
      %p72 = scmp.eq.s32.totalorder %s29, 1
      %p73 = por %p71, %p72
      %p75 = scmp.ne.s32.totalorder %s60, %s74
      %p76 = scmp.eq.s32.totalorder %s29, 0
      %p77 = por %p75, %p76
      %s79 = sadd.s32 %s78, 1
      %p82 = scmp.eq.s32.totalorder %s23, 1
      %p83 = scmp.ne.s32.totalorder %s78, %s80
      %p84 = scmp.eq.s32.totalorder %s23, 0
      %p85 = por %p83, %p84
      %p86 = scmp.ne.s32.totalorder %s78, %s80
      %p87 = scmp.eq.s32.totalorder %s28, 1
      %p88 = por %p86, %p87
      %p89 = scmp.ne.s32.totalorder %s80, %s81
      %p90 = scmp.eq.s32.totalorder %s28, 0
      %p91 = por %p89, %p90
      %p92 = scmp.ne.s32.totalorder %s80, %s81
      %p93 = scmp.eq.s32.totalorder %s29, 1
      %p94 = por %p92, %p93
      %p96 = scmp.ne.s32.totalorder %s81, %s95
      %p97 = scmp.eq.s32.totalorder %s29, 0
      %p98 = por %p96, %p97
      %s100 = sadd.s32 %s99, 1
      %p103 = scmp.eq.s32.totalorder %s23, 1
      %p104 = scmp.ne.s32.totalorder %s99, %s101
      %p105 = scmp.eq.s32.totalorder %s23, 0
      %p106 = por %p104, %p105
      %p107 = scmp.ne.s32.totalorder %s99, %s101
      %p108 = scmp.eq.s32.totalorder %s28, 1
      %p109 = por %p107, %p108
      %p110 = scmp.ne.s32.totalorder %s101, %s102
      %p111 = scmp.eq.s32.totalorder %s28, 0
      %p112 = por %p110, %p111
      %p113 = scmp.ne.s32.totalorder %s101, %s102
      %p114 = scmp.eq.s32.totalorder %s29, 1
      %p115 = por %p113, %p114
      %p117 = scmp.ne.s32.totalorder %s102, %s116
      %p118 = scmp.eq.s32.totalorder %s29, 0
      %p119 = por %p117, %p118
      %s121 = sadd.s32 %s120, 1
      %p124 = scmp.eq.s32.totalorder %s23, 1
      %p125 = scmp.ne.s32.totalorder %s120, %s122
      %p126 = scmp.eq.s32.totalorder %s23, 0
      %p127 = por %p125, %p126
      %p128 = scmp.ne.s32.totalorder %s120, %s122
      %p129 = scmp.eq.s32.totalorder %s28, 1
      %p130 = por %p128, %p129
      %p131 = scmp.ne.s32.totalorder %s122, %s123
      %p132 = scmp.eq.s32.totalorder %s28, 0
      %p133 = por %p131, %p132
      %p134 = scmp.ne.s32.totalorder %s122, %s123
      %p135 = scmp.eq.s32.totalorder %s29, 1
      %p136 = por %p134, %p135
      %p138 = scmp.ne.s32.totalorder %s123, %s137
      %p139 = scmp.eq.s32.totalorder %s29, 0
      %p140 = por %p138, %p139
      %s142 = sadd.s32 %s141, 1
      %p145 = scmp.eq.s32.totalorder %s23, 1
      %p146 = scmp.ne.s32.totalorder %s141, %s143
      %p147 = scmp.eq.s32.totalorder %s23, 0
      %p148 = por %p146, %p147
      %p149 = scmp.ne.s32.totalorder %s141, %s143
      %p150 = scmp.eq.s32.totalorder %s28, 1
      %p151 = por %p149, %p150
      %p152 = scmp.ne.s32.totalorder %s143, %s144
      %p153 = scmp.eq.s32.totalorder %s28, 0
      %p154 = por %p152, %p153
      %p155 = scmp.ne.s32.totalorder %s143, %s144
      %p156 = scmp.eq.s32.totalorder %s29, 1
      %p157 = por %p155, %p156
      %p159 = scmp.ne.s32.totalorder %s144, %s158
      %p160 = scmp.eq.s32.totalorder %s29, 0
      %p161 = por %p159, %p160
      %s163 = sadd.s32 %s162, 1
      %p166 = scmp.eq.s32.totalorder %s23, 1
      %p167 = scmp.ne.s32.totalorder %s162, %s164
      %p168 = scmp.eq.s32.totalorder %s23, 0
      %p169 = por %p167, %p168
      %p170 = scmp.ne.s32.totalorder %s162, %s164
      %p171 = scmp.eq.s32.totalorder %s28, 1
      %p172 = por %p170, %p171
      %p173 = scmp.ne.s32.totalorder %s164, %s165
      %p174 = scmp.eq.s32.totalorder %s28, 0
      %p175 = por %p173, %p174
      %p176 = scmp.ne.s32.totalorder %s164, %s165
      %p177 = scmp.eq.s32.totalorder %s29, 1
      %p178 = por %p176, %p177
      %p180 = scmp.ne.s32.totalorder %s165, %s179
      %p181 = scmp.eq.s32.totalorder %s29, 0
      %p182 = por %p180, %p181
      %s184 = sadd.s32 %s183, 1
      %p187 = scmp.eq.s32.totalorder %s23, 1
      %p188 = scmp.ne.s32.totalorder %s183, %s185
      %p189 = scmp.eq.s32.totalorder %s23, 0
      %p190 = por %p188, %p189
      %p191 = scmp.ne.s32.totalorder %s183, %s185
      %p192 = scmp.eq.s32.totalorder %s28, 1
      %p193 = por %p191, %p192
      %p194 = scmp.ne.s32.totalorder %s185, %s186
      %p195 = scmp.eq.s32.totalorder %s28, 0
      %p196 = por %p194, %p195
      %p197 = scmp.ne.s32.totalorder %s185, %s186
      %p198 = scmp.eq.s32.totalorder %s29, 1
      %p199 = por %p197, %p198
      %p201 = scmp.ne.s32.totalorder %s186, %s200
      %p202 = scmp.eq.s32.totalorder %s29, 0
      %p203 = por %p201, %p202
      %s205 = sadd.s32 %s204, 1
      %p208 = scmp.eq.s32.totalorder %s23, 1
      %p209 = scmp.ne.s32.totalorder %s204, %s206
      %p210 = scmp.eq.s32.totalorder %s23, 0
      %p211 = por %p209, %p210
      %p212 = scmp.ne.s32.totalorder %s204, %s206
      %p213 = scmp.eq.s32.totalorder %s28, 1
      %p214 = por %p212, %p213
      %p215 = scmp.ne.s32.totalorder %s206, %s207
      %p216 = scmp.eq.s32.totalorder %s28, 0
      %p217 = por %p215, %p216
      %p218 = scmp.ne.s32.totalorder %s206, %s207
      %p219 = scmp.eq.s32.totalorder %s29, 1
      %p220 = por %p218, %p219
      %p222 = scmp.ne.s32.totalorder %s207, %s221
      %p223 = scmp.eq.s32.totalorder %s29, 0
      %p224 = por %p222, %p223
      %s225 = ssub.s32 %s23, %s30
      %p226 = scmp.eq.s32.totalorder %s225, 0
      %s228 = sadd.s32 %s227, 1
      %s229 = scalar_select %p226, %s227, %s228
      %p232 = pneg %p226
      %p233 = scmp.eq.s32.totalorder %s23, 1
      %p234 = por %p232, %p233
      %p235 = scmp.ne.s32.totalorder %s227, %s230
      %p236 = scmp.eq.s32.totalorder %s23, 0
      %p237 = por %p235, %p236
      %p238 = scmp.ne.s32.totalorder %s227, %s230
      %p239 = scmp.eq.s32.totalorder %s28, 1
      %p240 = por %p238, %p239
      %p241 = scmp.ne.s32.totalorder %s230, %s231
      %p242 = scmp.eq.s32.totalorder %s28, 0
      %p243 = por %p241, %p242
      %p244 = scmp.ne.s32.totalorder %s230, %s231
      %p245 = scmp.eq.s32.totalorder %s29, 1
      %p246 = por %p244, %p245
      %p248 = scmp.ne.s32.totalorder %s231, %s247
      %p249 = scmp.eq.s32.totalorder %s29, 0
      %p250 = por %p248, %p249
      %p251 = scmp.le.s32.totalorder 1, %s23
      %p252 = scmp.lt.s32.totalorder %s23, 3
      %p253 = pnand %p251, %p252
      %p254 = pneg %p253
      // Predicated region
      $region9: #{tpu_custom_call.1} parent=5 // pred_check
        _
      $region10: #{tpu_custom_call.1} parent=5 // pred_check_branch
        %256 = sbr.rel (%p253) target = $region12
      $region11: #{tpu_custom_call.1} parent=5 // pred_region
        %s257 = ssub.s32 %s23, 1
        // Predicated region
        $region13: #{tpu_custom_call.1} parent=11 // pred_check
          %p258 = pneg %p70
        $region14: #{tpu_custom_call.1} parent=11 // pred_check_branch
          %260 = sbr.rel (%p258) target = $region16
        $region15: #{tpu_custom_call.1} parent=11 // pred_region
          %s262 = ssub.s32 1024, 1024
          %263 = vsyncadd [#allocation7], %s262
          %s264 = sshll.u32 [#allocation6], 4
          %s265 = int_to_ptr.vmem [resolvable:$true] %s264
          %270 = dma.hbm_to_vmem [thread:$0]  %s1, 1024, %s265, [#allocation7], 64, 64, 4
        $region16: #{tpu_custom_call.1} parent=11 // pred_fallthru
          _
        // Predicated region
        $region17: #{tpu_custom_call.1} parent=11 // pred_check
          %p271 = pneg %p91
        $region18: #{tpu_custom_call.1} parent=11 // pred_check_branch
          %273 = sbr.rel (%p271) target = $region20
        $region19: #{tpu_custom_call.1} parent=11 // pred_region
          %s275 = ssub.s32 9216, 9216
          %276 = vsyncadd [#allocation7], %s275
          %s277 = sshll.u32 [#allocation8], 4
          %s278 = int_to_ptr.vmem [resolvable:$true] %s277
          %283 = dma.hbm_to_vmem [thread:$0]  %s2, 9216, %s278, [#allocation7], 64, 64, 4
        $region20: #{tpu_custom_call.1} parent=11 // pred_fallthru
          _
        // Predicated region
        $region21: #{tpu_custom_call.1} parent=11 // pred_check
          %p284 = pneg %p112
        $region22: #{tpu_custom_call.1} parent=11 // pred_check_branch
          %286 = sbr.rel (%p284) target = $region24
        $region23: #{tpu_custom_call.1} parent=11 // pred_region
          %s288 = ssub.s32 1024, 1024
          %289 = vsyncadd [#allocation10], %s288
          %s290 = sshll.u32 [#allocation9], 4
          %s291 = int_to_ptr.vmem [resolvable:$true] %s290
          %296 = dma.hbm_to_vmem [thread:$0]  %s3, 1024, %s291, [#allocation10], 64, 64, 4
        $region24: #{tpu_custom_call.1} parent=11 // pred_fallthru
          _
        // Predicated region
        $region25: #{tpu_custom_call.1} parent=11 // pred_check
          %p297 = pneg %p133
        $region26: #{tpu_custom_call.1} parent=11 // pred_check_branch
          %299 = sbr.rel (%p297) target = $region28
        $region27: #{tpu_custom_call.1} parent=11 // pred_region
          %s301 = ssub.s32 1024, 1024
          %302 = vsyncadd [#allocation10], %s301
          %s303 = sshll.u32 [#allocation11], 4
          %s304 = int_to_ptr.vmem [resolvable:$true] %s303
          %309 = dma.hbm_to_vmem [thread:$0]  %s4, 1024, %s304, [#allocation10], 64, 64, 4
        $region28: #{tpu_custom_call.1} parent=11 // pred_fallthru
          _
        // Predicated region
        $region29: #{tpu_custom_call.1} parent=11 // pred_check
          %p310 = pneg %p154
        $region30: #{tpu_custom_call.1} parent=11 // pred_check_branch
          %312 = sbr.rel (%p310) target = $region32
        $region31: #{tpu_custom_call.1} parent=11 // pred_region
          _
        $region32: #{tpu_custom_call.1} parent=11 // pred_fallthru
          _
        // Predicated region
        $region33: #{tpu_custom_call.1} parent=11 // pred_check
          %p313 = pneg %p175
        $region34: #{tpu_custom_call.1} parent=11 // pred_check_branch
          %315 = sbr.rel (%p313) target = $region36
        $region35: #{tpu_custom_call.1} parent=11 // pred_region
          _
        $region36: #{tpu_custom_call.1} parent=11 // pred_fallthru
          _
        // Predicated region
        $region37: #{tpu_custom_call.1} parent=11 // pred_check
          %p316 = pneg %p196
        $region38: #{tpu_custom_call.1} parent=11 // pred_check_branch
          %318 = sbr.rel (%p316) target = $region40
        $region39: #{tpu_custom_call.1} parent=11 // pred_region
          _
        $region40: #{tpu_custom_call.1} parent=11 // pred_fallthru
          _
        // Predicated region
        $region41: #{tpu_custom_call.1} parent=11 // pred_check
          %p319 = pneg %p217
        $region42: #{tpu_custom_call.1} parent=11 // pred_check_branch
          %321 = sbr.rel (%p319) target = $region44
        $region43: #{tpu_custom_call.1} parent=11 // pred_region
          _
        $region44: #{tpu_custom_call.1} parent=11 // pred_fallthru
          _
      $region12: #{tpu_custom_call.1} parent=5 // pred_fallthru
        _
      %p322 = scmp.lt.s32.totalorder %s23, 2
      // Predicated region
      $region45: #{tpu_custom_call.1} parent=5 // pred_check
        %p323 = pneg %p322
      $region46: #{tpu_custom_call.1} parent=5 // pred_check_branch
        %325 = sbr.rel (%p323) target = $region48
      $region47: #{tpu_custom_call.1} parent=5 // pred_region
        // Predicated region
        $region49: #{tpu_custom_call.1} parent=47 // pred_check
          %p326 = pneg %p43
        $region50: #{tpu_custom_call.1} parent=47 // pred_check_branch
          %328 = sbr.rel (%p326) target = $region52
        $region51: #{tpu_custom_call.1} parent=47 // pred_region
          %s329 = sand.u32 %s33, 1
          %s330 = scalar_lea.sflag [#allocation4], %s329
          %s331 = sand.u32 %s33, 1
          %s332 = smul.addr %s331, 64
          %s333 = scalar_lea.vmem [#allocation3], %s332
          %s335 = ssub.s32 1024, 1024
          %336 = vsyncadd %s330, %s335
          %s337 = smul.addr %s23, 8
          %s338 = smul.addr %s337, 128
          %s339 = scalar_lea.hbm %s0, %s338
          %s340 = sshll.u32 %s333, 4
          %s341 = int_to_ptr.vmem [resolvable:$true] %s340
          %346 = dma.hbm_to_vmem [thread:$0]  %s339, 1024, %s341, %s330, 128, 128, 8
        $region52: #{tpu_custom_call.1} parent=47 // pred_fallthru
          _
      $region48: #{tpu_custom_call.1} parent=5 // pred_fallthru
        _
      %p347 = scmp.le.s32.totalorder 1, %s23
      %p348 = scmp.lt.s32.totalorder %s23, 3
      %p349 = pnand %p347, %p348
      %p350 = pneg %p349
      // Predicated region
      $region53: #{tpu_custom_call.1} parent=5 // pred_check
        _
      $region54: #{tpu_custom_call.1} parent=5 // pred_check_branch
        %352 = sbr.rel (%p349) target = $region56
      $region55: #{tpu_custom_call.1} parent=5 // pred_region
        %s353 = ssub.s32 %s23, 1
        %s354 = sand.u32 %s36, 1
        %s355 = scalar_lea.sflag [#allocation4], %s354
        %s356 = sand.u32 %s36, 1
        %s357 = smul.addr %s356, 64
        %s358 = scalar_lea.vmem [#allocation3], %s357
        // Predicated region
        $region57: #{tpu_custom_call.1} parent=55 // pred_check
          %p359 = pneg %p49
        $region58: #{tpu_custom_call.1} parent=55 // pred_check_branch
          %361 = sbr.rel (%p359) target = $region60
        $region59: #{tpu_custom_call.1} parent=55 // pred_region
          %362 = dma.done %s355, 1024
        $region60: #{tpu_custom_call.1} parent=55 // pred_fallthru
          _
        // Predicated region
        $region61: #{tpu_custom_call.1} parent=55 // pred_check
          %p363 = pneg %p70
        $region62: #{tpu_custom_call.1} parent=55 // pred_check_branch
          %365 = sbr.rel (%p363) target = $region64
        $region63: #{tpu_custom_call.1} parent=55 // pred_region
          %366 = dma.done [#allocation7], 1024
        $region64: #{tpu_custom_call.1} parent=55 // pred_fallthru
          _
        // Predicated region
        $region65: #{tpu_custom_call.1} parent=55 // pred_check
          %p367 = pneg %p91
        $region66: #{tpu_custom_call.1} parent=55 // pred_check_branch
          %369 = sbr.rel (%p367) target = $region68
        $region67: #{tpu_custom_call.1} parent=55 // pred_region
          %370 = dma.done [#allocation7], 9216
        $region68: #{tpu_custom_call.1} parent=55 // pred_fallthru
          _
        // Predicated region
        $region69: #{tpu_custom_call.1} parent=55 // pred_check
          %p371 = pneg %p112
        $region70: #{tpu_custom_call.1} parent=55 // pred_check_branch
          %373 = sbr.rel (%p371) target = $region72
        $region71: #{tpu_custom_call.1} parent=55 // pred_region
          %374 = dma.done [#allocation10], 1024
        $region72: #{tpu_custom_call.1} parent=55 // pred_fallthru
          _
        // Predicated region
        $region73: #{tpu_custom_call.1} parent=55 // pred_check
          %p375 = pneg %p133
        $region74: #{tpu_custom_call.1} parent=55 // pred_check_branch
          %377 = sbr.rel (%p375) target = $region76
        $region75: #{tpu_custom_call.1} parent=55 // pred_region
          %378 = dma.done [#allocation10], 1024
        $region76: #{tpu_custom_call.1} parent=55 // pred_fallthru
          _
        %s379 = sand.u32 %s36, 1
        %s380 = scalar_lea.sflag [#allocation4], %s379
        %s381 = sand.u32 %s36, 1
        %s382 = smul.addr %s381, 64
        %s383 = scalar_lea.vmem [#allocation3], %s382
        %p384 = pneg %p49
        %p385 = pneg %p46
        %p386 = pneg %p70
        %p387 = pneg %p67
        %p388 = pneg %p91
        %p389 = pneg %p88
        %p390 = pneg %p112
        %p391 = pneg %p109
        %p392 = pneg %p133
        %p393 = pneg %p130
        %p394 = pneg %p154
        %p395 = pneg %p151
        %p396 = pneg %p175
        %p397 = pneg %p172
        %p398 = pneg %p196
        %p399 = pneg %p193
        %p400 = pneg %p217
        %p401 = pneg %p214
        %p402 = pneg %p243
        %p403 = pneg %p240
        %s404 = sand.u32 %s230, 1
        %s405 = scalar_lea.sflag [#allocation5], %s404
        %s406 = sand.u32 %s230, 1
        %s407 = smul.addr %s406, 64
        %s408 = scalar_lea.vmem [#allocation12], %s407
        %v410 = vld [vmem:[#allocation6] sm:$0xf]
        %v411 = vld [vmem:[#allocation6 + $0x4] sm:$0xf]
        %v412 = vld [vmem:[#allocation6 + $0x8] sm:$0xf]
        %v413 = vld [vmem:[#allocation6 + $0xc] sm:$0xf]
        %v414 = vld [vmem:[#allocation6 + $0x10] sm:$0xf]
        %v415 = vld [vmem:[#allocation6 + $0x14] sm:$0xf]
        %v416 = vld [vmem:[#allocation6 + $0x18] sm:$0xf]
        %v417 = vld [vmem:[#allocation6 + $0x1c] sm:$0xf]
        %v418 = vld [vmem:[#allocation6 + $0x20] sm:$0xf]
        %v419 = vld [vmem:[#allocation6 + $0x24] sm:$0xf]
        %v420 = vld [vmem:[#allocation6 + $0x28] sm:$0xf]
        %v421 = vld [vmem:[#allocation6 + $0x2c] sm:$0xf]
        %v422 = vld [vmem:[#allocation6 + $0x30] sm:$0xf]
        %v423 = vld [vmem:[#allocation6 + $0x34] sm:$0xf]
        %v424 = vld [vmem:[#allocation6 + $0x38] sm:$0xf]
        %v425 = vld [vmem:[#allocation6 + $0x3c] sm:$0xf]
        %v426 = vld [vmem:[%s5] sm:$0x1]
        %v427 = vld [vmem:[%s358] sm:$0xff]
        %v428 = vld [vmem:[%s358 + $0x8] sm:$0xff]
        %v429 = vld [vmem:[%s358 + $0x10] sm:$0xff]
        %v430 = vld [vmem:[%s358 + $0x18] sm:$0xff]
        %v431 = vld [vmem:[%s358 + $0x20] sm:$0xff]
        %v432 = vld [vmem:[%s358 + $0x28] sm:$0xff]
        %v433 = vld [vmem:[%s358 + $0x30] sm:$0xff]
        %v434 = vld [vmem:[%s358 + $0x38] sm:$0xff]
        %v435 = vpack.c.bf16 %v428, %v427
        %v436 = vpack.c.bf16 %v430, %v429
        %v437 = vpack.c.bf16 %v432, %v431
        %v438 = vpack.c.bf16 %v434, %v433
        %v440 = vlaneseq
        %v441 = vshrl.u32 %v440, 7
        %v442 = vsub.s32 0, %v441
        %v443 = vrot.slane %v426, %v442
        %v461 = vunpack.c.l.b16 %v410
        %v462 = vunpack.c.l.b16 %v411
        %v463 = vunpack.c.l.b16 %v412
        %v464 = vunpack.c.l.b16 %v413
        %v465 = vunpack.c.l.b16 %v414
        %v466 = vunpack.c.l.b16 %v415
        %v467 = vunpack.c.l.b16 %v416
        %v468 = vunpack.c.l.b16 %v417
        %v469 = vunpack.c.l.b16 %v418
        %v470 = vunpack.c.l.b16 %v419
        %v471 = vunpack.c.l.b16 %v420
        %v472 = vunpack.c.l.b16 %v421
        %v473 = vunpack.c.l.b16 %v422
        %v474 = vunpack.c.l.b16 %v423
        %v475 = vunpack.c.l.b16 %v424
        %v476 = vunpack.c.l.b16 %v425
        %v477 = vpack.c.b16 %v462, %v461
        %v478 = vpack.c.b16 %v464, %v463
        %v479 = vpack.c.b16 %v466, %v465
        %v480 = vpack.c.b16 %v468, %v467
        %v481 = vpack.c.b16 %v470, %v469
        %v482 = vpack.c.b16 %v472, %v471
        %v483 = vpack.c.b16 %v474, %v473
        %v484 = vpack.c.b16 %v476, %v475
        %493 = vmatprep.subr.bf16.mxu0 0
        %494 = vmatpush1.bf16.msra.mxu0 %v484
        %495 = vmatprep.subr.bf16.mxu0 0
        %496 = vmatpush1.bf16.msra.mxu0 %v483
        %497 = vmatprep.subr.bf16.mxu0 0
        %498 = vmatpush1.bf16.msra.mxu0 %v482
        %499 = vmatprep.subr.bf16.mxu0 0
        %500 = vmatpush1.bf16.msra.mxu0 %v481
        %501 = vmatprep.subr.bf16.mxu0 0
        %502 = vmatpush1.bf16.msra.mxu0 %v480
        %503 = vmatprep.subr.bf16.mxu0 0
        %504 = vmatpush1.bf16.msra.mxu0 %v479
        %505 = vmatprep.subr.bf16.mxu0 0
        %506 = vmatpush1.bf16.msra.mxu0 %v478
        %507 = vmatprep.subr.bf16.mxu0 0
        %508 = vmatpush1.bf16.msra.mxu0 %v477
        %509 = vmatprep.subr.bf16.mxu0 0
        %510 = vmatpush2.bf16.msra.mxu0 0
        %511 = vmatprep.subr.bf16.mxu0 0
        %512 = vmatpush2.bf16.msra.mxu0 0
        %513 = vmatprep.subr.bf16.mxu0 0
        %514 = vmatpush2.bf16.msra.mxu0 0
        %515 = vmatprep.subr.bf16.mxu0 0
        %516 = vmatpush2.bf16.msra.mxu0 0
        %517 = vmatprep.subr.bf16.mxu0 0
        %518 = vmatpush2.bf16.msra.mxu0 0
        %519 = vmatprep.subr.bf16.mxu0 0
        %520 = vmatpush2.bf16.msra.mxu0 0
        %521 = vmatprep.subr.bf16.mxu0 0
        %522 = vmatpush2.bf16.msra.mxu0 0
        %523 = vmatprep.subr.bf16.mxu0 0
        %524 = vmatpush2.bf16.msra.mxu0 0
        %525 = vmatprep.mubr.bf16.mxu0 0
        %526 = vmatmul.mubr.bf16.gmra.mxu0 %v435
        %v527 = vpop.f32.mrf.mxu0
        %v528 = vadd.f32 %v443, %v527
        %v529 = vpop.f32.mrf.mxu0
        %v530 = vpop.f32.mrf.mxu0
        %v531 = vadd.f32 %v443, %v530
        %v532 = vpop.f32.mrf.mxu0
        %533 = vmatprep.mubr.bf16.mxu0 0
        %534 = vmatmul.mubr.bf16.gmra.mxu0 %v436
        %v535 = vpop.f32.mrf.mxu0
        %v536 = vadd.f32 %v443, %v535
        %v537 = vpop.f32.mrf.mxu0
        %v538 = vpop.f32.mrf.mxu0
        %v539 = vadd.f32 %v443, %v538
        %v540 = vpop.f32.mrf.mxu0
        %541 = vmatprep.mubr.bf16.mxu0 0
        %542 = vmatmul.mubr.bf16.gmra.mxu0 %v437
        %v543 = vpop.f32.mrf.mxu0
        %v544 = vadd.f32 %v443, %v543
        %v545 = vpop.f32.mrf.mxu0
        %v546 = vpop.f32.mrf.mxu0
        %v547 = vadd.f32 %v443, %v546
        %v548 = vpop.f32.mrf.mxu0
        %549 = vmatprep.mubr.bf16.mxu0 0
        %550 = vmatmul.mubr.bf16.gmra.mxu0 %v438
        %v551 = vpop.f32.mrf.mxu0
        %v552 = vadd.f32 %v443, %v551
        %v553 = vpop.f32.mrf.mxu0
        %v554 = vpop.f32.mrf.mxu0
        %v555 = vadd.f32 %v443, %v554
        %v556 = vpop.f32.mrf.mxu0
        %557 = vdwg.mxu0
        %v558 = vmax.f32 %v528, 0.0
        %v559 = vmax.f32 %v531, 0.0
        %v560 = vmax.f32 %v536, 0.0
        %v561 = vmax.f32 %v539, 0.0
        %v562 = vmax.f32 %v544, 0.0
        %v563 = vmax.f32 %v547, 0.0
        %v564 = vmax.f32 %v552, 0.0
        %v565 = vmax.f32 %v555, 0.0
        %v566 = vpack.c.bf16 %v559, %v558
        %v567 = vpack.c.bf16 %v561, %v560
        %v568 = vpack.c.bf16 %v563, %v562
        %v569 = vpack.c.bf16 %v565, %v564
        %v574 = vunpack.c.l.b16 %v566
        %v575 = vunpack.c.h.b16 %v566
        %v576 = vunpack.c.l.b16 %v567
        %v577 = vunpack.c.h.b16 %v567
        %v578 = vunpack.c.l.b16 %v568
        %v579 = vunpack.c.h.b16 %v568
        %v580 = vunpack.c.l.b16 %v569
        %v581 = vunpack.c.h.b16 %v569
        %v582 = vpack.c.b16 %v574, %v574
        %v583 = vpack.c.b16 %v575, %v575
        %v584 = vpack.c.b16 %v576, %v576
        %v585 = vpack.c.b16 %v577, %v577
        %v586 = vpack.c.b16 %v578, %v578
        %v587 = vpack.c.b16 %v579, %v579
        %v588 = vpack.c.b16 %v580, %v580
        %v589 = vpack.c.b16 %v581, %v581
        %v591 = vshrl.u32 %v582, 16
        %v593 = vrot.slane %v591, 7
        %v594 = vshll.u32 %v582, 16
        %v596 = vor.u32 %v593, %v594
        %v597 = vrot.slane %v593, 4
        %v599 = vshrl.u32 %v583, 16
        %v601 = vrot.slane %v599, 7
        %v602 = vshll.u32 %v583, 16
        %v604 = vor.u32 %v601, %v602
        %v605 = vrot.slane %v601, 4
        %v607 = vshrl.u32 %v584, 16
        %v609 = vrot.slane %v607, 7
        %v610 = vshll.u32 %v584, 16
        %v612 = vor.u32 %v609, %v610
        %v613 = vrot.slane %v609, 4
        %v615 = vshrl.u32 %v585, 16
        %v617 = vrot.slane %v615, 7
        %v618 = vshll.u32 %v585, 16
        %v620 = vor.u32 %v617, %v618
        %v621 = vrot.slane %v617, 4
        %v623 = vshrl.u32 %v586, 16
        %v625 = vrot.slane %v623, 7
        %v626 = vshll.u32 %v586, 16
        %v628 = vor.u32 %v625, %v626
        %v629 = vrot.slane %v625, 4
        %v631 = vshrl.u32 %v587, 16
        %v633 = vrot.slane %v631, 7
        %v634 = vshll.u32 %v587, 16
        %v636 = vor.u32 %v633, %v634
        %v637 = vrot.slane %v633, 4
        %v639 = vshrl.u32 %v588, 16
        %v641 = vrot.slane %v639, 7
        %v642 = vshll.u32 %v588, 16
        %v644 = vor.u32 %v641, %v642
        %v645 = vrot.slane %v641, 4
        %v647 = vshrl.u32 %v589, 16
        %v649 = vrot.slane %v647, 7
        %v650 = vshll.u32 %v589, 16
        %v652 = vor.u32 %v649, %v650
        %v653 = vrot.slane %v649, 4
        %s670 = scalar_lea.vmem [#allocation2], 8
        %vm671 = vcmask 1043456
        %vm672 = vsmask.f32 7938
        %vm673 = vmand %vm671, %vm672
        %v674 = vld [vmem:[%s670] sm:$0xf]
        %v675 = vsel %vm673, %v596, %v674
        %676 = vst [vmem:[%s670] sm:$0xf] %v675
        %vm677 = vcmask 1040384
        %vm678 = vsmask.f32 256
        %vm679 = vmand %vm677, %vm678
        %v680 = vld [vmem:[%s670 + $0x4] sm:$0x1]
        %v681 = vsel %vm679, %v597, %v680
        %682 = vst [vmem:[%s670 + $0x4] sm:$0x1] %v681
        %v683 = vld [vmem:[%s670 + $0x8] sm:$0xf]
        %v684 = vsel %vm673, %v604, %v683
        %685 = vst [vmem:[%s670 + $0x8] sm:$0xf] %v684
        %v686 = vld [vmem:[%s670 + $0xc] sm:$0x1]
        %v687 = vsel %vm679, %v605, %v686
        %688 = vst [vmem:[%s670 + $0xc] sm:$0x1] %v687
        %v689 = vld [vmem:[%s670 + $0x10] sm:$0xf]
        %v690 = vsel %vm673, %v612, %v689
        %691 = vst [vmem:[%s670 + $0x10] sm:$0xf] %v690
        %v692 = vld [vmem:[%s670 + $0x14] sm:$0x1]
        %v693 = vsel %vm679, %v613, %v692
        %694 = vst [vmem:[%s670 + $0x14] sm:$0x1] %v693
        %v695 = vld [vmem:[%s670 + $0x18] sm:$0xf]
        %v696 = vsel %vm673, %v620, %v695
        %697 = vst [vmem:[%s670 + $0x18] sm:$0xf] %v696
        %v698 = vld [vmem:[%s670 + $0x1c] sm:$0x1]
        %v699 = vsel %vm679, %v621, %v698
        %700 = vst [vmem:[%s670 + $0x1c] sm:$0x1] %v699
        %v701 = vld [vmem:[%s670 + $0x20] sm:$0xf]
        %v702 = vsel %vm673, %v628, %v701
        %703 = vst [vmem:[%s670 + $0x20] sm:$0xf] %v702
        %v704 = vld [vmem:[%s670 + $0x24] sm:$0x1]
        %v705 = vsel %vm679, %v629, %v704
        %706 = vst [vmem:[%s670 + $0x24] sm:$0x1] %v705
        %v707 = vld [vmem:[%s670 + $0x28] sm:$0xf]
        %v708 = vsel %vm673, %v636, %v707
        %709 = vst [vmem:[%s670 + $0x28] sm:$0xf] %v708
        %v710 = vld [vmem:[%s670 + $0x2c] sm:$0x1]
        %v711 = vsel %vm679, %v637, %v710
        %712 = vst [vmem:[%s670 + $0x2c] sm:$0x1] %v711
        %v713 = vld [vmem:[%s670 + $0x30] sm:$0xf]
        %v714 = vsel %vm673, %v644, %v713
        %715 = vst [vmem:[%s670 + $0x30] sm:$0xf] %v714
        %v716 = vld [vmem:[%s670 + $0x34] sm:$0x1]
        %v717 = vsel %vm679, %v645, %v716
        %718 = vst [vmem:[%s670 + $0x34] sm:$0x1] %v717
        %v719 = vld [vmem:[%s670 + $0x38] sm:$0xf]
        %v720 = vsel %vm673, %v652, %v719
        %721 = vst [vmem:[%s670 + $0x38] sm:$0xf] %v720
        %v722 = vld [vmem:[%s670 + $0x3c] sm:$0x1]
        %v723 = vsel %vm679, %v653, %v722
        %724 = vst [vmem:[%s670 + $0x3c] sm:$0x1] %v723
        %725 = vst [vmem:[#allocation2] sm:$0xf] 0
        %726 = vst [vmem:[#allocation2 + $0x4] sm:$0x1] 0
        %s727 = scalar_lea.vmem [#allocation2], 72
        %728 = vst [vmem:[%s727] sm:$0xf] 0
        %729 = vst [vmem:[%s727 + $0x4] sm:$0x1] 0
        %v730 = vld [vmem:[%s670] sm:$0x1]
        %v731 = vsel %vm679, 0, %v730
        %732 = vst [vmem:[%s670] sm:$0x1] %v731
        %v733 = vld [vmem:[%s670 + $0x8] sm:$0x1]
        %v734 = vsel %vm679, 0, %v733
        %735 = vst [vmem:[%s670 + $0x8] sm:$0x1] %v734
        %v736 = vld [vmem:[%s670 + $0x10] sm:$0x1]
        %v737 = vsel %vm679, 0, %v736
        %738 = vst [vmem:[%s670 + $0x10] sm:$0x1] %v737
        %v739 = vld [vmem:[%s670 + $0x18] sm:$0x1]
        %v740 = vsel %vm679, 0, %v739
        %741 = vst [vmem:[%s670 + $0x18] sm:$0x1] %v740
        %v742 = vld [vmem:[%s670 + $0x20] sm:$0x1]
        %v743 = vsel %vm679, 0, %v742
        %744 = vst [vmem:[%s670 + $0x20] sm:$0x1] %v743
        %v745 = vld [vmem:[%s670 + $0x28] sm:$0x1]
        %v746 = vsel %vm679, 0, %v745
        %747 = vst [vmem:[%s670 + $0x28] sm:$0x1] %v746
        %v748 = vld [vmem:[%s670 + $0x30] sm:$0x1]
        %v749 = vsel %vm679, 0, %v748
        %750 = vst [vmem:[%s670 + $0x30] sm:$0x1] %v749
        %v751 = vld [vmem:[%s670 + $0x38] sm:$0x1]
        %v752 = vsel %vm679, 0, %v751
        %753 = vst [vmem:[%s670 + $0x38] sm:$0x1] %v752
        %vm754 = vmand %vm677, %vm672
        %v755 = vld [vmem:[%s670 + $0x4] sm:$0x1]
        %v756 = vsel %vm754, 0, %v755
        %757 = vst [vmem:[%s670 + $0x4] sm:$0x1] %v756
        %v758 = vld [vmem:[%s670 + $0xc] sm:$0x1]
        %v759 = vsel %vm754, 0, %v758
        %760 = vst [vmem:[%s670 + $0xc] sm:$0x1] %v759
        %v761 = vld [vmem:[%s670 + $0x14] sm:$0x1]
        %v762 = vsel %vm754, 0, %v761
        %763 = vst [vmem:[%s670 + $0x14] sm:$0x1] %v762
        %v764 = vld [vmem:[%s670 + $0x1c] sm:$0x1]
        %v765 = vsel %vm754, 0, %v764
        %766 = vst [vmem:[%s670 + $0x1c] sm:$0x1] %v765
        %v767 = vld [vmem:[%s670 + $0x24] sm:$0x1]
        %v768 = vsel %vm754, 0, %v767
        %769 = vst [vmem:[%s670 + $0x24] sm:$0x1] %v768
        %v770 = vld [vmem:[%s670 + $0x2c] sm:$0x1]
        %v771 = vsel %vm754, 0, %v770
        %772 = vst [vmem:[%s670 + $0x2c] sm:$0x1] %v771
        %v773 = vld [vmem:[%s670 + $0x34] sm:$0x1]
        %v774 = vsel %vm754, 0, %v773
        %775 = vst [vmem:[%s670 + $0x34] sm:$0x1] %v774
        %v776 = vld [vmem:[%s670 + $0x3c] sm:$0x1]
        %v777 = vsel %vm754, 0, %v776
        %778 = vst [vmem:[%s670 + $0x3c] sm:$0x1] %v777
        %v779 = vld [vmem:[%s6] sm:$0x1]
        %v780 = vld [vmem:[%s7] sm:$0x1]
        %v781 = vld [vmem:[#allocation9] sm:$0xf]
        %v782 = vld [vmem:[#allocation9 + $0x4] sm:$0xf]
        %v783 = vld [vmem:[#allocation9 + $0x8] sm:$0xf]
        %v784 = vld [vmem:[#allocation9 + $0xc] sm:$0xf]
        %v785 = vld [vmem:[#allocation9 + $0x10] sm:$0xf]
        %v786 = vld [vmem:[#allocation9 + $0x14] sm:$0xf]
        %v787 = vld [vmem:[#allocation9 + $0x18] sm:$0xf]
        %v788 = vld [vmem:[#allocation9 + $0x1c] sm:$0xf]
        %v789 = vld [vmem:[#allocation9 + $0x20] sm:$0xf]
        %v790 = vld [vmem:[#allocation9 + $0x24] sm:$0xf]
        %v791 = vld [vmem:[#allocation9 + $0x28] sm:$0xf]
        %v792 = vld [vmem:[#allocation9 + $0x2c] sm:$0xf]
        %v793 = vld [vmem:[#allocation9 + $0x30] sm:$0xf]
        %v794 = vld [vmem:[#allocation9 + $0x34] sm:$0xf]
        %v795 = vld [vmem:[#allocation9 + $0x38] sm:$0xf]
        %v796 = vld [vmem:[#allocation9 + $0x3c] sm:$0xf]
        %v797 = vld [vmem:[#allocation8] sm:$0xf]
        %v798 = vld [vmem:[#allocation8 + $0x4] sm:$0xf]
        %v799 = vld [vmem:[#allocation8 + $0x8] sm:$0xf]
        %v800 = vld [vmem:[#allocation8 + $0xc] sm:$0xf]
        %v801 = vld [vmem:[#allocation8 + $0x10] sm:$0xf]
        %v802 = vld [vmem:[#allocation8 + $0x14] sm:$0xf]
        %v803 = vld [vmem:[#allocation8 + $0x18] sm:$0xf]
        %v804 = vld [vmem:[#allocation8 + $0x1c] sm:$0xf]
        %v805 = vld [vmem:[#allocation8 + $0x20] sm:$0xf]
        %v806 = vld [vmem:[#allocation8 + $0x24] sm:$0xf]
        %v807 = vld [vmem:[#allocation8 + $0x28] sm:$0xf]
        %v808 = vld [vmem:[#allocation8 + $0x2c] sm:$0xf]
        %v809 = vld [vmem:[#allocation8 + $0x30] sm:$0xf]
        %v810 = vld [vmem:[#allocation8 + $0x34] sm:$0xf]
        %v811 = vld [vmem:[#allocation8 + $0x38] sm:$0xf]
        %v812 = vld [vmem:[#allocation8 + $0x3c] sm:$0xf]
        %s813 = scalar_lea.vmem [#allocation8], 64
        %v814 = vld [vmem:[%s813] sm:$0xf]
        %v815 = vld [vmem:[%s813 + $0x4] sm:$0xf]
        %v816 = vld [vmem:[%s813 + $0x8] sm:$0xf]
        %v817 = vld [vmem:[%s813 + $0xc] sm:$0xf]
        %v818 = vld [vmem:[%s813 + $0x10] sm:$0xf]
        %v819 = vld [vmem:[%s813 + $0x14] sm:$0xf]
        %v820 = vld [vmem:[%s813 + $0x18] sm:$0xf]
        %v821 = vld [vmem:[%s813 + $0x1c] sm:$0xf]
        %v822 = vld [vmem:[%s813 + $0x20] sm:$0xf]
        %v823 = vld [vmem:[%s813 + $0x24] sm:$0xf]
        %v824 = vld [vmem:[%s813 + $0x28] sm:$0xf]
        %v825 = vld [vmem:[%s813 + $0x2c] sm:$0xf]
        %v826 = vld [vmem:[%s813 + $0x30] sm:$0xf]
        %v827 = vld [vmem:[%s813 + $0x34] sm:$0xf]
        %v828 = vld [vmem:[%s813 + $0x38] sm:$0xf]
        %v829 = vld [vmem:[%s813 + $0x3c] sm:$0xf]
        %s830 = scalar_lea.vmem [#allocation8], 128
        %v831 = vld [vmem:[%s830] sm:$0xf]
        %v832 = vld [vmem:[%s830 + $0x4] sm:$0xf]
        %v833 = vld [vmem:[%s830 + $0x8] sm:$0xf]
        %v834 = vld [vmem:[%s830 + $0xc] sm:$0xf]
        %v835 = vld [vmem:[%s830 + $0x10] sm:$0xf]
        %v836 = vld [vmem:[%s830 + $0x14] sm:$0xf]
        %v837 = vld [vmem:[%s830 + $0x18] sm:$0xf]
        %v838 = vld [vmem:[%s830 + $0x1c] sm:$0xf]
        %v839 = vld [vmem:[%s830 + $0x20] sm:$0xf]
        %v840 = vld [vmem:[%s830 + $0x24] sm:$0xf]
        %v841 = vld [vmem:[%s830 + $0x28] sm:$0xf]
        %v842 = vld [vmem:[%s830 + $0x2c] sm:$0xf]
        %v843 = vld [vmem:[%s830 + $0x30] sm:$0xf]
        %v844 = vld [vmem:[%s830 + $0x34] sm:$0xf]
        %v845 = vld [vmem:[%s830 + $0x38] sm:$0xf]
        %v846 = vld [vmem:[%s830 + $0x3c] sm:$0xf]
        %s847 = scalar_lea.vmem [#allocation8], 192
        %v848 = vld [vmem:[%s847] sm:$0xf]
        %v849 = vld [vmem:[%s847 + $0x4] sm:$0xf]
        %v850 = vld [vmem:[%s847 + $0x8] sm:$0xf]
        %v851 = vld [vmem:[%s847 + $0xc] sm:$0xf]
        %v852 = vld [vmem:[%s847 + $0x10] sm:$0xf]
        %v853 = vld [vmem:[%s847 + $0x14] sm:$0xf]
        %v854 = vld [vmem:[%s847 + $0x18] sm:$0xf]
        %v855 = vld [vmem:[%s847 + $0x1c] sm:$0xf]
        %v856 = vld [vmem:[%s847 + $0x20] sm:$0xf]
        %v857 = vld [vmem:[%s847 + $0x24] sm:$0xf]
        %v858 = vld [vmem:[%s847 + $0x28] sm:$0xf]
        %v859 = vld [vmem:[%s847 + $0x2c] sm:$0xf]
        %v860 = vld [vmem:[%s847 + $0x30] sm:$0xf]
        %v861 = vld [vmem:[%s847 + $0x34] sm:$0xf]
        %v862 = vld [vmem:[%s847 + $0x38] sm:$0xf]
        %v863 = vld [vmem:[%s847 + $0x3c] sm:$0xf]
        %s864 = scalar_lea.vmem [#allocation8], 256
        %v865 = vld [vmem:[%s864] sm:$0xf]
        %v866 = vld [vmem:[%s864 + $0x4] sm:$0xf]
        %v867 = vld [vmem:[%s864 + $0x8] sm:$0xf]
        %v868 = vld [vmem:[%s864 + $0xc] sm:$0xf]
        %v869 = vld [vmem:[%s864 + $0x10] sm:$0xf]
        %v870 = vld [vmem:[%s864 + $0x14] sm:$0xf]
        %v871 = vld [vmem:[%s864 + $0x18] sm:$0xf]
        %v872 = vld [vmem:[%s864 + $0x1c] sm:$0xf]
        %v873 = vld [vmem:[%s864 + $0x20] sm:$0xf]
        %v874 = vld [vmem:[%s864 + $0x24] sm:$0xf]
        %v875 = vld [vmem:[%s864 + $0x28] sm:$0xf]
        %v876 = vld [vmem:[%s864 + $0x2c] sm:$0xf]
        %v877 = vld [vmem:[%s864 + $0x30] sm:$0xf]
        %v878 = vld [vmem:[%s864 + $0x34] sm:$0xf]
        %v879 = vld [vmem:[%s864 + $0x38] sm:$0xf]
        %v880 = vld [vmem:[%s864 + $0x3c] sm:$0xf]
        %s881 = scalar_lea.vmem [#allocation8], 320
        %v882 = vld [vmem:[%s881] sm:$0xf]
        %v883 = vld [vmem:[%s881 + $0x4] sm:$0xf]
        %v884 = vld [vmem:[%s881 + $0x8] sm:$0xf]
        %v885 = vld [vmem:[%s881 + $0xc] sm:$0xf]
        %v886 = vld [vmem:[%s881 + $0x10] sm:$0xf]
        %v887 = vld [vmem:[%s881 + $0x14] sm:$0xf]
        %v888 = vld [vmem:[%s881 + $0x18] sm:$0xf]
        %v889 = vld [vmem:[%s881 + $0x1c] sm:$0xf]
        %v890 = vld [vmem:[%s881 + $0x20] sm:$0xf]
        %v891 = vld [vmem:[%s881 + $0x24] sm:$0xf]
        %v892 = vld [vmem:[%s881 + $0x28] sm:$0xf]
        %v893 = vld [vmem:[%s881 + $0x2c] sm:$0xf]
        %v894 = vld [vmem:[%s881 + $0x30] sm:$0xf]
        %v895 = vld [vmem:[%s881 + $0x34] sm:$0xf]
        %v896 = vld [vmem:[%s881 + $0x38] sm:$0xf]
        %v897 = vld [vmem:[%s881 + $0x3c] sm:$0xf]
        %s898 = scalar_lea.vmem [#allocation8], 384
        %v899 = vld [vmem:[%s898] sm:$0xf]
        %v900 = vld [vmem:[%s898 + $0x4] sm:$0xf]
        %v901 = vld [vmem:[%s898 + $0x8] sm:$0xf]
        %v902 = vld [vmem:[%s898 + $0xc] sm:$0xf]
        %v903 = vld [vmem:[%s898 + $0x10] sm:$0xf]
        %v904 = vld [vmem:[%s898 + $0x14] sm:$0xf]
        %v905 = vld [vmem:[%s898 + $0x18] sm:$0xf]
        %v906 = vld [vmem:[%s898 + $0x1c] sm:$0xf]
        %v907 = vld [vmem:[%s898 + $0x20] sm:$0xf]
        %v908 = vld [vmem:[%s898 + $0x24] sm:$0xf]
        %v909 = vld [vmem:[%s898 + $0x28] sm:$0xf]
        %v910 = vld [vmem:[%s898 + $0x2c] sm:$0xf]
        %v911 = vld [vmem:[%s898 + $0x30] sm:$0xf]
        %v912 = vld [vmem:[%s898 + $0x34] sm:$0xf]
        %v913 = vld [vmem:[%s898 + $0x38] sm:$0xf]
        %v914 = vld [vmem:[%s898 + $0x3c] sm:$0xf]
        %s915 = scalar_lea.vmem [#allocation8], 448
        %v916 = vld [vmem:[%s915] sm:$0xf]
        %v917 = vld [vmem:[%s915 + $0x4] sm:$0xf]
        %v918 = vld [vmem:[%s915 + $0x8] sm:$0xf]
        %v919 = vld [vmem:[%s915 + $0xc] sm:$0xf]
        %v920 = vld [vmem:[%s915 + $0x10] sm:$0xf]
        %v921 = vld [vmem:[%s915 + $0x14] sm:$0xf]
        %v922 = vld [vmem:[%s915 + $0x18] sm:$0xf]
        %v923 = vld [vmem:[%s915 + $0x1c] sm:$0xf]
        %v924 = vld [vmem:[%s915 + $0x20] sm:$0xf]
        %v925 = vld [vmem:[%s915 + $0x24] sm:$0xf]
        %v926 = vld [vmem:[%s915 + $0x28] sm:$0xf]
        %v927 = vld [vmem:[%s915 + $0x2c] sm:$0xf]
        %v928 = vld [vmem:[%s915 + $0x30] sm:$0xf]
        %v929 = vld [vmem:[%s915 + $0x34] sm:$0xf]
        %v930 = vld [vmem:[%s915 + $0x38] sm:$0xf]
        %v931 = vld [vmem:[%s915 + $0x3c] sm:$0xf]
        %s932 = scalar_lea.vmem [#allocation8], 512
        %v933 = vld [vmem:[%s932] sm:$0xf]
        %v934 = vld [vmem:[%s932 + $0x4] sm:$0xf]
        %v935 = vld [vmem:[%s932 + $0x8] sm:$0xf]
        %v936 = vld [vmem:[%s932 + $0xc] sm:$0xf]
        %v937 = vld [vmem:[%s932 + $0x10] sm:$0xf]
        %v938 = vld [vmem:[%s932 + $0x14] sm:$0xf]
        %v939 = vld [vmem:[%s932 + $0x18] sm:$0xf]
        %v940 = vld [vmem:[%s932 + $0x1c] sm:$0xf]
        %v941 = vld [vmem:[%s932 + $0x20] sm:$0xf]
        %v942 = vld [vmem:[%s932 + $0x24] sm:$0xf]
        %v943 = vld [vmem:[%s932 + $0x28] sm:$0xf]
        %v944 = vld [vmem:[%s932 + $0x2c] sm:$0xf]
        %v945 = vld [vmem:[%s932 + $0x30] sm:$0xf]
        %v946 = vld [vmem:[%s932 + $0x34] sm:$0xf]
        %v947 = vld [vmem:[%s932 + $0x38] sm:$0xf]
        %v948 = vld [vmem:[%s932 + $0x3c] sm:$0xf]
        %v949 = vld [vmem:[#allocation11] sm:$0xf]
        %v950 = vld [vmem:[#allocation11 + $0x4] sm:$0xf]
        %v951 = vld [vmem:[#allocation11 + $0x8] sm:$0xf]
        %v952 = vld [vmem:[#allocation11 + $0xc] sm:$0xf]
        %v953 = vld [vmem:[#allocation11 + $0x10] sm:$0xf]
        %v954 = vld [vmem:[#allocation11 + $0x14] sm:$0xf]
        %v955 = vld [vmem:[#allocation11 + $0x18] sm:$0xf]
        %v956 = vld [vmem:[#allocation11 + $0x1c] sm:$0xf]
        %v957 = vld [vmem:[#allocation11 + $0x20] sm:$0xf]
        %v958 = vld [vmem:[#allocation11 + $0x24] sm:$0xf]
        %v959 = vld [vmem:[#allocation11 + $0x28] sm:$0xf]
        %v960 = vld [vmem:[#allocation11 + $0x2c] sm:$0xf]
        %v961 = vld [vmem:[#allocation11 + $0x30] sm:$0xf]
        %v962 = vld [vmem:[#allocation11 + $0x34] sm:$0xf]
        %v963 = vld [vmem:[#allocation11 + $0x38] sm:$0xf]
        %v964 = vld [vmem:[#allocation11 + $0x3c] sm:$0xf]
        %v965 = vld [vmem:[%s8] sm:$0x1]
        %v966 = vld [vmem:[#allocation2] sm:$0xf]
        %v967 = vld [vmem:[#allocation2 + $0x8] sm:$0xf]
        %v968 = vld [vmem:[#allocation2 + $0x10] sm:$0xf]
        %v969 = vld [vmem:[#allocation2 + $0x18] sm:$0xf]
        %v970 = vld [vmem:[#allocation2 + $0x20] sm:$0xf]
        %v971 = vld [vmem:[#allocation2 + $0x28] sm:$0xf]
        %v972 = vld [vmem:[#allocation2 + $0x30] sm:$0xf]
        %v973 = vld [vmem:[#allocation2 + $0x38] sm:$0xf]
        %v974 = vld [vmem:[#allocation2 + $0x4] sm:$0x1]
        %v975 = vld [vmem:[#allocation2 + $0xc] sm:$0x1]
        %v976 = vld [vmem:[#allocation2 + $0x14] sm:$0x1]
        %v977 = vld [vmem:[#allocation2 + $0x1c] sm:$0x1]
        %v978 = vld [vmem:[#allocation2 + $0x24] sm:$0x1]
        %v979 = vld [vmem:[#allocation2 + $0x2c] sm:$0x1]
        %v980 = vld [vmem:[#allocation2 + $0x34] sm:$0x1]
        %v981 = vld [vmem:[#allocation2 + $0x3c] sm:$0x1]
        %vm982 = vsmask.f32 3328
        %vm983 = vsmask.f32 7440
        %vm984 = vmor %vm982, %vm983
        %v986 = vshrl.u32 %v966, 16
        %v988 = vrot.slane %v986, 4
        %v989 = vshll.u32 %v966, 16
        %v991 = vrot.slane %v989, 5
        %v992 = vor.u32 %v988, %v991
        %v993 = vrot.slane %v992, 4
        %v995 = vshll.u32 %v974, 16
        %v997 = vrot.slane %v995, 5
        %v998 = vsel %vm984, %v993, %v997
        %v1000 = vshrl.u32 %v967, 16
        %v1002 = vrot.slane %v1000, 4
        %v1003 = vshll.u32 %v967, 16
        %v1005 = vrot.slane %v1003, 5
        %v1006 = vor.u32 %v1002, %v1005
        %v1007 = vrot.slane %v1006, 4
        %v1009 = vshll.u32 %v975, 16
        %v1011 = vrot.slane %v1009, 5
        %v1012 = vsel %vm984, %v1007, %v1011
        %v1014 = vshrl.u32 %v968, 16
        %v1016 = vrot.slane %v1014, 4
        %v1017 = vshll.u32 %v968, 16
        %v1019 = vrot.slane %v1017, 5
        %v1020 = vor.u32 %v1016, %v1019
        %v1021 = vrot.slane %v1020, 4
        %v1023 = vshll.u32 %v976, 16
        %v1025 = vrot.slane %v1023, 5
        %v1026 = vsel %vm984, %v1021, %v1025
        %v1028 = vshrl.u32 %v969, 16
        %v1030 = vrot.slane %v1028, 4
        %v1031 = vshll.u32 %v969, 16
        %v1033 = vrot.slane %v1031, 5
        %v1034 = vor.u32 %v1030, %v1033
        %v1035 = vrot.slane %v1034, 4
        %v1037 = vshll.u32 %v977, 16
        %v1039 = vrot.slane %v1037, 5
        %v1040 = vsel %vm984, %v1035, %v1039
        %v1042 = vshrl.u32 %v970, 16
        %v1044 = vrot.slane %v1042, 4
        %v1045 = vshll.u32 %v970, 16
        %v1047 = vrot.slane %v1045, 5
        %v1048 = vor.u32 %v1044, %v1047
        %v1049 = vrot.slane %v1048, 4
        %v1051 = vshll.u32 %v978, 16
        %v1053 = vrot.slane %v1051, 5
        %v1054 = vsel %vm984, %v1049, %v1053
        %v1056 = vshrl.u32 %v971, 16
        %v1058 = vrot.slane %v1056, 4
        %v1059 = vshll.u32 %v971, 16
        %v1061 = vrot.slane %v1059, 5
        %v1062 = vor.u32 %v1058, %v1061
        %v1063 = vrot.slane %v1062, 4
        %v1065 = vshll.u32 %v979, 16
        %v1067 = vrot.slane %v1065, 5
        %v1068 = vsel %vm984, %v1063, %v1067
        %v1070 = vshrl.u32 %v972, 16
        %v1072 = vrot.slane %v1070, 4
        %v1073 = vshll.u32 %v972, 16
        %v1075 = vrot.slane %v1073, 5
        %v1076 = vor.u32 %v1072, %v1075
        %v1077 = vrot.slane %v1076, 4
        %v1079 = vshll.u32 %v980, 16
        %v1081 = vrot.slane %v1079, 5
        %v1082 = vsel %vm984, %v1077, %v1081
        %v1084 = vshrl.u32 %v973, 16
        %v1086 = vrot.slane %v1084, 4
        %v1087 = vshll.u32 %v973, 16
        %v1089 = vrot.slane %v1087, 5
        %v1090 = vor.u32 %v1086, %v1089
        %v1091 = vrot.slane %v1090, 4
        %v1093 = vshll.u32 %v981, 16
        %v1095 = vrot.slane %v1093, 5
        %v1096 = vsel %vm984, %v1091, %v1095
        %v1097 = vunpack.c.l.b16 %v998
        %v1098 = vunpack.c.l.b16 %v1012
        %v1099 = vunpack.c.l.b16 %v1026
        %v1100 = vunpack.c.l.b16 %v1040
        %v1101 = vunpack.c.l.b16 %v1054
        %v1102 = vunpack.c.l.b16 %v1068
        %v1103 = vunpack.c.l.b16 %v1082
        %v1104 = vunpack.c.l.b16 %v1096
        %v1105 = vpack.c.b16 %v1098, %v1097
        %v1106 = vpack.c.b16 %v1100, %v1099
        %v1107 = vpack.c.b16 %v1102, %v1101
        %v1108 = vpack.c.b16 %v1104, %v1103
        %v1129 = vunpack.c.l.b16 %v814
        %v1130 = vunpack.c.l.b16 %v815
        %v1131 = vunpack.c.l.b16 %v816
        %v1132 = vunpack.c.l.b16 %v817
        %v1133 = vunpack.c.l.b16 %v818
        %v1134 = vunpack.c.l.b16 %v819
        %v1135 = vunpack.c.l.b16 %v820
        %v1136 = vunpack.c.l.b16 %v821
        %v1137 = vunpack.c.l.b16 %v822
        %v1138 = vunpack.c.l.b16 %v823
        %v1139 = vunpack.c.l.b16 %v824
        %v1140 = vunpack.c.l.b16 %v825
        %v1141 = vunpack.c.l.b16 %v826
        %v1142 = vunpack.c.l.b16 %v827
        %v1143 = vunpack.c.l.b16 %v828
        %v1144 = vunpack.c.l.b16 %v829
        %v1145 = vpack.c.b16 %v1130, %v1129
        %v1146 = vpack.c.b16 %v1132, %v1131
        %v1147 = vpack.c.b16 %v1134, %v1133
        %v1148 = vpack.c.b16 %v1136, %v1135
        %v1149 = vpack.c.b16 %v1138, %v1137
        %v1150 = vpack.c.b16 %v1140, %v1139
        %v1151 = vpack.c.b16 %v1142, %v1141
        %v1152 = vpack.c.b16 %v1144, %v1143
        %1161 = vmatprep.subr.bf16.mxu0 0
        %1162 = vmatpush1.bf16.msra.mxu0 %v1152
        %1163 = vmatprep.subr.bf16.mxu0 0
        %1164 = vmatpush1.bf16.msra.mxu0 %v1151
        %1165 = vmatprep.subr.bf16.mxu0 0
        %1166 = vmatpush1.bf16.msra.mxu0 %v1150
        %1167 = vmatprep.subr.bf16.mxu0 0
        %1168 = vmatpush1.bf16.msra.mxu0 %v1149
        %1169 = vmatprep.subr.bf16.mxu0 0
        %1170 = vmatpush1.bf16.msra.mxu0 %v1148
        %1171 = vmatprep.subr.bf16.mxu0 0
        %1172 = vmatpush1.bf16.msra.mxu0 %v1147
        %1173 = vmatprep.subr.bf16.mxu0 0
        %1174 = vmatpush1.bf16.msra.mxu0 %v1146
        %1175 = vmatprep.subr.bf16.mxu0 0
        %1176 = vmatpush1.bf16.msra.mxu0 %v1145
        %1177 = vmatprep.subr.bf16.mxu0 0
        %1178 = vmatpush2.bf16.msra.mxu0 0
        %1179 = vmatprep.subr.bf16.mxu0 0
        %1180 = vmatpush2.bf16.msra.mxu0 0
        %1181 = vmatprep.subr.bf16.mxu0 0
        %1182 = vmatpush2.bf16.msra.mxu0 0
        %1183 = vmatprep.subr.bf16.mxu0 0
        %1184 = vmatpush2.bf16.msra.mxu0 0
        %1185 = vmatprep.subr.bf16.mxu0 0
        %1186 = vmatpush2.bf16.msra.mxu0 0
        %1187 = vmatprep.subr.bf16.mxu0 0
        %1188 = vmatpush2.bf16.msra.mxu0 0
        %1189 = vmatprep.subr.bf16.mxu0 0
        %1190 = vmatpush2.bf16.msra.mxu0 0
        %1191 = vmatprep.subr.bf16.mxu0 0
        %1192 = vmatpush2.bf16.msra.mxu0 0
        %1193 = vmatprep.mubr.bf16.mxu0 0
        %1194 = vmatmul.mubr.bf16.gmra.mxu0 %v1105
        %v1195 = vpop.f32.mrf.mxu0
        %v1196 = vadd.f32 0.0, %v1195
        %v1197 = vpop.f32.mrf.mxu0
        %v1198 = vpop.f32.mrf.mxu0
        %v1199 = vadd.f32 0.0, %v1198
        %v1200 = vpop.f32.mrf.mxu0
        %1201 = vmatprep.mubr.bf16.mxu0 0
        %1202 = vmatmul.mubr.bf16.gmra.mxu0 %v1106
        %v1203 = vpop.f32.mrf.mxu0
        %v1204 = vadd.f32 0.0, %v1203
        %v1205 = vpop.f32.mrf.mxu0
        %v1206 = vpop.f32.mrf.mxu0
        %v1207 = vadd.f32 0.0, %v1206
        %v1208 = vpop.f32.mrf.mxu0
        %1209 = vmatprep.mubr.bf16.mxu0 0
        %1210 = vmatmul.mubr.bf16.gmra.mxu0 %v1107
        %v1211 = vpop.f32.mrf.mxu0
        %v1212 = vadd.f32 0.0, %v1211
        %v1213 = vpop.f32.mrf.mxu0
        %v1214 = vpop.f32.mrf.mxu0
        %v1215 = vadd.f32 0.0, %v1214
        %v1216 = vpop.f32.mrf.mxu0
        %1217 = vmatprep.mubr.bf16.mxu0 0
        %1218 = vmatmul.mubr.bf16.gmra.mxu0 %v1108
        %v1219 = vpop.f32.mrf.mxu0
        %v1220 = vadd.f32 0.0, %v1219
        %v1221 = vpop.f32.mrf.mxu0
        %v1222 = vpop.f32.mrf.mxu0
        %v1223 = vadd.f32 0.0, %v1222
        %v1224 = vpop.f32.mrf.mxu0
        %1225 = vdwg.mxu0
        %v1234 = vunpack.c.l.b16 %v966
        %v1235 = vunpack.c.l.b16 %v967
        %v1236 = vunpack.c.l.b16 %v968
        %v1237 = vunpack.c.l.b16 %v969
        %v1238 = vunpack.c.l.b16 %v970
        %v1239 = vunpack.c.l.b16 %v971
        %v1240 = vunpack.c.l.b16 %v972
        %v1241 = vunpack.c.l.b16 %v973
        %v1242 = vpack.c.b16 %v1235, %v1234
        %v1243 = vpack.c.b16 %v1237, %v1236
        %v1244 = vpack.c.b16 %v1239, %v1238
        %v1245 = vpack.c.b16 %v1241, %v1240
        %v1266 = vunpack.c.l.b16 %v797
        %v1267 = vunpack.c.l.b16 %v798
        %v1268 = vunpack.c.l.b16 %v799
        %v1269 = vunpack.c.l.b16 %v800
        %v1270 = vunpack.c.l.b16 %v801
        %v1271 = vunpack.c.l.b16 %v802
        %v1272 = vunpack.c.l.b16 %v803
        %v1273 = vunpack.c.l.b16 %v804
        %v1274 = vunpack.c.l.b16 %v805
        %v1275 = vunpack.c.l.b16 %v806
        %v1276 = vunpack.c.l.b16 %v807
        %v1277 = vunpack.c.l.b16 %v808
        %v1278 = vunpack.c.l.b16 %v809
        %v1279 = vunpack.c.l.b16 %v810
        %v1280 = vunpack.c.l.b16 %v811
        %v1281 = vunpack.c.l.b16 %v812
        %v1282 = vpack.c.b16 %v1267, %v1266
        %v1283 = vpack.c.b16 %v1269, %v1268
        %v1284 = vpack.c.b16 %v1271, %v1270
        %v1285 = vpack.c.b16 %v1273, %v1272
        %v1286 = vpack.c.b16 %v1275, %v1274
        %v1287 = vpack.c.b16 %v1277, %v1276
        %v1288 = vpack.c.b16 %v1279, %v1278
        %v1289 = vpack.c.b16 %v1281, %v1280
        %1298 = vmatprep.subr.bf16.mxu0 0
        %1299 = vmatpush1.bf16.msra.mxu0 %v1289
        %1300 = vmatprep.subr.bf16.mxu0 0
        %1301 = vmatpush1.bf16.msra.mxu0 %v1288
        %1302 = vmatprep.subr.bf16.mxu0 0
        %1303 = vmatpush1.bf16.msra.mxu0 %v1287
        %1304 = vmatprep.subr.bf16.mxu0 0
        %1305 = vmatpush1.bf16.msra.mxu0 %v1286
        %1306 = vmatprep.subr.bf16.mxu0 0
        %1307 = vmatpush1.bf16.msra.mxu0 %v1285
        %1308 = vmatprep.subr.bf16.mxu0 0
        %1309 = vmatpush1.bf16.msra.mxu0 %v1284
        %1310 = vmatprep.subr.bf16.mxu0 0
        %1311 = vmatpush1.bf16.msra.mxu0 %v1283
        %1312 = vmatprep.subr.bf16.mxu0 0
        %1313 = vmatpush1.bf16.msra.mxu0 %v1282
        %1314 = vmatprep.subr.bf16.mxu0 0
        %1315 = vmatpush2.bf16.msra.mxu0 0
        %1316 = vmatprep.subr.bf16.mxu0 0
        %1317 = vmatpush2.bf16.msra.mxu0 0
        %1318 = vmatprep.subr.bf16.mxu0 0
        %1319 = vmatpush2.bf16.msra.mxu0 0
        %1320 = vmatprep.subr.bf16.mxu0 0
        %1321 = vmatpush2.bf16.msra.mxu0 0
        %1322 = vmatprep.subr.bf16.mxu0 0
        %1323 = vmatpush2.bf16.msra.mxu0 0
        %1324 = vmatprep.subr.bf16.mxu0 0
        %1325 = vmatpush2.bf16.msra.mxu0 0
        %1326 = vmatprep.subr.bf16.mxu0 0
        %1327 = vmatpush2.bf16.msra.mxu0 0
        %1328 = vmatprep.subr.bf16.mxu0 0
        %1329 = vmatpush2.bf16.msra.mxu0 0
        %1330 = vmatprep.mubr.bf16.mxu0 0
        %1331 = vmatmul.mubr.bf16.gmra.mxu0 %v1242
        %v1332 = vpop.f32.mrf.mxu0
        %v1333 = vadd.f32 %v1196, %v1332
        %v1334 = vpop.f32.mrf.mxu0
        %v1335 = vpop.f32.mrf.mxu0
        %v1336 = vadd.f32 %v1199, %v1335
        %v1337 = vpop.f32.mrf.mxu0
        %1338 = vmatprep.mubr.bf16.mxu0 0
        %1339 = vmatmul.mubr.bf16.gmra.mxu0 %v1243
        %v1340 = vpop.f32.mrf.mxu0
        %v1341 = vadd.f32 %v1204, %v1340
        %v1342 = vpop.f32.mrf.mxu0
        %v1343 = vpop.f32.mrf.mxu0
        %v1344 = vadd.f32 %v1207, %v1343
        %v1345 = vpop.f32.mrf.mxu0
        %1346 = vmatprep.mubr.bf16.mxu0 0
        %1347 = vmatmul.mubr.bf16.gmra.mxu0 %v1244
        %v1348 = vpop.f32.mrf.mxu0
        %v1349 = vadd.f32 %v1212, %v1348
        %v1350 = vpop.f32.mrf.mxu0
        %v1351 = vpop.f32.mrf.mxu0
        %v1352 = vadd.f32 %v1215, %v1351
        %v1353 = vpop.f32.mrf.mxu0
        %1354 = vmatprep.mubr.bf16.mxu0 0
        %1355 = vmatmul.mubr.bf16.gmra.mxu0 %v1245
        %v1356 = vpop.f32.mrf.mxu0
        %v1357 = vadd.f32 %v1220, %v1356
        %v1358 = vpop.f32.mrf.mxu0
        %v1359 = vpop.f32.mrf.mxu0
        %v1360 = vadd.f32 %v1223, %v1359
        %v1361 = vpop.f32.mrf.mxu0
        %1362 = vdwg.mxu0
        %v1363 = vld [vmem:[#allocation2] sm:$0xe]
        %v1364 = vld [vmem:[#allocation2 + $0x8] sm:$0xe]
        %v1365 = vld [vmem:[#allocation2 + $0x10] sm:$0xe]
        %v1366 = vld [vmem:[#allocation2 + $0x18] sm:$0xe]
        %v1367 = vld [vmem:[#allocation2 + $0x20] sm:$0xe]
        %v1368 = vld [vmem:[#allocation2 + $0x28] sm:$0xe]
        %v1369 = vld [vmem:[#allocation2 + $0x30] sm:$0xe]
        %v1370 = vld [vmem:[#allocation2 + $0x38] sm:$0xe]
        %vm1387 = vcmask 1042432
        %vm1388 = vcmask 1046532
        %vm1389 = vmor %vm1387, %vm1388
        %v1390 = vrot.slane %v1363, 5
        %v1391 = vrot.slane %v1390, 4
        %v1392 = vrot.slane %v974, 5
        %v1393 = vsel %vm1389, %v1391, %v1392
        %v1394 = vrot.slane %v1364, 5
        %v1395 = vrot.slane %v1394, 4
        %v1396 = vrot.slane %v975, 5
        %v1397 = vsel %vm1389, %v1395, %v1396
        %v1398 = vrot.slane %v1365, 5
        %v1399 = vrot.slane %v1398, 4
        %v1400 = vrot.slane %v976, 5
        %v1401 = vsel %vm1389, %v1399, %v1400
        %v1402 = vrot.slane %v1366, 5
        %v1403 = vrot.slane %v1402, 4
        %v1404 = vrot.slane %v977, 5
        %v1405 = vsel %vm1389, %v1403, %v1404
        %v1406 = vrot.slane %v1367, 5
        %v1407 = vrot.slane %v1406, 4
        %v1408 = vrot.slane %v978, 5
        %v1409 = vsel %vm1389, %v1407, %v1408
        %v1410 = vrot.slane %v1368, 5
        %v1411 = vrot.slane %v1410, 4
        %v1412 = vrot.slane %v979, 5
        %v1413 = vsel %vm1389, %v1411, %v1412
        %v1414 = vrot.slane %v1369, 5
        %v1415 = vrot.slane %v1414, 4
        %v1416 = vrot.slane %v980, 5
        %v1417 = vsel %vm1389, %v1415, %v1416
        %v1418 = vrot.slane %v1370, 5
        %v1419 = vrot.slane %v1418, 4
        %v1420 = vrot.slane %v981, 5
        %v1421 = vsel %vm1389, %v1419, %v1420
        %v1422 = vunpack.c.l.b16 %v1393
        %v1423 = vunpack.c.l.b16 %v1397
        %v1424 = vunpack.c.l.b16 %v1401
        %v1425 = vunpack.c.l.b16 %v1405
        %v1426 = vunpack.c.l.b16 %v1409
        %v1427 = vunpack.c.l.b16 %v1413
        %v1428 = vunpack.c.l.b16 %v1417
        %v1429 = vunpack.c.l.b16 %v1421
        %v1430 = vpack.c.b16 %v1423, %v1422
        %v1431 = vpack.c.b16 %v1425, %v1424
        %v1432 = vpack.c.b16 %v1427, %v1426
        %v1433 = vpack.c.b16 %v1429, %v1428
        %v1454 = vunpack.c.l.b16 %v831
        %v1455 = vunpack.c.l.b16 %v832
        %v1456 = vunpack.c.l.b16 %v833
        %v1457 = vunpack.c.l.b16 %v834
        %v1458 = vunpack.c.l.b16 %v835
        %v1459 = vunpack.c.l.b16 %v836
        %v1460 = vunpack.c.l.b16 %v837
        %v1461 = vunpack.c.l.b16 %v838
        %v1462 = vunpack.c.l.b16 %v839
        %v1463 = vunpack.c.l.b16 %v840
        %v1464 = vunpack.c.l.b16 %v841
        %v1465 = vunpack.c.l.b16 %v842
        %v1466 = vunpack.c.l.b16 %v843
        %v1467 = vunpack.c.l.b16 %v844
        %v1468 = vunpack.c.l.b16 %v845
        %v1469 = vunpack.c.l.b16 %v846
        %v1470 = vpack.c.b16 %v1455, %v1454
        %v1471 = vpack.c.b16 %v1457, %v1456
        %v1472 = vpack.c.b16 %v1459, %v1458
        %v1473 = vpack.c.b16 %v1461, %v1460
        %v1474 = vpack.c.b16 %v1463, %v1462
        %v1475 = vpack.c.b16 %v1465, %v1464
        %v1476 = vpack.c.b16 %v1467, %v1466
        %v1477 = vpack.c.b16 %v1469, %v1468
        %1486 = vmatprep.subr.bf16.mxu0 0
        %1487 = vmatpush1.bf16.msra.mxu0 %v1477
        %1488 = vmatprep.subr.bf16.mxu0 0
        %1489 = vmatpush1.bf16.msra.mxu0 %v1476
        %1490 = vmatprep.subr.bf16.mxu0 0
        %1491 = vmatpush1.bf16.msra.mxu0 %v1475
        %1492 = vmatprep.subr.bf16.mxu0 0
        %1493 = vmatpush1.bf16.msra.mxu0 %v1474
        %1494 = vmatprep.subr.bf16.mxu0 0
        %1495 = vmatpush1.bf16.msra.mxu0 %v1473
        %1496 = vmatprep.subr.bf16.mxu0 0
        %1497 = vmatpush1.bf16.msra.mxu0 %v1472
        %1498 = vmatprep.subr.bf16.mxu0 0
        %1499 = vmatpush1.bf16.msra.mxu0 %v1471
        %1500 = vmatprep.subr.bf16.mxu0 0
        %1501 = vmatpush1.bf16.msra.mxu0 %v1470
        %1502 = vmatprep.subr.bf16.mxu0 0
        %1503 = vmatpush2.bf16.msra.mxu0 0
        %1504 = vmatprep.subr.bf16.mxu0 0
        %1505 = vmatpush2.bf16.msra.mxu0 0
        %1506 = vmatprep.subr.bf16.mxu0 0
        %1507 = vmatpush2.bf16.msra.mxu0 0
        %1508 = vmatprep.subr.bf16.mxu0 0
        %1509 = vmatpush2.bf16.msra.mxu0 0
        %1510 = vmatprep.subr.bf16.mxu0 0
        %1511 = vmatpush2.bf16.msra.mxu0 0
        %1512 = vmatprep.subr.bf16.mxu0 0
        %1513 = vmatpush2.bf16.msra.mxu0 0
        %1514 = vmatprep.subr.bf16.mxu0 0
        %1515 = vmatpush2.bf16.msra.mxu0 0
        %1516 = vmatprep.subr.bf16.mxu0 0
        %1517 = vmatpush2.bf16.msra.mxu0 0
        %1518 = vmatprep.mubr.bf16.mxu0 0
        %1519 = vmatmul.mubr.bf16.gmra.mxu0 %v1430
        %v1520 = vpop.f32.mrf.mxu0
        %v1521 = vadd.f32 0.0, %v1520
        %v1522 = vpop.f32.mrf.mxu0
        %v1523 = vpop.f32.mrf.mxu0
        %v1524 = vadd.f32 0.0, %v1523
        %v1525 = vpop.f32.mrf.mxu0
        %1526 = vmatprep.mubr.bf16.mxu0 0
        %1527 = vmatmul.mubr.bf16.gmra.mxu0 %v1431
        %v1528 = vpop.f32.mrf.mxu0
        %v1529 = vadd.f32 0.0, %v1528
        %v1530 = vpop.f32.mrf.mxu0
        %v1531 = vpop.f32.mrf.mxu0
        %v1532 = vadd.f32 0.0, %v1531
        %v1533 = vpop.f32.mrf.mxu0
        %1534 = vmatprep.mubr.bf16.mxu0 0
        %1535 = vmatmul.mubr.bf16.gmra.mxu0 %v1432
        %v1536 = vpop.f32.mrf.mxu0
        %v1537 = vadd.f32 0.0, %v1536
        %v1538 = vpop.f32.mrf.mxu0
        %v1539 = vpop.f32.mrf.mxu0
        %v1540 = vadd.f32 0.0, %v1539
        %v1541 = vpop.f32.mrf.mxu0
        %1542 = vmatprep.mubr.bf16.mxu0 0
        %1543 = vmatmul.mubr.bf16.gmra.mxu0 %v1433
        %v1544 = vpop.f32.mrf.mxu0
        %v1545 = vadd.f32 0.0, %v1544
        %v1546 = vpop.f32.mrf.mxu0
        %v1547 = vpop.f32.mrf.mxu0
        %v1548 = vadd.f32 0.0, %v1547
        %v1549 = vpop.f32.mrf.mxu0
        %1550 = vdwg.mxu0
        %v1551 = vadd.f32 %v1333, %v1521
        %v1552 = vadd.f32 %v1336, %v1524
        %v1553 = vadd.f32 %v1341, %v1529
        %v1554 = vadd.f32 %v1344, %v1532
        %v1555 = vadd.f32 %v1349, %v1537
        %v1556 = vadd.f32 %v1352, %v1540
        %v1557 = vadd.f32 %v1357, %v1545
        %v1558 = vadd.f32 %v1360, %v1548
        %v1559 = vld [vmem:[%s670] sm:$0xf]
        %v1560 = vld [vmem:[%s670 + $0x8] sm:$0xf]
        %v1561 = vld [vmem:[%s670 + $0x10] sm:$0xf]
        %v1562 = vld [vmem:[%s670 + $0x18] sm:$0xf]
        %v1563 = vld [vmem:[%s670 + $0x20] sm:$0xf]
        %v1564 = vld [vmem:[%s670 + $0x28] sm:$0xf]
        %v1565 = vld [vmem:[%s670 + $0x30] sm:$0xf]
        %v1566 = vld [vmem:[%s670 + $0x38] sm:$0xf]
        %v1575 = vunpack.c.l.b16 %v1559
        %v1576 = vunpack.c.l.b16 %v1560
        %v1577 = vunpack.c.l.b16 %v1561
        %v1578 = vunpack.c.l.b16 %v1562
        %v1579 = vunpack.c.l.b16 %v1563
        %v1580 = vunpack.c.l.b16 %v1564
        %v1581 = vunpack.c.l.b16 %v1565
        %v1582 = vunpack.c.l.b16 %v1566
        %v1583 = vpack.c.b16 %v1576, %v1575
        %v1584 = vpack.c.b16 %v1578, %v1577
        %v1585 = vpack.c.b16 %v1580, %v1579
        %v1586 = vpack.c.b16 %v1582, %v1581
        %v1607 = vunpack.c.l.b16 %v848
        %v1608 = vunpack.c.l.b16 %v849
        %v1609 = vunpack.c.l.b16 %v850
        %v1610 = vunpack.c.l.b16 %v851
        %v1611 = vunpack.c.l.b16 %v852
        %v1612 = vunpack.c.l.b16 %v853
        %v1613 = vunpack.c.l.b16 %v854
        %v1614 = vunpack.c.l.b16 %v855
        %v1615 = vunpack.c.l.b16 %v856
        %v1616 = vunpack.c.l.b16 %v857
        %v1617 = vunpack.c.l.b16 %v858
        %v1618 = vunpack.c.l.b16 %v859
        %v1619 = vunpack.c.l.b16 %v860
        %v1620 = vunpack.c.l.b16 %v861
        %v1621 = vunpack.c.l.b16 %v862
        %v1622 = vunpack.c.l.b16 %v863
        %v1623 = vpack.c.b16 %v1608, %v1607
        %v1624 = vpack.c.b16 %v1610, %v1609
        %v1625 = vpack.c.b16 %v1612, %v1611
        %v1626 = vpack.c.b16 %v1614, %v1613
        %v1627 = vpack.c.b16 %v1616, %v1615
        %v1628 = vpack.c.b16 %v1618, %v1617
        %v1629 = vpack.c.b16 %v1620, %v1619
        %v1630 = vpack.c.b16 %v1622, %v1621
        %1639 = vmatprep.subr.bf16.mxu0 0
        %1640 = vmatpush1.bf16.msra.mxu0 %v1630
        %1641 = vmatprep.subr.bf16.mxu0 0
        %1642 = vmatpush1.bf16.msra.mxu0 %v1629
        %1643 = vmatprep.subr.bf16.mxu0 0
        %1644 = vmatpush1.bf16.msra.mxu0 %v1628
        %1645 = vmatprep.subr.bf16.mxu0 0
        %1646 = vmatpush1.bf16.msra.mxu0 %v1627
        %1647 = vmatprep.subr.bf16.mxu0 0
        %1648 = vmatpush1.bf16.msra.mxu0 %v1626
        %1649 = vmatprep.subr.bf16.mxu0 0
        %1650 = vmatpush1.bf16.msra.mxu0 %v1625
        %1651 = vmatprep.subr.bf16.mxu0 0
        %1652 = vmatpush1.bf16.msra.mxu0 %v1624
        %1653 = vmatprep.subr.bf16.mxu0 0
        %1654 = vmatpush1.bf16.msra.mxu0 %v1623
        %1655 = vmatprep.subr.bf16.mxu0 0
        %1656 = vmatpush2.bf16.msra.mxu0 0
        %1657 = vmatprep.subr.bf16.mxu0 0
        %1658 = vmatpush2.bf16.msra.mxu0 0
        %1659 = vmatprep.subr.bf16.mxu0 0
        %1660 = vmatpush2.bf16.msra.mxu0 0
        %1661 = vmatprep.subr.bf16.mxu0 0
        %1662 = vmatpush2.bf16.msra.mxu0 0
        %1663 = vmatprep.subr.bf16.mxu0 0
        %1664 = vmatpush2.bf16.msra.mxu0 0
        %1665 = vmatprep.subr.bf16.mxu0 0
        %1666 = vmatpush2.bf16.msra.mxu0 0
        %1667 = vmatprep.subr.bf16.mxu0 0
        %1668 = vmatpush2.bf16.msra.mxu0 0
        %1669 = vmatprep.subr.bf16.mxu0 0
        %1670 = vmatpush2.bf16.msra.mxu0 0
        %1671 = vmatprep.mubr.bf16.mxu0 0
        %1672 = vmatmul.mubr.bf16.gmra.mxu0 %v1583
        %v1673 = vpop.f32.mrf.mxu0
        %v1674 = vadd.f32 0.0, %v1673
        %v1675 = vpop.f32.mrf.mxu0
        %v1676 = vpop.f32.mrf.mxu0
        %v1677 = vadd.f32 0.0, %v1676
        %v1678 = vpop.f32.mrf.mxu0
        %1679 = vmatprep.mubr.bf16.mxu0 0
        %1680 = vmatmul.mubr.bf16.gmra.mxu0 %v1584
        %v1681 = vpop.f32.mrf.mxu0
        %v1682 = vadd.f32 0.0, %v1681
        %v1683 = vpop.f32.mrf.mxu0
        %v1684 = vpop.f32.mrf.mxu0
        %v1685 = vadd.f32 0.0, %v1684
        %v1686 = vpop.f32.mrf.mxu0
        %1687 = vmatprep.mubr.bf16.mxu0 0
        %1688 = vmatmul.mubr.bf16.gmra.mxu0 %v1585
        %v1689 = vpop.f32.mrf.mxu0
        %v1690 = vadd.f32 0.0, %v1689
        %v1691 = vpop.f32.mrf.mxu0
        %v1692 = vpop.f32.mrf.mxu0
        %v1693 = vadd.f32 0.0, %v1692
        %v1694 = vpop.f32.mrf.mxu0
        %1695 = vmatprep.mubr.bf16.mxu0 0
        %1696 = vmatmul.mubr.bf16.gmra.mxu0 %v1586
        %v1697 = vpop.f32.mrf.mxu0
        %v1698 = vadd.f32 0.0, %v1697
        %v1699 = vpop.f32.mrf.mxu0
        %v1700 = vpop.f32.mrf.mxu0
        %v1701 = vadd.f32 0.0, %v1700
        %v1702 = vpop.f32.mrf.mxu0
        %1703 = vdwg.mxu0
        %v1704 = vadd.f32 %v1551, %v1674
        %v1705 = vadd.f32 %v1552, %v1677
        %v1706 = vadd.f32 %v1553, %v1682
        %v1707 = vadd.f32 %v1554, %v1685
        %v1708 = vadd.f32 %v1555, %v1690
        %v1709 = vadd.f32 %v1556, %v1693
        %v1710 = vadd.f32 %v1557, %v1698
        %v1711 = vadd.f32 %v1558, %v1701
        %v1712 = vld [vmem:[%s670] sm:$0xf]
        %v1713 = vld [vmem:[%s670 + $0x4] sm:$0x1]
        %v1714 = vld [vmem:[%s670 + $0x8] sm:$0xf]
        %v1715 = vld [vmem:[%s670 + $0xc] sm:$0x1]
        %v1716 = vld [vmem:[%s670 + $0x10] sm:$0xf]
        %v1717 = vld [vmem:[%s670 + $0x14] sm:$0x1]
        %v1718 = vld [vmem:[%s670 + $0x18] sm:$0xf]
        %v1719 = vld [vmem:[%s670 + $0x1c] sm:$0x1]
        %v1720 = vld [vmem:[%s670 + $0x20] sm:$0xf]
        %v1721 = vld [vmem:[%s670 + $0x24] sm:$0x1]
        %v1722 = vld [vmem:[%s670 + $0x28] sm:$0xf]
        %v1723 = vld [vmem:[%s670 + $0x2c] sm:$0x1]
        %v1724 = vld [vmem:[%s670 + $0x30] sm:$0xf]
        %v1725 = vld [vmem:[%s670 + $0x34] sm:$0x1]
        %v1726 = vld [vmem:[%s670 + $0x38] sm:$0xf]
        %v1727 = vld [vmem:[%s670 + $0x3c] sm:$0x1]
        %v1729 = vshrl.u32 %v1712, 16
        %v1731 = vrot.slane %v1729, 4
        %v1732 = vshll.u32 %v1712, 16
        %v1734 = vrot.slane %v1732, 5
        %v1735 = vor.u32 %v1731, %v1734
        %v1736 = vrot.slane %v1735, 4
        %v1738 = vshll.u32 %v1713, 16
        %v1740 = vrot.slane %v1738, 5
        %v1741 = vsel %vm984, %v1736, %v1740
        %v1743 = vshrl.u32 %v1714, 16
        %v1745 = vrot.slane %v1743, 4
        %v1746 = vshll.u32 %v1714, 16
        %v1748 = vrot.slane %v1746, 5
        %v1749 = vor.u32 %v1745, %v1748
        %v1750 = vrot.slane %v1749, 4
        %v1752 = vshll.u32 %v1715, 16
        %v1754 = vrot.slane %v1752, 5
        %v1755 = vsel %vm984, %v1750, %v1754
        %v1757 = vshrl.u32 %v1716, 16
        %v1759 = vrot.slane %v1757, 4
        %v1760 = vshll.u32 %v1716, 16
        %v1762 = vrot.slane %v1760, 5
        %v1763 = vor.u32 %v1759, %v1762
        %v1764 = vrot.slane %v1763, 4
        %v1766 = vshll.u32 %v1717, 16
        %v1768 = vrot.slane %v1766, 5
        %v1769 = vsel %vm984, %v1764, %v1768
        %v1771 = vshrl.u32 %v1718, 16
        %v1773 = vrot.slane %v1771, 4
        %v1774 = vshll.u32 %v1718, 16
        %v1776 = vrot.slane %v1774, 5
        %v1777 = vor.u32 %v1773, %v1776
        %v1778 = vrot.slane %v1777, 4
        %v1780 = vshll.u32 %v1719, 16
        %v1782 = vrot.slane %v1780, 5
        %v1783 = vsel %vm984, %v1778, %v1782
        %v1785 = vshrl.u32 %v1720, 16
        %v1787 = vrot.slane %v1785, 4
        %v1788 = vshll.u32 %v1720, 16
        %v1790 = vrot.slane %v1788, 5
        %v1791 = vor.u32 %v1787, %v1790
        %v1792 = vrot.slane %v1791, 4
        %v1794 = vshll.u32 %v1721, 16
        %v1796 = vrot.slane %v1794, 5
        %v1797 = vsel %vm984, %v1792, %v1796
        %v1799 = vshrl.u32 %v1722, 16
        %v1801 = vrot.slane %v1799, 4
        %v1802 = vshll.u32 %v1722, 16
        %v1804 = vrot.slane %v1802, 5
        %v1805 = vor.u32 %v1801, %v1804
        %v1806 = vrot.slane %v1805, 4
        %v1808 = vshll.u32 %v1723, 16
        %v1810 = vrot.slane %v1808, 5
        %v1811 = vsel %vm984, %v1806, %v1810
        %v1813 = vshrl.u32 %v1724, 16
        %v1815 = vrot.slane %v1813, 4
        %v1816 = vshll.u32 %v1724, 16
        %v1818 = vrot.slane %v1816, 5
        %v1819 = vor.u32 %v1815, %v1818
        %v1820 = vrot.slane %v1819, 4
        %v1822 = vshll.u32 %v1725, 16
        %v1824 = vrot.slane %v1822, 5
        %v1825 = vsel %vm984, %v1820, %v1824
        %v1827 = vshrl.u32 %v1726, 16
        %v1829 = vrot.slane %v1827, 4
        %v1830 = vshll.u32 %v1726, 16
        %v1832 = vrot.slane %v1830, 5
        %v1833 = vor.u32 %v1829, %v1832
        %v1834 = vrot.slane %v1833, 4
        %v1836 = vshll.u32 %v1727, 16
        %v1838 = vrot.slane %v1836, 5
        %v1839 = vsel %vm984, %v1834, %v1838
        %v1840 = vunpack.c.l.b16 %v1741
        %v1841 = vunpack.c.l.b16 %v1755
        %v1842 = vunpack.c.l.b16 %v1769
        %v1843 = vunpack.c.l.b16 %v1783
        %v1844 = vunpack.c.l.b16 %v1797
        %v1845 = vunpack.c.l.b16 %v1811
        %v1846 = vunpack.c.l.b16 %v1825
        %v1847 = vunpack.c.l.b16 %v1839
        %v1848 = vpack.c.b16 %v1841, %v1840
        %v1849 = vpack.c.b16 %v1843, %v1842
        %v1850 = vpack.c.b16 %v1845, %v1844
        %v1851 = vpack.c.b16 %v1847, %v1846
        %v1872 = vunpack.c.l.b16 %v865
        %v1873 = vunpack.c.l.b16 %v866
        %v1874 = vunpack.c.l.b16 %v867
        %v1875 = vunpack.c.l.b16 %v868
        %v1876 = vunpack.c.l.b16 %v869
        %v1877 = vunpack.c.l.b16 %v870
        %v1878 = vunpack.c.l.b16 %v871
        %v1879 = vunpack.c.l.b16 %v872
        %v1880 = vunpack.c.l.b16 %v873
        %v1881 = vunpack.c.l.b16 %v874
        %v1882 = vunpack.c.l.b16 %v875
        %v1883 = vunpack.c.l.b16 %v876
        %v1884 = vunpack.c.l.b16 %v877
        %v1885 = vunpack.c.l.b16 %v878
        %v1886 = vunpack.c.l.b16 %v879
        %v1887 = vunpack.c.l.b16 %v880
        %v1888 = vpack.c.b16 %v1873, %v1872
        %v1889 = vpack.c.b16 %v1875, %v1874
        %v1890 = vpack.c.b16 %v1877, %v1876
        %v1891 = vpack.c.b16 %v1879, %v1878
        %v1892 = vpack.c.b16 %v1881, %v1880
        %v1893 = vpack.c.b16 %v1883, %v1882
        %v1894 = vpack.c.b16 %v1885, %v1884
        %v1895 = vpack.c.b16 %v1887, %v1886
        %1904 = vmatprep.subr.bf16.mxu0 0
        %1905 = vmatpush1.bf16.msra.mxu0 %v1895
        %1906 = vmatprep.subr.bf16.mxu0 0
        %1907 = vmatpush1.bf16.msra.mxu0 %v1894
        %1908 = vmatprep.subr.bf16.mxu0 0
        %1909 = vmatpush1.bf16.msra.mxu0 %v1893
        %1910 = vmatprep.subr.bf16.mxu0 0
        %1911 = vmatpush1.bf16.msra.mxu0 %v1892
        %1912 = vmatprep.subr.bf16.mxu0 0
        %1913 = vmatpush1.bf16.msra.mxu0 %v1891
        %1914 = vmatprep.subr.bf16.mxu0 0
        %1915 = vmatpush1.bf16.msra.mxu0 %v1890
        %1916 = vmatprep.subr.bf16.mxu0 0
        %1917 = vmatpush1.bf16.msra.mxu0 %v1889
        %1918 = vmatprep.subr.bf16.mxu0 0
        %1919 = vmatpush1.bf16.msra.mxu0 %v1888
        %1920 = vmatprep.subr.bf16.mxu0 0
        %1921 = vmatpush2.bf16.msra.mxu0 0
        %1922 = vmatprep.subr.bf16.mxu0 0
        %1923 = vmatpush2.bf16.msra.mxu0 0
        %1924 = vmatprep.subr.bf16.mxu0 0
        %1925 = vmatpush2.bf16.msra.mxu0 0
        %1926 = vmatprep.subr.bf16.mxu0 0
        %1927 = vmatpush2.bf16.msra.mxu0 0
        %1928 = vmatprep.subr.bf16.mxu0 0
        %1929 = vmatpush2.bf16.msra.mxu0 0
        %1930 = vmatprep.subr.bf16.mxu0 0
        %1931 = vmatpush2.bf16.msra.mxu0 0
        %1932 = vmatprep.subr.bf16.mxu0 0
        %1933 = vmatpush2.bf16.msra.mxu0 0
        %1934 = vmatprep.subr.bf16.mxu0 0
        %1935 = vmatpush2.bf16.msra.mxu0 0
        %1936 = vmatprep.mubr.bf16.mxu0 0
        %1937 = vmatmul.mubr.bf16.gmra.mxu0 %v1848
        %v1938 = vpop.f32.mrf.mxu0
        %v1939 = vadd.f32 0.0, %v1938
        %v1940 = vpop.f32.mrf.mxu0
        %v1941 = vpop.f32.mrf.mxu0
        %v1942 = vadd.f32 0.0, %v1941
        %v1943 = vpop.f32.mrf.mxu0
        %1944 = vmatprep.mubr.bf16.mxu0 0
        %1945 = vmatmul.mubr.bf16.gmra.mxu0 %v1849
        %v1946 = vpop.f32.mrf.mxu0
        %v1947 = vadd.f32 0.0, %v1946
        %v1948 = vpop.f32.mrf.mxu0
        %v1949 = vpop.f32.mrf.mxu0
        %v1950 = vadd.f32 0.0, %v1949
        %v1951 = vpop.f32.mrf.mxu0
        %1952 = vmatprep.mubr.bf16.mxu0 0
        %1953 = vmatmul.mubr.bf16.gmra.mxu0 %v1850
        %v1954 = vpop.f32.mrf.mxu0
        %v1955 = vadd.f32 0.0, %v1954
        %v1956 = vpop.f32.mrf.mxu0
        %v1957 = vpop.f32.mrf.mxu0
        %v1958 = vadd.f32 0.0, %v1957
        %v1959 = vpop.f32.mrf.mxu0
        %1960 = vmatprep.mubr.bf16.mxu0 0
        %1961 = vmatmul.mubr.bf16.gmra.mxu0 %v1851
        %v1962 = vpop.f32.mrf.mxu0
        %v1963 = vadd.f32 0.0, %v1962
        %v1964 = vpop.f32.mrf.mxu0
        %v1965 = vpop.f32.mrf.mxu0
        %v1966 = vadd.f32 0.0, %v1965
        %v1967 = vpop.f32.mrf.mxu0
        %1968 = vdwg.mxu0
        %v1969 = vadd.f32 %v1704, %v1939
        %v1970 = vadd.f32 %v1705, %v1942
        %v1971 = vadd.f32 %v1706, %v1947
        %v1972 = vadd.f32 %v1707, %v1950
        %v1973 = vadd.f32 %v1708, %v1955
        %v1974 = vadd.f32 %v1709, %v1958
        %v1975 = vadd.f32 %v1710, %v1963
        %v1976 = vadd.f32 %v1711, %v1966
        %v1977 = vld [vmem:[%s670] sm:$0xe]
        %v1978 = vld [vmem:[%s670 + $0x8] sm:$0xe]
        %v1979 = vld [vmem:[%s670 + $0x10] sm:$0xe]
        %v1980 = vld [vmem:[%s670 + $0x18] sm:$0xe]
        %v1981 = vld [vmem:[%s670 + $0x20] sm:$0xe]
        %v1982 = vld [vmem:[%s670 + $0x28] sm:$0xe]
        %v1983 = vld [vmem:[%s670 + $0x30] sm:$0xe]
        %v1984 = vld [vmem:[%s670 + $0x38] sm:$0xe]
        %v2001 = vrot.slane %v1977, 5
        %v2002 = vrot.slane %v2001, 4
        %v2003 = vrot.slane %v1713, 5
        %v2004 = vsel %vm1389, %v2002, %v2003
        %v2005 = vrot.slane %v1978, 5
        %v2006 = vrot.slane %v2005, 4
        %v2007 = vrot.slane %v1715, 5
        %v2008 = vsel %vm1389, %v2006, %v2007
        %v2009 = vrot.slane %v1979, 5
        %v2010 = vrot.slane %v2009, 4
        %v2011 = vrot.slane %v1717, 5
        %v2012 = vsel %vm1389, %v2010, %v2011
        %v2013 = vrot.slane %v1980, 5
        %v2014 = vrot.slane %v2013, 4
        %v2015 = vrot.slane %v1719, 5
        %v2016 = vsel %vm1389, %v2014, %v2015
        %v2017 = vrot.slane %v1981, 5
        %v2018 = vrot.slane %v2017, 4
        %v2019 = vrot.slane %v1721, 5
        %v2020 = vsel %vm1389, %v2018, %v2019
        %v2021 = vrot.slane %v1982, 5
        %v2022 = vrot.slane %v2021, 4
        %v2023 = vrot.slane %v1723, 5
        %v2024 = vsel %vm1389, %v2022, %v2023
        %v2025 = vrot.slane %v1983, 5
        %v2026 = vrot.slane %v2025, 4
        %v2027 = vrot.slane %v1725, 5
        %v2028 = vsel %vm1389, %v2026, %v2027
        %v2029 = vrot.slane %v1984, 5
        %v2030 = vrot.slane %v2029, 4
        %v2031 = vrot.slane %v1727, 5
        %v2032 = vsel %vm1389, %v2030, %v2031
        %v2033 = vunpack.c.l.b16 %v2004
        %v2034 = vunpack.c.l.b16 %v2008
        %v2035 = vunpack.c.l.b16 %v2012
        %v2036 = vunpack.c.l.b16 %v2016
        %v2037 = vunpack.c.l.b16 %v2020
        %v2038 = vunpack.c.l.b16 %v2024
        %v2039 = vunpack.c.l.b16 %v2028
        %v2040 = vunpack.c.l.b16 %v2032
        %v2041 = vpack.c.b16 %v2034, %v2033
        %v2042 = vpack.c.b16 %v2036, %v2035
        %v2043 = vpack.c.b16 %v2038, %v2037
        %v2044 = vpack.c.b16 %v2040, %v2039
        %v2065 = vunpack.c.l.b16 %v882
        %v2066 = vunpack.c.l.b16 %v883
        %v2067 = vunpack.c.l.b16 %v884
        %v2068 = vunpack.c.l.b16 %v885
        %v2069 = vunpack.c.l.b16 %v886
        %v2070 = vunpack.c.l.b16 %v887
        %v2071 = vunpack.c.l.b16 %v888
        %v2072 = vunpack.c.l.b16 %v889
        %v2073 = vunpack.c.l.b16 %v890
        %v2074 = vunpack.c.l.b16 %v891
        %v2075 = vunpack.c.l.b16 %v892
        %v2076 = vunpack.c.l.b16 %v893
        %v2077 = vunpack.c.l.b16 %v894
        %v2078 = vunpack.c.l.b16 %v895
        %v2079 = vunpack.c.l.b16 %v896
        %v2080 = vunpack.c.l.b16 %v897
        %v2081 = vpack.c.b16 %v2066, %v2065
        %v2082 = vpack.c.b16 %v2068, %v2067
        %v2083 = vpack.c.b16 %v2070, %v2069
        %v2084 = vpack.c.b16 %v2072, %v2071
        %v2085 = vpack.c.b16 %v2074, %v2073
        %v2086 = vpack.c.b16 %v2076, %v2075
        %v2087 = vpack.c.b16 %v2078, %v2077
        %v2088 = vpack.c.b16 %v2080, %v2079
        %2097 = vmatprep.subr.bf16.mxu0 0
        %2098 = vmatpush1.bf16.msra.mxu0 %v2088
        %2099 = vmatprep.subr.bf16.mxu0 0
        %2100 = vmatpush1.bf16.msra.mxu0 %v2087
        %2101 = vmatprep.subr.bf16.mxu0 0
        %2102 = vmatpush1.bf16.msra.mxu0 %v2086
        %2103 = vmatprep.subr.bf16.mxu0 0
        %2104 = vmatpush1.bf16.msra.mxu0 %v2085
        %2105 = vmatprep.subr.bf16.mxu0 0
        %2106 = vmatpush1.bf16.msra.mxu0 %v2084
        %2107 = vmatprep.subr.bf16.mxu0 0
        %2108 = vmatpush1.bf16.msra.mxu0 %v2083
        %2109 = vmatprep.subr.bf16.mxu0 0
        %2110 = vmatpush1.bf16.msra.mxu0 %v2082
        %2111 = vmatprep.subr.bf16.mxu0 0
        %2112 = vmatpush1.bf16.msra.mxu0 %v2081
        %2113 = vmatprep.subr.bf16.mxu0 0
        %2114 = vmatpush2.bf16.msra.mxu0 0
        %2115 = vmatprep.subr.bf16.mxu0 0
        %2116 = vmatpush2.bf16.msra.mxu0 0
        %2117 = vmatprep.subr.bf16.mxu0 0
        %2118 = vmatpush2.bf16.msra.mxu0 0
        %2119 = vmatprep.subr.bf16.mxu0 0
        %2120 = vmatpush2.bf16.msra.mxu0 0
        %2121 = vmatprep.subr.bf16.mxu0 0
        %2122 = vmatpush2.bf16.msra.mxu0 0
        %2123 = vmatprep.subr.bf16.mxu0 0
        %2124 = vmatpush2.bf16.msra.mxu0 0
        %2125 = vmatprep.subr.bf16.mxu0 0
        %2126 = vmatpush2.bf16.msra.mxu0 0
        %2127 = vmatprep.subr.bf16.mxu0 0
        %2128 = vmatpush2.bf16.msra.mxu0 0
        %2129 = vmatprep.mubr.bf16.mxu0 0
        %2130 = vmatmul.mubr.bf16.gmra.mxu0 %v2041
        %v2131 = vpop.f32.mrf.mxu0
        %v2132 = vadd.f32 0.0, %v2131
        %v2133 = vpop.f32.mrf.mxu0
        %v2134 = vpop.f32.mrf.mxu0
        %v2135 = vadd.f32 0.0, %v2134
        %v2136 = vpop.f32.mrf.mxu0
        %2137 = vmatprep.mubr.bf16.mxu0 0
        %2138 = vmatmul.mubr.bf16.gmra.mxu0 %v2042
        %v2139 = vpop.f32.mrf.mxu0
        %v2140 = vadd.f32 0.0, %v2139
        %v2141 = vpop.f32.mrf.mxu0
        %v2142 = vpop.f32.mrf.mxu0
        %v2143 = vadd.f32 0.0, %v2142
        %v2144 = vpop.f32.mrf.mxu0
        %2145 = vmatprep.mubr.bf16.mxu0 0
        %2146 = vmatmul.mubr.bf16.gmra.mxu0 %v2043
        %v2147 = vpop.f32.mrf.mxu0
        %v2148 = vadd.f32 0.0, %v2147
        %v2149 = vpop.f32.mrf.mxu0
        %v2150 = vpop.f32.mrf.mxu0
        %v2151 = vadd.f32 0.0, %v2150
        %v2152 = vpop.f32.mrf.mxu0
        %2153 = vmatprep.mubr.bf16.mxu0 0
        %2154 = vmatmul.mubr.bf16.gmra.mxu0 %v2044
        %v2155 = vpop.f32.mrf.mxu0
        %v2156 = vadd.f32 0.0, %v2155
        %v2157 = vpop.f32.mrf.mxu0
        %v2158 = vpop.f32.mrf.mxu0
        %v2159 = vadd.f32 0.0, %v2158
        %v2160 = vpop.f32.mrf.mxu0
        %2161 = vdwg.mxu0
        %v2162 = vadd.f32 %v1969, %v2132
        %v2163 = vadd.f32 %v1970, %v2135
        %v2164 = vadd.f32 %v1971, %v2140
        %v2165 = vadd.f32 %v1972, %v2143
        %v2166 = vadd.f32 %v1973, %v2148
        %v2167 = vadd.f32 %v1974, %v2151
        %v2168 = vadd.f32 %v1975, %v2156
        %v2169 = vadd.f32 %v1976, %v2159
        %s2170 = scalar_lea.vmem [#allocation2], 16
        %v2171 = vld [vmem:[%s2170] sm:$0xf]
        %v2172 = vld [vmem:[%s2170 + $0x8] sm:$0xf]
        %v2173 = vld [vmem:[%s2170 + $0x10] sm:$0xf]
        %v2174 = vld [vmem:[%s2170 + $0x18] sm:$0xf]
        %v2175 = vld [vmem:[%s2170 + $0x20] sm:$0xf]
        %v2176 = vld [vmem:[%s2170 + $0x28] sm:$0xf]
        %v2177 = vld [vmem:[%s2170 + $0x30] sm:$0xf]
        %v2178 = vld [vmem:[%s2170 + $0x38] sm:$0xf]
        %v2187 = vunpack.c.l.b16 %v2171
        %v2188 = vunpack.c.l.b16 %v2172
        %v2189 = vunpack.c.l.b16 %v2173
        %v2190 = vunpack.c.l.b16 %v2174
        %v2191 = vunpack.c.l.b16 %v2175
        %v2192 = vunpack.c.l.b16 %v2176
        %v2193 = vunpack.c.l.b16 %v2177
        %v2194 = vunpack.c.l.b16 %v2178
        %v2195 = vpack.c.b16 %v2188, %v2187
        %v2196 = vpack.c.b16 %v2190, %v2189
        %v2197 = vpack.c.b16 %v2192, %v2191
        %v2198 = vpack.c.b16 %v2194, %v2193
        %v2219 = vunpack.c.l.b16 %v899
        %v2220 = vunpack.c.l.b16 %v900
        %v2221 = vunpack.c.l.b16 %v901
        %v2222 = vunpack.c.l.b16 %v902
        %v2223 = vunpack.c.l.b16 %v903
        %v2224 = vunpack.c.l.b16 %v904
        %v2225 = vunpack.c.l.b16 %v905
        %v2226 = vunpack.c.l.b16 %v906
        %v2227 = vunpack.c.l.b16 %v907
        %v2228 = vunpack.c.l.b16 %v908
        %v2229 = vunpack.c.l.b16 %v909
        %v2230 = vunpack.c.l.b16 %v910
        %v2231 = vunpack.c.l.b16 %v911
        %v2232 = vunpack.c.l.b16 %v912
        %v2233 = vunpack.c.l.b16 %v913
        %v2234 = vunpack.c.l.b16 %v914
        %v2235 = vpack.c.b16 %v2220, %v2219
        %v2236 = vpack.c.b16 %v2222, %v2221
        %v2237 = vpack.c.b16 %v2224, %v2223
        %v2238 = vpack.c.b16 %v2226, %v2225
        %v2239 = vpack.c.b16 %v2228, %v2227
        %v2240 = vpack.c.b16 %v2230, %v2229
        %v2241 = vpack.c.b16 %v2232, %v2231
        %v2242 = vpack.c.b16 %v2234, %v2233
        %2251 = vmatprep.subr.bf16.mxu0 0
        %2252 = vmatpush1.bf16.msra.mxu0 %v2242
        %2253 = vmatprep.subr.bf16.mxu0 0
        %2254 = vmatpush1.bf16.msra.mxu0 %v2241
        %2255 = vmatprep.subr.bf16.mxu0 0
        %2256 = vmatpush1.bf16.msra.mxu0 %v2240
        %2257 = vmatprep.subr.bf16.mxu0 0
        %2258 = vmatpush1.bf16.msra.mxu0 %v2239
        %2259 = vmatprep.subr.bf16.mxu0 0
        %2260 = vmatpush1.bf16.msra.mxu0 %v2238
        %2261 = vmatprep.subr.bf16.mxu0 0
        %2262 = vmatpush1.bf16.msra.mxu0 %v2237
        %2263 = vmatprep.subr.bf16.mxu0 0
        %2264 = vmatpush1.bf16.msra.mxu0 %v2236
        %2265 = vmatprep.subr.bf16.mxu0 0
        %2266 = vmatpush1.bf16.msra.mxu0 %v2235
        %2267 = vmatprep.subr.bf16.mxu0 0
        %2268 = vmatpush2.bf16.msra.mxu0 0
        %2269 = vmatprep.subr.bf16.mxu0 0
        %2270 = vmatpush2.bf16.msra.mxu0 0
        %2271 = vmatprep.subr.bf16.mxu0 0
        %2272 = vmatpush2.bf16.msra.mxu0 0
        %2273 = vmatprep.subr.bf16.mxu0 0
        %2274 = vmatpush2.bf16.msra.mxu0 0
        %2275 = vmatprep.subr.bf16.mxu0 0
        %2276 = vmatpush2.bf16.msra.mxu0 0
        %2277 = vmatprep.subr.bf16.mxu0 0
        %2278 = vmatpush2.bf16.msra.mxu0 0
        %2279 = vmatprep.subr.bf16.mxu0 0
        %2280 = vmatpush2.bf16.msra.mxu0 0
        %2281 = vmatprep.subr.bf16.mxu0 0
        %2282 = vmatpush2.bf16.msra.mxu0 0
        %2283 = vmatprep.mubr.bf16.mxu0 0
        %2284 = vmatmul.mubr.bf16.gmra.mxu0 %v2195
        %v2285 = vpop.f32.mrf.mxu0
        %v2286 = vadd.f32 0.0, %v2285
        %v2287 = vpop.f32.mrf.mxu0
        %v2288 = vpop.f32.mrf.mxu0
        %v2289 = vadd.f32 0.0, %v2288
        %v2290 = vpop.f32.mrf.mxu0
        %2291 = vmatprep.mubr.bf16.mxu0 0
        %2292 = vmatmul.mubr.bf16.gmra.mxu0 %v2196
        %v2293 = vpop.f32.mrf.mxu0
        %v2294 = vadd.f32 0.0, %v2293
        %v2295 = vpop.f32.mrf.mxu0
        %v2296 = vpop.f32.mrf.mxu0
        %v2297 = vadd.f32 0.0, %v2296
        %v2298 = vpop.f32.mrf.mxu0
        %2299 = vmatprep.mubr.bf16.mxu0 0
        %2300 = vmatmul.mubr.bf16.gmra.mxu0 %v2197
        %v2301 = vpop.f32.mrf.mxu0
        %v2302 = vadd.f32 0.0, %v2301
        %v2303 = vpop.f32.mrf.mxu0
        %v2304 = vpop.f32.mrf.mxu0
        %v2305 = vadd.f32 0.0, %v2304
        %v2306 = vpop.f32.mrf.mxu0
        %2307 = vmatprep.mubr.bf16.mxu0 0
        %2308 = vmatmul.mubr.bf16.gmra.mxu0 %v2198
        %v2309 = vpop.f32.mrf.mxu0
        %v2310 = vadd.f32 0.0, %v2309
        %v2311 = vpop.f32.mrf.mxu0
        %v2312 = vpop.f32.mrf.mxu0
        %v2313 = vadd.f32 0.0, %v2312
        %v2314 = vpop.f32.mrf.mxu0
        %2315 = vdwg.mxu0
        %v2316 = vadd.f32 %v2162, %v2286
        %v2317 = vadd.f32 %v2163, %v2289
        %v2318 = vadd.f32 %v2164, %v2294
        %v2319 = vadd.f32 %v2165, %v2297
        %v2320 = vadd.f32 %v2166, %v2302
        %v2321 = vadd.f32 %v2167, %v2305
        %v2322 = vadd.f32 %v2168, %v2310
        %v2323 = vadd.f32 %v2169, %v2313
        %v2324 = vld [vmem:[%s2170] sm:$0xf]
        %v2325 = vld [vmem:[%s2170 + $0x4] sm:$0x1]
        %v2326 = vld [vmem:[%s2170 + $0x8] sm:$0xf]
        %v2327 = vld [vmem:[%s2170 + $0xc] sm:$0x1]
        %v2328 = vld [vmem:[%s2170 + $0x10] sm:$0xf]
        %v2329 = vld [vmem:[%s2170 + $0x14] sm:$0x1]
        %v2330 = vld [vmem:[%s2170 + $0x18] sm:$0xf]
        %v2331 = vld [vmem:[%s2170 + $0x1c] sm:$0x1]
        %v2332 = vld [vmem:[%s2170 + $0x20] sm:$0xf]
        %v2333 = vld [vmem:[%s2170 + $0x24] sm:$0x1]
        %v2334 = vld [vmem:[%s2170 + $0x28] sm:$0xf]
        %v2335 = vld [vmem:[%s2170 + $0x2c] sm:$0x1]
        %v2336 = vld [vmem:[%s2170 + $0x30] sm:$0xf]
        %v2337 = vld [vmem:[%s2170 + $0x34] sm:$0x1]
        %v2338 = vld [vmem:[%s2170 + $0x38] sm:$0xf]
        %v2339 = vld [vmem:[%s2170 + $0x3c] sm:$0x1]
        %v2341 = vshrl.u32 %v2324, 16
        %v2343 = vrot.slane %v2341, 4
        %v2344 = vshll.u32 %v2324, 16
        %v2346 = vrot.slane %v2344, 5
        %v2347 = vor.u32 %v2343, %v2346
        %v2348 = vrot.slane %v2347, 4
        %v2350 = vshll.u32 %v2325, 16
        %v2352 = vrot.slane %v2350, 5
        %v2353 = vsel %vm984, %v2348, %v2352
        %v2355 = vshrl.u32 %v2326, 16
        %v2357 = vrot.slane %v2355, 4
        %v2358 = vshll.u32 %v2326, 16
        %v2360 = vrot.slane %v2358, 5
        %v2361 = vor.u32 %v2357, %v2360
        %v2362 = vrot.slane %v2361, 4
        %v2364 = vshll.u32 %v2327, 16
        %v2366 = vrot.slane %v2364, 5
        %v2367 = vsel %vm984, %v2362, %v2366
        %v2369 = vshrl.u32 %v2328, 16
        %v2371 = vrot.slane %v2369, 4
        %v2372 = vshll.u32 %v2328, 16
        %v2374 = vrot.slane %v2372, 5
        %v2375 = vor.u32 %v2371, %v2374
        %v2376 = vrot.slane %v2375, 4
        %v2378 = vshll.u32 %v2329, 16
        %v2380 = vrot.slane %v2378, 5
        %v2381 = vsel %vm984, %v2376, %v2380
        %v2383 = vshrl.u32 %v2330, 16
        %v2385 = vrot.slane %v2383, 4
        %v2386 = vshll.u32 %v2330, 16
        %v2388 = vrot.slane %v2386, 5
        %v2389 = vor.u32 %v2385, %v2388
        %v2390 = vrot.slane %v2389, 4
        %v2392 = vshll.u32 %v2331, 16
        %v2394 = vrot.slane %v2392, 5
        %v2395 = vsel %vm984, %v2390, %v2394
        %v2397 = vshrl.u32 %v2332, 16
        %v2399 = vrot.slane %v2397, 4
        %v2400 = vshll.u32 %v2332, 16
        %v2402 = vrot.slane %v2400, 5
        %v2403 = vor.u32 %v2399, %v2402
        %v2404 = vrot.slane %v2403, 4
        %v2406 = vshll.u32 %v2333, 16
        %v2408 = vrot.slane %v2406, 5
        %v2409 = vsel %vm984, %v2404, %v2408
        %v2411 = vshrl.u32 %v2334, 16
        %v2413 = vrot.slane %v2411, 4
        %v2414 = vshll.u32 %v2334, 16
        %v2416 = vrot.slane %v2414, 5
        %v2417 = vor.u32 %v2413, %v2416
        %v2418 = vrot.slane %v2417, 4
        %v2420 = vshll.u32 %v2335, 16
        %v2422 = vrot.slane %v2420, 5
        %v2423 = vsel %vm984, %v2418, %v2422
        %v2425 = vshrl.u32 %v2336, 16
        %v2427 = vrot.slane %v2425, 4
        %v2428 = vshll.u32 %v2336, 16
        %v2430 = vrot.slane %v2428, 5
        %v2431 = vor.u32 %v2427, %v2430
        %v2432 = vrot.slane %v2431, 4
        %v2434 = vshll.u32 %v2337, 16
        %v2436 = vrot.slane %v2434, 5
        %v2437 = vsel %vm984, %v2432, %v2436
        %v2439 = vshrl.u32 %v2338, 16
        %v2441 = vrot.slane %v2439, 4
        %v2442 = vshll.u32 %v2338, 16
        %v2444 = vrot.slane %v2442, 5
        %v2445 = vor.u32 %v2441, %v2444
        %v2446 = vrot.slane %v2445, 4
        %v2448 = vshll.u32 %v2339, 16
        %v2450 = vrot.slane %v2448, 5
        %v2451 = vsel %vm984, %v2446, %v2450
        %v2452 = vunpack.c.l.b16 %v2353
        %v2453 = vunpack.c.l.b16 %v2367
        %v2454 = vunpack.c.l.b16 %v2381
        %v2455 = vunpack.c.l.b16 %v2395
        %v2456 = vunpack.c.l.b16 %v2409
        %v2457 = vunpack.c.l.b16 %v2423
        %v2458 = vunpack.c.l.b16 %v2437
        %v2459 = vunpack.c.l.b16 %v2451
        %v2460 = vpack.c.b16 %v2453, %v2452
        %v2461 = vpack.c.b16 %v2455, %v2454
        %v2462 = vpack.c.b16 %v2457, %v2456
        %v2463 = vpack.c.b16 %v2459, %v2458
        %v2484 = vunpack.c.l.b16 %v916
        %v2485 = vunpack.c.l.b16 %v917
        %v2486 = vunpack.c.l.b16 %v918
        %v2487 = vunpack.c.l.b16 %v919
        %v2488 = vunpack.c.l.b16 %v920
        %v2489 = vunpack.c.l.b16 %v921
        %v2490 = vunpack.c.l.b16 %v922
        %v2491 = vunpack.c.l.b16 %v923
        %v2492 = vunpack.c.l.b16 %v924
        %v2493 = vunpack.c.l.b16 %v925
        %v2494 = vunpack.c.l.b16 %v926
        %v2495 = vunpack.c.l.b16 %v927
        %v2496 = vunpack.c.l.b16 %v928
        %v2497 = vunpack.c.l.b16 %v929
        %v2498 = vunpack.c.l.b16 %v930
        %v2499 = vunpack.c.l.b16 %v931
        %v2500 = vpack.c.b16 %v2485, %v2484
        %v2501 = vpack.c.b16 %v2487, %v2486
        %v2502 = vpack.c.b16 %v2489, %v2488
        %v2503 = vpack.c.b16 %v2491, %v2490
        %v2504 = vpack.c.b16 %v2493, %v2492
        %v2505 = vpack.c.b16 %v2495, %v2494
        %v2506 = vpack.c.b16 %v2497, %v2496
        %v2507 = vpack.c.b16 %v2499, %v2498
        %2516 = vmatprep.subr.bf16.mxu0 0
        %2517 = vmatpush1.bf16.msra.mxu0 %v2507
        %2518 = vmatprep.subr.bf16.mxu0 0
        %2519 = vmatpush1.bf16.msra.mxu0 %v2506
        %2520 = vmatprep.subr.bf16.mxu0 0
        %2521 = vmatpush1.bf16.msra.mxu0 %v2505
        %2522 = vmatprep.subr.bf16.mxu0 0
        %2523 = vmatpush1.bf16.msra.mxu0 %v2504
        %2524 = vmatprep.subr.bf16.mxu0 0
        %2525 = vmatpush1.bf16.msra.mxu0 %v2503
        %2526 = vmatprep.subr.bf16.mxu0 0
        %2527 = vmatpush1.bf16.msra.mxu0 %v2502
        %2528 = vmatprep.subr.bf16.mxu0 0
        %2529 = vmatpush1.bf16.msra.mxu0 %v2501
        %2530 = vmatprep.subr.bf16.mxu0 0
        %2531 = vmatpush1.bf16.msra.mxu0 %v2500
        %2532 = vmatprep.subr.bf16.mxu0 0
        %2533 = vmatpush2.bf16.msra.mxu0 0
        %2534 = vmatprep.subr.bf16.mxu0 0
        %2535 = vmatpush2.bf16.msra.mxu0 0
        %2536 = vmatprep.subr.bf16.mxu0 0
        %2537 = vmatpush2.bf16.msra.mxu0 0
        %2538 = vmatprep.subr.bf16.mxu0 0
        %2539 = vmatpush2.bf16.msra.mxu0 0
        %2540 = vmatprep.subr.bf16.mxu0 0
        %2541 = vmatpush2.bf16.msra.mxu0 0
        %2542 = vmatprep.subr.bf16.mxu0 0
        %2543 = vmatpush2.bf16.msra.mxu0 0
        %2544 = vmatprep.subr.bf16.mxu0 0
        %2545 = vmatpush2.bf16.msra.mxu0 0
        %2546 = vmatprep.subr.bf16.mxu0 0
        %2547 = vmatpush2.bf16.msra.mxu0 0
        %2548 = vmatprep.mubr.bf16.mxu0 0
        %2549 = vmatmul.mubr.bf16.gmra.mxu0 %v2460
        %v2550 = vpop.f32.mrf.mxu0
        %v2551 = vadd.f32 0.0, %v2550
        %v2552 = vpop.f32.mrf.mxu0
        %v2553 = vpop.f32.mrf.mxu0
        %v2554 = vadd.f32 0.0, %v2553
        %v2555 = vpop.f32.mrf.mxu0
        %2556 = vmatprep.mubr.bf16.mxu0 0
        %2557 = vmatmul.mubr.bf16.gmra.mxu0 %v2461
        %v2558 = vpop.f32.mrf.mxu0
        %v2559 = vadd.f32 0.0, %v2558
        %v2560 = vpop.f32.mrf.mxu0
        %v2561 = vpop.f32.mrf.mxu0
        %v2562 = vadd.f32 0.0, %v2561
        %v2563 = vpop.f32.mrf.mxu0
        %2564 = vmatprep.mubr.bf16.mxu0 0
        %2565 = vmatmul.mubr.bf16.gmra.mxu0 %v2462
        %v2566 = vpop.f32.mrf.mxu0
        %v2567 = vadd.f32 0.0, %v2566
        %v2568 = vpop.f32.mrf.mxu0
        %v2569 = vpop.f32.mrf.mxu0
        %v2570 = vadd.f32 0.0, %v2569
        %v2571 = vpop.f32.mrf.mxu0
        %2572 = vmatprep.mubr.bf16.mxu0 0
        %2573 = vmatmul.mubr.bf16.gmra.mxu0 %v2463
        %v2574 = vpop.f32.mrf.mxu0
        %v2575 = vadd.f32 0.0, %v2574
        %v2576 = vpop.f32.mrf.mxu0
        %v2577 = vpop.f32.mrf.mxu0
        %v2578 = vadd.f32 0.0, %v2577
        %v2579 = vpop.f32.mrf.mxu0
        %2580 = vdwg.mxu0
        %v2581 = vadd.f32 %v2316, %v2551
        %v2582 = vadd.f32 %v2317, %v2554
        %v2583 = vadd.f32 %v2318, %v2559
        %v2584 = vadd.f32 %v2319, %v2562
        %v2585 = vadd.f32 %v2320, %v2567
        %v2586 = vadd.f32 %v2321, %v2570
        %v2587 = vadd.f32 %v2322, %v2575
        %v2588 = vadd.f32 %v2323, %v2578
        %v2589 = vld [vmem:[%s2170] sm:$0xe]
        %v2590 = vld [vmem:[%s2170 + $0x8] sm:$0xe]
        %v2591 = vld [vmem:[%s2170 + $0x10] sm:$0xe]
        %v2592 = vld [vmem:[%s2170 + $0x18] sm:$0xe]
        %v2593 = vld [vmem:[%s2170 + $0x20] sm:$0xe]
        %v2594 = vld [vmem:[%s2170 + $0x28] sm:$0xe]
        %v2595 = vld [vmem:[%s2170 + $0x30] sm:$0xe]
        %v2596 = vld [vmem:[%s2170 + $0x38] sm:$0xe]
        %v2613 = vrot.slane %v2589, 5
        %v2614 = vrot.slane %v2613, 4
        %v2615 = vrot.slane %v2325, 5
        %v2616 = vsel %vm1389, %v2614, %v2615
        %v2617 = vrot.slane %v2590, 5
        %v2618 = vrot.slane %v2617, 4
        %v2619 = vrot.slane %v2327, 5
        %v2620 = vsel %vm1389, %v2618, %v2619
        %v2621 = vrot.slane %v2591, 5
        %v2622 = vrot.slane %v2621, 4
        %v2623 = vrot.slane %v2329, 5
        %v2624 = vsel %vm1389, %v2622, %v2623
        %v2625 = vrot.slane %v2592, 5
        %v2626 = vrot.slane %v2625, 4
        %v2627 = vrot.slane %v2331, 5
        %v2628 = vsel %vm1389, %v2626, %v2627
        %v2629 = vrot.slane %v2593, 5
        %v2630 = vrot.slane %v2629, 4
        %v2631 = vrot.slane %v2333, 5
        %v2632 = vsel %vm1389, %v2630, %v2631
        %v2633 = vrot.slane %v2594, 5
        %v2634 = vrot.slane %v2633, 4
        %v2635 = vrot.slane %v2335, 5
        %v2636 = vsel %vm1389, %v2634, %v2635
        %v2637 = vrot.slane %v2595, 5
        %v2638 = vrot.slane %v2637, 4
        %v2639 = vrot.slane %v2337, 5
        %v2640 = vsel %vm1389, %v2638, %v2639
        %v2641 = vrot.slane %v2596, 5
        %v2642 = vrot.slane %v2641, 4
        %v2643 = vrot.slane %v2339, 5
        %v2644 = vsel %vm1389, %v2642, %v2643
        %v2645 = vunpack.c.l.b16 %v2616
        %v2646 = vunpack.c.l.b16 %v2620
        %v2647 = vunpack.c.l.b16 %v2624
        %v2648 = vunpack.c.l.b16 %v2628
        %v2649 = vunpack.c.l.b16 %v2632
        %v2650 = vunpack.c.l.b16 %v2636
        %v2651 = vunpack.c.l.b16 %v2640
        %v2652 = vunpack.c.l.b16 %v2644
        %v2653 = vpack.c.b16 %v2646, %v2645
        %v2654 = vpack.c.b16 %v2648, %v2647
        %v2655 = vpack.c.b16 %v2650, %v2649
        %v2656 = vpack.c.b16 %v2652, %v2651
        %v2677 = vunpack.c.l.b16 %v933
        %v2678 = vunpack.c.l.b16 %v934
        %v2679 = vunpack.c.l.b16 %v935
        %v2680 = vunpack.c.l.b16 %v936
        %v2681 = vunpack.c.l.b16 %v937
        %v2682 = vunpack.c.l.b16 %v938
        %v2683 = vunpack.c.l.b16 %v939
        %v2684 = vunpack.c.l.b16 %v940
        %v2685 = vunpack.c.l.b16 %v941
        %v2686 = vunpack.c.l.b16 %v942
        %v2687 = vunpack.c.l.b16 %v943
        %v2688 = vunpack.c.l.b16 %v944
        %v2689 = vunpack.c.l.b16 %v945
        %v2690 = vunpack.c.l.b16 %v946
        %v2691 = vunpack.c.l.b16 %v947
        %v2692 = vunpack.c.l.b16 %v948
        %v2693 = vpack.c.b16 %v2678, %v2677
        %v2694 = vpack.c.b16 %v2680, %v2679
        %v2695 = vpack.c.b16 %v2682, %v2681
        %v2696 = vpack.c.b16 %v2684, %v2683
        %v2697 = vpack.c.b16 %v2686, %v2685
        %v2698 = vpack.c.b16 %v2688, %v2687
        %v2699 = vpack.c.b16 %v2690, %v2689
        %v2700 = vpack.c.b16 %v2692, %v2691
        %2709 = vmatprep.subr.bf16.mxu0 0
        %2710 = vmatpush1.bf16.msra.mxu0 %v2700
        %2711 = vmatprep.subr.bf16.mxu0 0
        %2712 = vmatpush1.bf16.msra.mxu0 %v2699
        %2713 = vmatprep.subr.bf16.mxu0 0
        %2714 = vmatpush1.bf16.msra.mxu0 %v2698
        %2715 = vmatprep.subr.bf16.mxu0 0
        %2716 = vmatpush1.bf16.msra.mxu0 %v2697
        %2717 = vmatprep.subr.bf16.mxu0 0
        %2718 = vmatpush1.bf16.msra.mxu0 %v2696
        %2719 = vmatprep.subr.bf16.mxu0 0
        %2720 = vmatpush1.bf16.msra.mxu0 %v2695
        %2721 = vmatprep.subr.bf16.mxu0 0
        %2722 = vmatpush1.bf16.msra.mxu0 %v2694
        %2723 = vmatprep.subr.bf16.mxu0 0
        %2724 = vmatpush1.bf16.msra.mxu0 %v2693
        %2725 = vmatprep.subr.bf16.mxu0 0
        %2726 = vmatpush2.bf16.msra.mxu0 0
        %2727 = vmatprep.subr.bf16.mxu0 0
        %2728 = vmatpush2.bf16.msra.mxu0 0
        %2729 = vmatprep.subr.bf16.mxu0 0
        %2730 = vmatpush2.bf16.msra.mxu0 0
        %2731 = vmatprep.subr.bf16.mxu0 0
        %2732 = vmatpush2.bf16.msra.mxu0 0
        %2733 = vmatprep.subr.bf16.mxu0 0
        %2734 = vmatpush2.bf16.msra.mxu0 0
        %2735 = vmatprep.subr.bf16.mxu0 0
        %2736 = vmatpush2.bf16.msra.mxu0 0
        %2737 = vmatprep.subr.bf16.mxu0 0
        %2738 = vmatpush2.bf16.msra.mxu0 0
        %2739 = vmatprep.subr.bf16.mxu0 0
        %2740 = vmatpush2.bf16.msra.mxu0 0
        %2741 = vmatprep.mubr.bf16.mxu0 0
        %2742 = vmatmul.mubr.bf16.gmra.mxu0 %v2653
        %v2743 = vpop.f32.mrf.mxu0
        %v2744 = vadd.f32 0.0, %v2743
        %v2745 = vpop.f32.mrf.mxu0
        %v2746 = vpop.f32.mrf.mxu0
        %v2747 = vadd.f32 0.0, %v2746
        %v2748 = vpop.f32.mrf.mxu0
        %2749 = vmatprep.mubr.bf16.mxu0 0
        %2750 = vmatmul.mubr.bf16.gmra.mxu0 %v2654
        %v2751 = vpop.f32.mrf.mxu0
        %v2752 = vadd.f32 0.0, %v2751
        %v2753 = vpop.f32.mrf.mxu0
        %v2754 = vpop.f32.mrf.mxu0
        %v2755 = vadd.f32 0.0, %v2754
        %v2756 = vpop.f32.mrf.mxu0
        %2757 = vmatprep.mubr.bf16.mxu0 0
        %2758 = vmatmul.mubr.bf16.gmra.mxu0 %v2655
        %v2759 = vpop.f32.mrf.mxu0
        %v2760 = vadd.f32 0.0, %v2759
        %v2761 = vpop.f32.mrf.mxu0
        %v2762 = vpop.f32.mrf.mxu0
        %v2763 = vadd.f32 0.0, %v2762
        %v2764 = vpop.f32.mrf.mxu0
        %2765 = vmatprep.mubr.bf16.mxu0 0
        %2766 = vmatmul.mubr.bf16.gmra.mxu0 %v2656
        %v2767 = vpop.f32.mrf.mxu0
        %v2768 = vadd.f32 0.0, %v2767
        %v2769 = vpop.f32.mrf.mxu0
        %v2770 = vpop.f32.mrf.mxu0
        %v2771 = vadd.f32 0.0, %v2770
        %v2772 = vpop.f32.mrf.mxu0
        %2773 = vdwg.mxu0
        %v2774 = vadd.f32 %v2581, %v2744
        %v2775 = vadd.f32 %v2582, %v2747
        %v2776 = vadd.f32 %v2583, %v2752
        %v2777 = vadd.f32 %v2584, %v2755
        %v2778 = vadd.f32 %v2585, %v2760
        %v2779 = vadd.f32 %v2586, %v2763
        %v2780 = vadd.f32 %v2587, %v2768
        %v2781 = vadd.f32 %v2588, %v2771
        %v2783 = vlaneseq
        %v2784 = vshrl.u32 %v2783, 7
        %v2785 = vsub.s32 0, %v2784
        %v2786 = vrot.slane %v779, %v2785
        %v2788 = vadd.f32 %v2774, %v2786
        %v2789 = vadd.f32 %v2775, %v2786
        %v2790 = vadd.f32 %v2776, %v2786
        %v2791 = vadd.f32 %v2777, %v2786
        %v2792 = vadd.f32 %v2778, %v2786
        %v2793 = vadd.f32 %v2779, %v2786
        %v2794 = vadd.f32 %v2780, %v2786
        %v2795 = vadd.f32 %v2781, %v2786
        %v2796 = vmax.f32 %v2788, 0.0
        %v2797 = vmax.f32 %v2789, 0.0
        %v2798 = vmax.f32 %v2790, 0.0
        %v2799 = vmax.f32 %v2791, 0.0
        %v2800 = vmax.f32 %v2792, 0.0
        %v2801 = vmax.f32 %v2793, 0.0
        %v2802 = vmax.f32 %v2794, 0.0
        %v2803 = vmax.f32 %v2795, 0.0
        %v2804 = vpack.c.bf16 %v2797, %v2796
        %v2805 = vpack.c.bf16 %v2799, %v2798
        %v2806 = vpack.c.bf16 %v2801, %v2800
        %v2807 = vpack.c.bf16 %v2803, %v2802
        %v2809 = vlaneseq
        %v2810 = vshrl.u32 %v2809, 7
        %v2811 = vsub.s32 0, %v2810
        %v2812 = vrot.slane %v780, %v2811
        %v2830 = vunpack.c.l.b16 %v781
        %v2831 = vunpack.c.l.b16 %v782
        %v2832 = vunpack.c.l.b16 %v783
        %v2833 = vunpack.c.l.b16 %v784
        %v2834 = vunpack.c.l.b16 %v785
        %v2835 = vunpack.c.l.b16 %v786
        %v2836 = vunpack.c.l.b16 %v787
        %v2837 = vunpack.c.l.b16 %v788
        %v2838 = vunpack.c.l.b16 %v789
        %v2839 = vunpack.c.l.b16 %v790
        %v2840 = vunpack.c.l.b16 %v791
        %v2841 = vunpack.c.l.b16 %v792
        %v2842 = vunpack.c.l.b16 %v793
        %v2843 = vunpack.c.l.b16 %v794
        %v2844 = vunpack.c.l.b16 %v795
        %v2845 = vunpack.c.l.b16 %v796
        %v2846 = vpack.c.b16 %v2831, %v2830
        %v2847 = vpack.c.b16 %v2833, %v2832
        %v2848 = vpack.c.b16 %v2835, %v2834
        %v2849 = vpack.c.b16 %v2837, %v2836
        %v2850 = vpack.c.b16 %v2839, %v2838
        %v2851 = vpack.c.b16 %v2841, %v2840
        %v2852 = vpack.c.b16 %v2843, %v2842
        %v2853 = vpack.c.b16 %v2845, %v2844
        %2862 = vmatprep.subr.bf16.mxu0 0
        %2863 = vmatpush1.bf16.msra.mxu0 %v2853
        %2864 = vmatprep.subr.bf16.mxu0 0
        %2865 = vmatpush1.bf16.msra.mxu0 %v2852
        %2866 = vmatprep.subr.bf16.mxu0 0
        %2867 = vmatpush1.bf16.msra.mxu0 %v2851
        %2868 = vmatprep.subr.bf16.mxu0 0
        %2869 = vmatpush1.bf16.msra.mxu0 %v2850
        %2870 = vmatprep.subr.bf16.mxu0 0
        %2871 = vmatpush1.bf16.msra.mxu0 %v2849
        %2872 = vmatprep.subr.bf16.mxu0 0
        %2873 = vmatpush1.bf16.msra.mxu0 %v2848
        %2874 = vmatprep.subr.bf16.mxu0 0
        %2875 = vmatpush1.bf16.msra.mxu0 %v2847
        %2876 = vmatprep.subr.bf16.mxu0 0
        %2877 = vmatpush1.bf16.msra.mxu0 %v2846
        %2878 = vmatprep.subr.bf16.mxu0 0
        %2879 = vmatpush2.bf16.msra.mxu0 0
        %2880 = vmatprep.subr.bf16.mxu0 0
        %2881 = vmatpush2.bf16.msra.mxu0 0
        %2882 = vmatprep.subr.bf16.mxu0 0
        %2883 = vmatpush2.bf16.msra.mxu0 0
        %2884 = vmatprep.subr.bf16.mxu0 0
        %2885 = vmatpush2.bf16.msra.mxu0 0
        %2886 = vmatprep.subr.bf16.mxu0 0
        %2887 = vmatpush2.bf16.msra.mxu0 0
        %2888 = vmatprep.subr.bf16.mxu0 0
        %2889 = vmatpush2.bf16.msra.mxu0 0
        %2890 = vmatprep.subr.bf16.mxu0 0
        %2891 = vmatpush2.bf16.msra.mxu0 0
        %2892 = vmatprep.subr.bf16.mxu0 0
        %2893 = vmatpush2.bf16.msra.mxu0 0
        %2894 = vmatprep.mubr.bf16.mxu0 0
        %2895 = vmatmul.mubr.bf16.gmra.mxu0 %v2804
        %v2896 = vpop.f32.mrf.mxu0
        %v2897 = vadd.f32 %v2812, %v2896
        %v2898 = vpop.f32.mrf.mxu0
        %v2899 = vpop.f32.mrf.mxu0
        %v2900 = vadd.f32 %v2812, %v2899
        %v2901 = vpop.f32.mrf.mxu0
        %2902 = vmatprep.mubr.bf16.mxu0 0
        %2903 = vmatmul.mubr.bf16.gmra.mxu0 %v2805
        %v2904 = vpop.f32.mrf.mxu0
        %v2905 = vadd.f32 %v2812, %v2904
        %v2906 = vpop.f32.mrf.mxu0
        %v2907 = vpop.f32.mrf.mxu0
        %v2908 = vadd.f32 %v2812, %v2907
        %v2909 = vpop.f32.mrf.mxu0
        %2910 = vmatprep.mubr.bf16.mxu0 0
        %2911 = vmatmul.mubr.bf16.gmra.mxu0 %v2806
        %v2912 = vpop.f32.mrf.mxu0
        %v2913 = vadd.f32 %v2812, %v2912
        %v2914 = vpop.f32.mrf.mxu0
        %v2915 = vpop.f32.mrf.mxu0
        %v2916 = vadd.f32 %v2812, %v2915
        %v2917 = vpop.f32.mrf.mxu0
        %2918 = vmatprep.mubr.bf16.mxu0 0
        %2919 = vmatmul.mubr.bf16.gmra.mxu0 %v2807
        %v2920 = vpop.f32.mrf.mxu0
        %v2921 = vadd.f32 %v2812, %v2920
        %v2922 = vpop.f32.mrf.mxu0
        %v2923 = vpop.f32.mrf.mxu0
        %v2924 = vadd.f32 %v2812, %v2923
        %v2925 = vpop.f32.mrf.mxu0
        %2926 = vdwg.mxu0
        %v2927 = vld [vmem:[%s358] sm:$0xff]
        %v2928 = vld [vmem:[%s358 + $0x8] sm:$0xff]
        %v2929 = vld [vmem:[%s358 + $0x10] sm:$0xff]
        %v2930 = vld [vmem:[%s358 + $0x18] sm:$0xff]
        %v2931 = vld [vmem:[%s358 + $0x20] sm:$0xff]
        %v2932 = vld [vmem:[%s358 + $0x28] sm:$0xff]
        %v2933 = vld [vmem:[%s358 + $0x30] sm:$0xff]
        %v2934 = vld [vmem:[%s358 + $0x38] sm:$0xff]
        %v2935 = vpack.c.bf16 %v2928, %v2927
        %v2936 = vpack.c.bf16 %v2930, %v2929
        %v2937 = vpack.c.bf16 %v2932, %v2931
        %v2938 = vpack.c.bf16 %v2934, %v2933
        %v2940 = vlaneseq
        %v2941 = vshrl.u32 %v2940, 7
        %v2942 = vsub.s32 0, %v2941
        %v2943 = vrot.slane %v965, %v2942
        %v2961 = vunpack.c.l.b16 %v949
        %v2962 = vunpack.c.l.b16 %v950
        %v2963 = vunpack.c.l.b16 %v951
        %v2964 = vunpack.c.l.b16 %v952
        %v2965 = vunpack.c.l.b16 %v953
        %v2966 = vunpack.c.l.b16 %v954
        %v2967 = vunpack.c.l.b16 %v955
        %v2968 = vunpack.c.l.b16 %v956
        %v2969 = vunpack.c.l.b16 %v957
        %v2970 = vunpack.c.l.b16 %v958
        %v2971 = vunpack.c.l.b16 %v959
        %v2972 = vunpack.c.l.b16 %v960
        %v2973 = vunpack.c.l.b16 %v961
        %v2974 = vunpack.c.l.b16 %v962
        %v2975 = vunpack.c.l.b16 %v963
        %v2976 = vunpack.c.l.b16 %v964
        %v2977 = vpack.c.b16 %v2962, %v2961
        %v2978 = vpack.c.b16 %v2964, %v2963
        %v2979 = vpack.c.b16 %v2966, %v2965
        %v2980 = vpack.c.b16 %v2968, %v2967
        %v2981 = vpack.c.b16 %v2970, %v2969
        %v2982 = vpack.c.b16 %v2972, %v2971
        %v2983 = vpack.c.b16 %v2974, %v2973
        %v2984 = vpack.c.b16 %v2976, %v2975
        %2993 = vmatprep.subr.bf16.mxu0 0
        %2994 = vmatpush1.bf16.msra.mxu0 %v2984
        %2995 = vmatprep.subr.bf16.mxu0 0
        %2996 = vmatpush1.bf16.msra.mxu0 %v2983
        %2997 = vmatprep.subr.bf16.mxu0 0
        %2998 = vmatpush1.bf16.msra.mxu0 %v2982
        %2999 = vmatprep.subr.bf16.mxu0 0
        %3000 = vmatpush1.bf16.msra.mxu0 %v2981
        %3001 = vmatprep.subr.bf16.mxu0 0
        %3002 = vmatpush1.bf16.msra.mxu0 %v2980
        %3003 = vmatprep.subr.bf16.mxu0 0
        %3004 = vmatpush1.bf16.msra.mxu0 %v2979
        %3005 = vmatprep.subr.bf16.mxu0 0
        %3006 = vmatpush1.bf16.msra.mxu0 %v2978
        %3007 = vmatprep.subr.bf16.mxu0 0
        %3008 = vmatpush1.bf16.msra.mxu0 %v2977
        %3009 = vmatprep.subr.bf16.mxu0 0
        %3010 = vmatpush2.bf16.msra.mxu0 0
        %3011 = vmatprep.subr.bf16.mxu0 0
        %3012 = vmatpush2.bf16.msra.mxu0 0
        %3013 = vmatprep.subr.bf16.mxu0 0
        %3014 = vmatpush2.bf16.msra.mxu0 0
        %3015 = vmatprep.subr.bf16.mxu0 0
        %3016 = vmatpush2.bf16.msra.mxu0 0
        %3017 = vmatprep.subr.bf16.mxu0 0
        %3018 = vmatpush2.bf16.msra.mxu0 0
        %3019 = vmatprep.subr.bf16.mxu0 0
        %3020 = vmatpush2.bf16.msra.mxu0 0
        %3021 = vmatprep.subr.bf16.mxu0 0
        %3022 = vmatpush2.bf16.msra.mxu0 0
        %3023 = vmatprep.subr.bf16.mxu0 0
        %3024 = vmatpush2.bf16.msra.mxu0 0
        %3025 = vmatprep.mubr.bf16.mxu0 0
        %3026 = vmatmul.mubr.bf16.gmra.mxu0 %v2935
        %v3027 = vpop.f32.mrf.mxu0
        %v3028 = vadd.f32 %v2943, %v3027
        %v3029 = vpop.f32.mrf.mxu0
        %v3030 = vpop.f32.mrf.mxu0
        %v3031 = vadd.f32 %v2943, %v3030
        %v3032 = vpop.f32.mrf.mxu0
        %3033 = vmatprep.mubr.bf16.mxu0 0
        %3034 = vmatmul.mubr.bf16.gmra.mxu0 %v2936
        %v3035 = vpop.f32.mrf.mxu0
        %v3036 = vadd.f32 %v2943, %v3035
        %v3037 = vpop.f32.mrf.mxu0
        %v3038 = vpop.f32.mrf.mxu0
        %v3039 = vadd.f32 %v2943, %v3038
        %v3040 = vpop.f32.mrf.mxu0
        %3041 = vmatprep.mubr.bf16.mxu0 0
        %3042 = vmatmul.mubr.bf16.gmra.mxu0 %v2937
        %v3043 = vpop.f32.mrf.mxu0
        %v3044 = vadd.f32 %v2943, %v3043
        %v3045 = vpop.f32.mrf.mxu0
        %v3046 = vpop.f32.mrf.mxu0
        %v3047 = vadd.f32 %v2943, %v3046
        %v3048 = vpop.f32.mrf.mxu0
        %3049 = vmatprep.mubr.bf16.mxu0 0
        %3050 = vmatmul.mubr.bf16.gmra.mxu0 %v2938
        %v3051 = vpop.f32.mrf.mxu0
        %v3052 = vadd.f32 %v2943, %v3051
        %v3053 = vpop.f32.mrf.mxu0
        %v3054 = vpop.f32.mrf.mxu0
        %v3055 = vadd.f32 %v2943, %v3054
        %v3056 = vpop.f32.mrf.mxu0
        %3057 = vdwg.mxu0
        %v3058 = vadd.f32 %v2897, %v3028
        %v3059 = vadd.f32 %v2900, %v3031
        %v3060 = vadd.f32 %v2905, %v3036
        %v3061 = vadd.f32 %v2908, %v3039
        %v3062 = vadd.f32 %v2913, %v3044
        %v3063 = vadd.f32 %v2916, %v3047
        %v3064 = vadd.f32 %v2921, %v3052
        %v3065 = vadd.f32 %v2924, %v3055
        %v3066 = vmax.f32 %v3058, 0.0
        %v3067 = vmax.f32 %v3059, 0.0
        %v3068 = vmax.f32 %v3060, 0.0
        %v3069 = vmax.f32 %v3061, 0.0
        %v3070 = vmax.f32 %v3062, 0.0
        %v3071 = vmax.f32 %v3063, 0.0
        %v3072 = vmax.f32 %v3064, 0.0
        %v3073 = vmax.f32 %v3065, 0.0
        %3074 = vst [vmem:[%s408] sm:$0xff] %v3066
        %3075 = vst [vmem:[%s408 + $0x8] sm:$0xff] %v3067
        %3076 = vst [vmem:[%s408 + $0x10] sm:$0xff] %v3068
        %3077 = vst [vmem:[%s408 + $0x18] sm:$0xff] %v3069
        %3078 = vst [vmem:[%s408 + $0x20] sm:$0xff] %v3070
        %3079 = vst [vmem:[%s408 + $0x28] sm:$0xff] %v3071
        %3080 = vst [vmem:[%s408 + $0x30] sm:$0xff] %v3072
        %3081 = vst [vmem:[%s408 + $0x38] sm:$0xff] %v3073
        %s3082 = sand.u32 %s230, 1
        %s3083 = scalar_lea.sflag [#allocation5], %s3082
        %s3084 = sand.u32 %s230, 1
        %s3085 = smul.addr %s3084, 64
        %s3086 = scalar_lea.vmem [#allocation12], %s3085
        // Predicated region
        $region77: #{tpu_custom_call.1} parent=55 // pred_check
          %p3087 = pneg %p240
        $region78: #{tpu_custom_call.1} parent=55 // pred_check_branch
          %3089 = sbr.rel (%p3087) target = $region80
        $region79: #{tpu_custom_call.1} parent=55 // pred_region
          %s3091 = ssub.s32 1024, 1024
          %3092 = vsyncadd %s3083, %s3091
          %s3093 = smul.addr %s28, 8
          %s3094 = smul.addr %s3093, 128
          %s3095 = scalar_lea.hbm %s9, %s3094
          %s3096 = sshll.u32 %s3086, 4
          %s3097 = int_to_ptr.vmem [resolvable:$true] %s3096
          %3102 = dma.vmem_to_hbm [thread:$0]  %s3097, 1024, %s3095, %s3083, 128, 128, 8
        $region80: #{tpu_custom_call.1} parent=55 // pred_fallthru
          _
      $region56: #{tpu_custom_call.1} parent=5 // pred_fallthru
        _
      %p3103 = scmp.le.s32.totalorder 2, %s23
      // Predicated region
      $region81: #{tpu_custom_call.1} parent=5 // pred_check
        %p3104 = pneg %p3103
      $region82: #{tpu_custom_call.1} parent=5 // pred_check_branch
        %3106 = sbr.rel (%p3104) target = $region84
      $region83: #{tpu_custom_call.1} parent=5 // pred_region
        %s3107 = ssub.s32 %s23, 2
        // Predicated region
        $region85: #{tpu_custom_call.1} parent=83 // pred_check
          %p3108 = pneg %p246
        $region86: #{tpu_custom_call.1} parent=83 // pred_check_branch
          %3110 = sbr.rel (%p3108) target = $region88
        $region87: #{tpu_custom_call.1} parent=83 // pred_region
          %s3111 = sand.u32 %s231, 1
          %s3112 = scalar_lea.sflag [#allocation5], %s3111
          %s3113 = sand.u32 %s231, 1
          %s3114 = smul.addr %s3113, 64
          %s3115 = scalar_lea.vmem [#allocation12], %s3114
          %3116 = dma.done %s3112, 1024
        $region88: #{tpu_custom_call.1} parent=83 // pred_fallthru
          _
      $region84: #{tpu_custom_call.1} parent=5 // pred_fallthru
        _
    $region6: #{tpu_custom_call.1} parent=1 // loop_footer
      %s27 = sadd.s32 1, %s23
    $region7: #{tpu_custom_call.1} parent=1 // loop_footer_branch
      %22 = sbr.rel target = $region3
    $region8: #{tpu_custom_call.1} parent=1 // loop_exit
      _
    %3117 = vsyncpa [#allocation4], 1
    %s3118 = scalar_lea.sflag [#allocation4], 1
    %3119 = vsyncpa %s3118, 1
    %3120 = vsyncpa [#allocation7], 1
    %3121 = vsyncpa [#allocation10], 1
    %3122 = vsyncpa [#allocation5], 1
    %s3123 = scalar_lea.sflag [#allocation5], 1
    %3124 = vsyncpa %s3123, 1

</llo_original>
